<compile_context>
chip_gen: v6e
topology: v6e:2x2x1
jax: 0.10.0
libtpu: 0.0.40
codegen_flags: <defaults>
</compile_context>

<pallas_src>
import functools

import jax
import jax.numpy as jnp
from jax.experimental import pallas as pl
from jax.experimental.pallas import tpu as pltpu


# ------------------------------- Pallas kernel -------------------------------
def _attention_kernel(x_ref, wqkv_ref, wproj_ref, bproj_ref, o_ref, *,
                      num_heads, scale):
    x = x_ref[0]                                        # (N, C) for this batch elem
    N, C = x.shape
    D = C // num_heads

    # Fused qkv projection (qkv_bias=False, the module default).
    qkv = jnp.dot(x, wqkv_ref[...], preferred_element_type=jnp.float32)  # (N, 3C)

    def to_heads(mat):                                  # (N, C) -> (H, N, D)
        return mat.reshape(N, num_heads, D).transpose(1, 0, 2)

    # Lane-aligned 128-wide column slices of the fused qkv output.
    q = to_heads(qkv[:, :C]) * scale                    # scale fused into q
    k = to_heads(qkv[:, C:2 * C])
    v = to_heads(qkv[:, 2 * C:])

    # Batched-over-heads attention: one einsum instead of a per-head loop.
    s = jnp.einsum('hnd,hmd->hnm', q, k,
                   preferred_element_type=jnp.float32)  # (H, N, N)
    s = s - jnp.max(s, axis=-1, keepdims=True)
    e = jnp.exp(s)
    p = e * pl.reciprocal(jnp.sum(e, axis=-1, keepdims=True), approx=True)
    # attn_drop / proj_drop are nn.Dropout(p=0.0) in the reference -> identity.
    ctx = jnp.einsum('hnm,hmd->hnd', p, v,
                     preferred_element_type=jnp.float32)            # (H, N, D)
    ctx = ctx.transpose(1, 0, 2).reshape(N, C)                      # head concat

    out = jnp.dot(ctx, wproj_ref[...],
                  preferred_element_type=jnp.float32) + bproj_ref[...]
    o_ref[...] = out[None].astype(o_ref.dtype)


# ------------------------------- Pallas wrapper -------------------------------
def attention_forward(x, wqkv, wproj, bproj, num_heads):
    """x: (B, N, C); wqkv: (C, 3C) = W_qkv^T; wproj: (C, C) = W_proj^T; bproj: (1, C)."""
    B, N, C = x.shape
    assert C % num_heads == 0
    scale = (C // num_heads) ** -0.5
    kernel = functools.partial(_attention_kernel, num_heads=num_heads, scale=scale)

    return pl.pallas_call(
        kernel,
        out_shape=jax.ShapeDtypeStruct((B, N, C), x.dtype),
        grid=(B,),
        in_specs=[
            pl.BlockSpec((1, N, C), lambda b: (b, 0, 0)),       # activations
            pl.BlockSpec((C, 3 * C), lambda b: (0, 0)),         # qkv weight
            pl.BlockSpec((C, C), lambda b: (0, 0)),             # proj weight
            pl.BlockSpec((1, C), lambda b: (0, 0)),             # proj bias
        ],
        out_specs=pl.BlockSpec((1, N, C), lambda b: (b, 0, 0)),
        compiler_params=pltpu.CompilerParams(
            dimension_semantics=("parallel",)),                  # v7x: one TC per batch elem
    )(x, wqkv, wproj, bproj)


# ----------------------------- pure-JAX reference -----------------------------
def attention_reference(x, wqkv, wproj, bproj, num_heads):
    B, N, C = x.shape
    D = C // num_heads
    scale = D ** -0.5
    qkv = jnp.einsum('bnc,cd->bnd', x, wqkv).reshape(B, N, 3, num_heads, D)
    qkv = jnp.transpose(qkv, (2, 0, 3, 1, 4))       # (3, B, H, N, D)
    q, k, v = qkv[0], qkv[1], qkv[2]
    attn = jnp.einsum('bhnd,bhmd->bhnm', q, k) * scale
    attn = jax.nn.softmax(attn, axis=-1)
    out = jnp.einsum('bhnm,bhmd->bhnd', attn, v)
    out = jnp.transpose(out, (0, 2, 1, 3)).reshape(B, N, C)
    return jnp.einsum('bnc,cd->bnd', out, wproj) + bproj


# ------------------------------------ main -------------------------------------
if __name__ == "__main__":
    B, N, C, NUM_HEADS = 2, 64, 128, 4              # lane-dense C, sublane-padded N

    key = jax.random.PRNGKey(0)
    kx, kq, kp, kb = jax.random.split(key, 4)
    x = jax.random.normal(kx, (B, N, C), dtype=jnp.float32)
    wqkv = 0.05 * jax.random.normal(kq, (C, 3 * C), dtype=jnp.float32)
    wproj = 0.05 * jax.random.normal(kp, (C, C), dtype=jnp.float32)
    bproj = 0.05 * jax.random.normal(kb, (1, C), dtype=jnp.float32)

    fwd = jax.jit(functools.partial(attention_forward, num_heads=NUM_HEADS))
    out = fwd(x, wqkv, wproj, bproj)
    jax.block_until_ready(out)

    ref = attention_reference(x, wqkv, wproj, bproj, NUM_HEADS)
    max_err = float(jnp.max(jnp.abs(out - ref)))

    assert out.shape == (B, N, C)
    assert max_err < 1e-2, f"max abs error {max_err}"
    print("KERNEL_OK")
</pallas_src>

<mosaic_0001>
module attributes {stable_mosaic.version = 11 : i64} {
  func.func @_attention_kernel(%arg0: i32, %arg1: memref<1x64x128xf32, #tpu.memory_space<vmem>>, %arg2: memref<128x384xf32, #tpu.memory_space<vmem>>, %arg3: memref<128x128xf32, #tpu.memory_space<vmem>>, %arg4: memref<1x128xf32, #tpu.memory_space<vmem>>, %arg5: memref<1x64x128xf32, #tpu.memory_space<vmem>>) attributes {dimension_semantics = [#tpu.dimension_semantics<parallel>], iteration_bounds = array<i64: 2>, scalar_prefetch = 0 : i64, scratch_operands = 0 : i64, tpu.core_type = #tpu.core_type<tc>, window_params = [{transform_indices = @transform_0, window_bounds = array<i64: 1, 64, 128>}, {pipeline_mode = #tpu.pipeline_mode<synchronous>, transform_indices = @transform_1, window_bounds = array<i64: 128, 384>}, {pipeline_mode = #tpu.pipeline_mode<synchronous>, transform_indices = @transform_2, window_bounds = array<i64: 128, 128>}, {pipeline_mode = #tpu.pipeline_mode<synchronous>, transform_indices = @transform_3, window_bounds = array<i64: 1, 128>}, {transform_indices = @transform_4, window_bounds = array<i64: 1, 64, 128>}]} {
    %c0 = arith.constant 0 : index
    %c0_0 = arith.constant 0 : index
    %c0_1 = arith.constant 0 : index
    %0 = vector.load %arg1[%c0, %c0_0, %c0_1] : memref<1x64x128xf32, #tpu.memory_space<vmem>>, vector<1x64x128xf32>
    %1 = vector.shape_cast %0 : vector<1x64x128xf32> to vector<64x128xf32>
    %c0_2 = arith.constant 0 : index
    %c0_3 = arith.constant 0 : index
    %2 = vector.load %arg2[%c0_2, %c0_3] : memref<128x384xf32, #tpu.memory_space<vmem>>, vector<128x384xf32>
    %cst = arith.constant dense<0.000000e+00> : vector<64x384xf32>
    %3 = tpu.matmul %1, %2, %cst {dimension_numbers = #tpu.dot_dimension_numbers<[1], [0], [0], [1], [0, 0, 1, 1], [], []>} : vector<64x128xf32>, vector<128x384xf32>, vector<64x384xf32> -> vector<64x384xf32>
    %4 = vector.extract_strided_slice %3 {offsets = [0, 0], sizes = [64, 128], strides = [1, 1]} : vector<64x384xf32> to vector<64x128xf32>
    %5 = vector.shape_cast %4 : vector<64x128xf32> to vector<64x4x32xf32>
    %6 = tpu.transpose %5, [1, 0, 2] : vector<64x4x32xf32> -> vector<4x64x32xf32>
    %cst_4 = arith.constant 0.176776692 : f32
    %7 = vector.broadcast %cst_4 : f32 to vector<4x64x32xf32>
    %8 = arith.mulf %6, %7 : vector<4x64x32xf32>
    %9 = vector.extract_strided_slice %3 {offsets = [0, 128], sizes = [64, 128], strides = [1, 1]} : vector<64x384xf32> to vector<64x128xf32>
    %10 = vector.shape_cast %9 : vector<64x128xf32> to vector<64x4x32xf32>
    %11 = tpu.transpose %10, [1, 0, 2] : vector<64x4x32xf32> -> vector<4x64x32xf32>
    %12 = vector.extract_strided_slice %3 {offsets = [0, 256], sizes = [64, 128], strides = [1, 1]} : vector<64x384xf32> to vector<64x128xf32>
    %13 = vector.shape_cast %12 : vector<64x128xf32> to vector<64x4x32xf32>
    %14 = tpu.transpose %13, [1, 0, 2] : vector<64x4x32xf32> -> vector<4x64x32xf32>
    "tpu.trace_start"() <{level = 10 : i32, message = "hnd,hmd->hnm"}> : () -> ()
    %cst_5 = arith.constant dense<0.000000e+00> : vector<4x64x64xf32>
    %15 = tpu.matmul %8, %11, %cst_5 {dimension_numbers = #tpu.dot_dimension_numbers<[2], [2], [1], [1], [0, 0, 0, 1, 1, 1], [0], [0]>} : vector<4x64x32xf32>, vector<4x64x32xf32>, vector<4x64x64xf32> -> vector<4x64x64xf32>
    "tpu.trace_stop"() : () -> ()
    %cst_6 = arith.constant dense<0xFF800000> : vector<4x64xf32>
    %16 = vector.multi_reduction <maximumf>, %15, %cst_6 [2] : vector<4x64x64xf32> to vector<4x64xf32>
    %17 = vector.shape_cast %16 : vector<4x64xf32> to vector<4x64x1xf32>
    %18 = vector.broadcast %17 : vector<4x64x1xf32> to vector<4x64x64xf32>
    %19 = arith.subf %15, %18 : vector<4x64x64xf32>
    %20 = math.exp %19 : vector<4x64x64xf32>
    %cst_7 = arith.constant dense<0.000000e+00> : vector<4x64xf32>
    %21 = vector.multi_reduction <add>, %20, %cst_7 [2] : vector<4x64x64xf32> to vector<4x64xf32>
    %22 = vector.shape_cast %21 : vector<4x64xf32> to vector<4x64x1xf32>
    %23 = tpu.reciprocal %22 {approx = true} : vector<4x64x1xf32> -> vector<4x64x1xf32>
    %24 = vector.broadcast %23 : vector<4x64x1xf32> to vector<4x64x64xf32>
    %25 = arith.mulf %20, %24 : vector<4x64x64xf32>
    "tpu.trace_start"() <{level = 10 : i32, message = "hnm,hmd->hnd"}> : () -> ()
    %cst_8 = arith.constant dense<0.000000e+00> : vector<4x64x32xf32>
    %26 = tpu.matmul %25, %14, %cst_8 {dimension_numbers = #tpu.dot_dimension_numbers<[2], [1], [1], [2], [0, 0, 0, 1, 1, 2], [0], [0]>} : vector<4x64x64xf32>, vector<4x64x32xf32>, vector<4x64x32xf32> -> vector<4x64x32xf32>
    "tpu.trace_stop"() : () -> ()
    %27 = tpu.transpose %26, [1, 0, 2] : vector<4x64x32xf32> -> vector<64x4x32xf32>
    %28 = vector.shape_cast %27 : vector<64x4x32xf32> to vector<64x128xf32>
    %c0_9 = arith.constant 0 : index
    %c0_10 = arith.constant 0 : index
    %29 = vector.load %arg3[%c0_9, %c0_10] : memref<128x128xf32, #tpu.memory_space<vmem>>, vector<128x128xf32>
    %cst_11 = arith.constant dense<0.000000e+00> : vector<64x128xf32>
    %30 = tpu.matmul %28, %29, %cst_11 {dimension_numbers = #tpu.dot_dimension_numbers<[1], [0], [0], [1], [0, 0, 1, 1], [], []>} : vector<64x128xf32>, vector<128x128xf32>, vector<64x128xf32> -> vector<64x128xf32>
    %c0_12 = arith.constant 0 : index
    %c0_13 = arith.constant 0 : index
    %31 = vector.load %arg4[%c0_12, %c0_13] : memref<1x128xf32, #tpu.memory_space<vmem>>, vector<1x128xf32>
    %32 = vector.broadcast %31 : vector<1x128xf32> to vector<64x128xf32>
    %33 = arith.addf %30, %32 : vector<64x128xf32>
    %34 = vector.shape_cast %33 : vector<64x128xf32> to vector<1x64x128xf32>
    %c0_14 = arith.constant 0 : index
    %c0_15 = arith.constant 0 : index
    %c0_16 = arith.constant 0 : index
    %35 = vector.load %arg5[%c0_14, %c0_15, %c0_16] : memref<1x64x128xf32, #tpu.memory_space<vmem>>, vector<1x64x128xf32>
    tpu.vector_store %arg5[%c0_14, %c0_15, %c0_16], %34 {strides = array<i32>} : memref<1x64x128xf32, #tpu.memory_space<vmem>>, vector<1x64x128xf32>,
    return
  }
  func.func @transform_0(%arg0: i32) -> (i32, i32, i32) {
    %c0_i32 = arith.constant 0 : i32
    %c0_i32_0 = arith.constant 0 : i32
    %c0_i32_1 = arith.constant 0 : i32
    return %arg0, %c0_i32, %c0_i32_0 : i32, i32, i32
  }
  func.func @transform_1(%arg0: i32) -> (i32, i32) {
    %c0_i32 = arith.constant 0 : i32
    %c0_i32_0 = arith.constant 0 : i32
    %c0_i32_1 = arith.constant 0 : i32
    return %c0_i32, %c0_i32_0 : i32, i32
  }
  func.func @transform_2(%arg0: i32) -> (i32, i32) {
    %c0_i32 = arith.constant 0 : i32
    %c0_i32_0 = arith.constant 0 : i32
    %c0_i32_1 = arith.constant 0 : i32
    return %c0_i32, %c0_i32_0 : i32, i32
  }
  func.func @transform_3(%arg0: i32) -> (i32, i32) {
    %c0_i32 = arith.constant 0 : i32
    %c0_i32_0 = arith.constant 0 : i32
    %c0_i32_1 = arith.constant 0 : i32
    return %c0_i32, %c0_i32_0 : i32, i32
  }
  func.func @transform_4(%arg0: i32) -> (i32, i32, i32) {
    %c0_i32 = arith.constant 0 : i32
    %c0_i32_0 = arith.constant 0 : i32
    %c0_i32_1 = arith.constant 0 : i32
    return %arg0, %c0_i32, %c0_i32_0 : i32, i32, i32
  }
}

</mosaic_0001>

<llo_original>
// kernel: attention_forward.1
$region0: #{attention_forward.1}
  #allocation0 [shape = 'u32[]', space=smem, size = 0x4, offset = 0x4, fixed_abs, tag = 'smem constant byte address 0x4 - core index']
  #allocation1 [shape = 'u32[144,128]{1,0:T(1,128)}', space=vmem, size = 0x12000, scoped, tag = 'internal scratch']
  %s0 = inlined_call_operand.hbm [shape: f32[2,64,128], index: 0, kind: input, shape index: {}]
  %s1 = inlined_call_operand.hbm [shape: f32[128,384], index: 1, kind: input, shape index: {}]
  %s2 = inlined_call_operand.hbm [shape: f32[128,128], index: 2, kind: input, shape index: {}]
  %s3 = inlined_call_operand.vmem [shape: f32[1,128], index: 3, kind: input, shape index: {}]
  %s4 = inlined_call_operand.hbm [shape: f32[2,64,128], index: 4, kind: output, shape index: {}]
  %s5 = sld [smem:[#allocation0]]
  $region61: #{attention_forward.1} parent=0
    _
  %s7 = ssub.s32 1, %s5
  %s8 = scalar_select 0, %s7, %s5
  $region1: #{attention_forward.1} parent=0
    #allocation2 [shape = 'u8[65536]{0}', space=vmem, size = 0x10000, scoped, tag = 'input window, operand 0']
    #allocation3 [shape = 's32[2]{0}', space=sflag, size = 0x8, scoped, tag = 'scoped memory for attention_forward.1']
    #allocation4 [shape = 's32[2]{0}', space=sflag, size = 0x8, scoped, tag = 'scoped memory for attention_forward.1']
    #allocation5 [shape = 'u8[196608]{0}', space=vmem, size = 0x30000, scoped, tag = 'input window, operand 1, single buffered']
    #allocation6 [shape = 's32[1]{0}', space=sflag, size = 0x4, scoped, tag = 'scoped memory for attention_forward.1']
    #allocation7 [shape = 'u8[65536]{0}', space=vmem, size = 0x10000, scoped, tag = 'input window, operand 2, single buffered']
    #allocation8 [shape = 'u8[65536]{0}', space=vmem, size = 0x10000, scoped, tag = 'output window, operand 0']
    %9 = vsyncpa [#allocation3], 0
    %s10 = scalar_lea.sflag [#allocation3], 1
    %11 = vsyncpa %s10, 0
    %12 = vsyncpa [#allocation6], 0
    %13 = vsyncpa [#allocation4], 0
    %s14 = scalar_lea.sflag [#allocation4], 1
    %15 = vsyncpa %s14, 0
    loop: start=0, step=1, limit=4
    $region2: #{attention_forward.1} parent=1 // loop_pre_header
      _
    $region3: #{attention_forward.1} parent=1 // loop_header
      %s17 = sphi 0, %s21
      %p18 = scmp.ge.s32.totalorder %s17, 4
      %s27 = sphi 0, %s29
      %s30 = sphi 0, %s27
      %s31 = sphi 0, %s30
      %s47 = sphi 0, %s31
      %s51 = sphi 0, %s51
      %s53 = sphi 0, %s51
      %s54 = sphi 0, %s53
      %s68 = sphi 0, %s54
      %s72 = sphi 0, %s72
      %s74 = sphi 0, %s72
      %s75 = sphi 0, %s74
      %s89 = sphi 0, %s75
      %s93 = sphi 0, %s93
      %s95 = sphi 0, %s93
      %s96 = sphi 0, %s95
      %s110 = sphi 0, %s96
      %s116 = sphi 0, %s118
      %s119 = sphi 0, %s116
      %s120 = sphi 0, %s119
      %s136 = sphi 0, %s120
    $region4: #{attention_forward.1} parent=1 // loop_header_branch
      %20 = sbr.rel (%p18) target = $region8
    $region5: #{attention_forward.1} parent=1 // loop_body
      %s22 = ssub.s32 %s17, 1
      %s23 = ssub.s32 %s17, 2
      %s24 = sadd.s32 %s17, 1
      %s25 = ssub.s32 %s17, %s24
      %p26 = scmp.eq.s32.totalorder %s25, 0
      %s28 = sadd.s32 %s27, 1
      %s29 = scalar_select %p26, %s27, %s28
      %p32 = pneg %p26
      %p33 = scmp.eq.s32.totalorder %s17, 1
      %p34 = por %p32, %p33
      %p35 = scmp.ne.s32.totalorder %s27, %s30
      %p36 = scmp.eq.s32.totalorder %s17, 0
      %p37 = por %p35, %p36
      %p38 = scmp.ne.s32.totalorder %s27, %s30
      %p39 = scmp.eq.s32.totalorder %s22, 1
      %p40 = por %p38, %p39
      %p41 = scmp.ne.s32.totalorder %s30, %s31
      %p42 = scmp.eq.s32.totalorder %s22, 0
      %p43 = por %p41, %p42
      %p44 = scmp.ne.s32.totalorder %s30, %s31
      %p45 = scmp.eq.s32.totalorder %s23, 1
      %p46 = por %p44, %p45
      %p48 = scmp.ne.s32.totalorder %s31, %s47
      %p49 = scmp.eq.s32.totalorder %s23, 0
      %p50 = por %p48, %p49
      %s52 = sadd.s32 %s51, 1
      %p55 = scmp.eq.s32.totalorder %s17, 1
      %p56 = scmp.ne.s32.totalorder %s51, %s53
      %p57 = scmp.eq.s32.totalorder %s17, 0
      %p58 = por %p56, %p57
      %p59 = scmp.ne.s32.totalorder %s51, %s53
      %p60 = scmp.eq.s32.totalorder %s22, 1
      %p61 = por %p59, %p60
      %p62 = scmp.ne.s32.totalorder %s53, %s54
      %p63 = scmp.eq.s32.totalorder %s22, 0
      %p64 = por %p62, %p63
      %p65 = scmp.ne.s32.totalorder %s53, %s54
      %p66 = scmp.eq.s32.totalorder %s23, 1
      %p67 = por %p65, %p66
      %p69 = scmp.ne.s32.totalorder %s54, %s68
      %p70 = scmp.eq.s32.totalorder %s23, 0
      %p71 = por %p69, %p70
      %s73 = sadd.s32 %s72, 1
      %p76 = scmp.eq.s32.totalorder %s17, 1
      %p77 = scmp.ne.s32.totalorder %s72, %s74
      %p78 = scmp.eq.s32.totalorder %s17, 0
      %p79 = por %p77, %p78
      %p80 = scmp.ne.s32.totalorder %s72, %s74
      %p81 = scmp.eq.s32.totalorder %s22, 1
      %p82 = por %p80, %p81
      %p83 = scmp.ne.s32.totalorder %s74, %s75
      %p84 = scmp.eq.s32.totalorder %s22, 0
      %p85 = por %p83, %p84
      %p86 = scmp.ne.s32.totalorder %s74, %s75
      %p87 = scmp.eq.s32.totalorder %s23, 1
      %p88 = por %p86, %p87
      %p90 = scmp.ne.s32.totalorder %s75, %s89
      %p91 = scmp.eq.s32.totalorder %s23, 0
      %p92 = por %p90, %p91
      %s94 = sadd.s32 %s93, 1
      %p97 = scmp.eq.s32.totalorder %s17, 1
      %p98 = scmp.ne.s32.totalorder %s93, %s95
      %p99 = scmp.eq.s32.totalorder %s17, 0
      %p100 = por %p98, %p99
      %p101 = scmp.ne.s32.totalorder %s93, %s95
      %p102 = scmp.eq.s32.totalorder %s22, 1
      %p103 = por %p101, %p102
      %p104 = scmp.ne.s32.totalorder %s95, %s96
      %p105 = scmp.eq.s32.totalorder %s22, 0
      %p106 = por %p104, %p105
      %p107 = scmp.ne.s32.totalorder %s95, %s96
      %p108 = scmp.eq.s32.totalorder %s23, 1
      %p109 = por %p107, %p108
      %p111 = scmp.ne.s32.totalorder %s96, %s110
      %p112 = scmp.eq.s32.totalorder %s23, 0
      %p113 = por %p111, %p112
      %s114 = ssub.s32 %s17, %s24
      %p115 = scmp.eq.s32.totalorder %s114, 0
      %s117 = sadd.s32 %s116, 1
      %s118 = scalar_select %p115, %s116, %s117
      %p121 = pneg %p115
      %p122 = scmp.eq.s32.totalorder %s17, 1
      %p123 = por %p121, %p122
      %p124 = scmp.ne.s32.totalorder %s116, %s119
      %p125 = scmp.eq.s32.totalorder %s17, 0
      %p126 = por %p124, %p125
      %p127 = scmp.ne.s32.totalorder %s116, %s119
      %p128 = scmp.eq.s32.totalorder %s22, 1
      %p129 = por %p127, %p128
      %p130 = scmp.ne.s32.totalorder %s119, %s120
      %p131 = scmp.eq.s32.totalorder %s22, 0
      %p132 = por %p130, %p131
      %p133 = scmp.ne.s32.totalorder %s119, %s120
      %p134 = scmp.eq.s32.totalorder %s23, 1
      %p135 = por %p133, %p134
      %p137 = scmp.ne.s32.totalorder %s120, %s136
      %p138 = scmp.eq.s32.totalorder %s23, 0
      %p139 = por %p137, %p138
      %p140 = scmp.le.s32.totalorder 1, %s17
      %p141 = scmp.lt.s32.totalorder %s17, 3
      %p142 = pnand %p140, %p141
      %p143 = pneg %p142
      // Predicated region
      $region9: #{attention_forward.1} parent=5 // pred_check
        _
      $region10: #{attention_forward.1} parent=5 // pred_check_branch
        %145 = sbr.rel (%p142) target = $region12
      $region11: #{attention_forward.1} parent=5 // pred_region
        %s146 = ssub.s32 %s17, 1
        // Predicated region
        $region13: #{attention_forward.1} parent=11 // pred_check
          %p147 = pneg %p64
        $region14: #{attention_forward.1} parent=11 // pred_check_branch
          %149 = sbr.rel (%p147) target = $region16
        $region15: #{attention_forward.1} parent=11 // pred_region
          %s151 = ssub.s32 6144, 6144
          %152 = vsyncadd [#allocation6], %s151
          %s153 = sshll.u32 [#allocation5], 4
          %s154 = int_to_ptr.vmem [resolvable:$true] %s153
          %159 = dma.hbm_to_vmem [thread:$0]  %s1, 6144, %s154, [#allocation6], 384, 384, 24
        $region16: #{attention_forward.1} parent=11 // pred_fallthru
          _
        // Predicated region
        $region17: #{attention_forward.1} parent=11 // pred_check
          %p160 = pneg %p85
        $region18: #{attention_forward.1} parent=11 // pred_check_branch
          %162 = sbr.rel (%p160) target = $region20
        $region19: #{attention_forward.1} parent=11 // pred_region
          %s164 = ssub.s32 2048, 2048
          %165 = vsyncadd [#allocation6], %s164
          %s166 = sshll.u32 [#allocation7], 4
          %s167 = int_to_ptr.vmem [resolvable:$true] %s166
          %172 = dma.hbm_to_vmem [thread:$0]  %s2, 2048, %s167, [#allocation6], 128, 128, 8
        $region20: #{attention_forward.1} parent=11 // pred_fallthru
          _
        // Predicated region
        $region21: #{attention_forward.1} parent=11 // pred_check
          %p173 = pneg %p106
        $region22: #{attention_forward.1} parent=11 // pred_check_branch
          %175 = sbr.rel (%p173) target = $region24
        $region23: #{attention_forward.1} parent=11 // pred_region
          _
        $region24: #{attention_forward.1} parent=11 // pred_fallthru
          _
      $region12: #{attention_forward.1} parent=5 // pred_fallthru
        _
      %p176 = scmp.lt.s32.totalorder %s17, 2
      // Predicated region
      $region25: #{attention_forward.1} parent=5 // pred_check
        %p177 = pneg %p176
      $region26: #{attention_forward.1} parent=5 // pred_check_branch
        %179 = sbr.rel (%p177) target = $region28
      $region27: #{attention_forward.1} parent=5 // pred_region
        // Predicated region
        $region29: #{attention_forward.1} parent=27 // pred_check
          %p180 = pneg %p37
        $region30: #{attention_forward.1} parent=27 // pred_check_branch
          %182 = sbr.rel (%p180) target = $region32
        $region31: #{attention_forward.1} parent=27 // pred_region
          %s183 = sand.u32 %s27, 1
          %s184 = scalar_lea.sflag [#allocation3], %s183
          %s185 = sand.u32 %s27, 1
          %s186 = smul.addr %s185, 64
          %s187 = scalar_lea.vmem [#allocation2], %s186
          %s189 = ssub.s32 1024, 1024
          %190 = vsyncadd %s184, %s189
          %s191 = smul.addr %s17, 8
          %s192 = smul.addr %s191, 128
          %s193 = scalar_lea.hbm %s0, %s192
          %s194 = sshll.u32 %s187, 4
          %s195 = int_to_ptr.vmem [resolvable:$true] %s194
          %200 = dma.hbm_to_vmem [thread:$0]  %s193, 1024, %s195, %s184, 128, 128, 8
        $region32: #{attention_forward.1} parent=27 // pred_fallthru
          _
      $region28: #{attention_forward.1} parent=5 // pred_fallthru
        _
      %p201 = scmp.le.s32.totalorder 1, %s17
      %p202 = scmp.lt.s32.totalorder %s17, 3
      %p203 = pnand %p201, %p202
      %p204 = pneg %p203
      // Predicated region
      $region33: #{attention_forward.1} parent=5 // pred_check
        _
      $region34: #{attention_forward.1} parent=5 // pred_check_branch
        %206 = sbr.rel (%p203) target = $region36
      $region35: #{attention_forward.1} parent=5 // pred_region
        %s207 = ssub.s32 %s17, 1
        %s208 = sand.u32 %s30, 1
        %s209 = scalar_lea.sflag [#allocation3], %s208
        %s210 = sand.u32 %s30, 1
        %s211 = smul.addr %s210, 64
        %s212 = scalar_lea.vmem [#allocation2], %s211
        // Predicated region
        $region37: #{attention_forward.1} parent=35 // pred_check
          %p213 = pneg %p43
        $region38: #{attention_forward.1} parent=35 // pred_check_branch
          %215 = sbr.rel (%p213) target = $region40
        $region39: #{attention_forward.1} parent=35 // pred_region
          %216 = dma.done %s209, 1024
        $region40: #{attention_forward.1} parent=35 // pred_fallthru
          _
        // Predicated region
        $region41: #{attention_forward.1} parent=35 // pred_check
          %p217 = pneg %p64
        $region42: #{attention_forward.1} parent=35 // pred_check_branch
          %219 = sbr.rel (%p217) target = $region44
        $region43: #{attention_forward.1} parent=35 // pred_region
          %220 = dma.done [#allocation6], 6144
        $region44: #{attention_forward.1} parent=35 // pred_fallthru
          _
        // Predicated region
        $region45: #{attention_forward.1} parent=35 // pred_check
          %p221 = pneg %p85
        $region46: #{attention_forward.1} parent=35 // pred_check_branch
          %223 = sbr.rel (%p221) target = $region48
        $region47: #{attention_forward.1} parent=35 // pred_region
          %224 = dma.done [#allocation6], 2048
        $region48: #{attention_forward.1} parent=35 // pred_fallthru
          _
        %s225 = sand.u32 %s30, 1
        %s226 = scalar_lea.sflag [#allocation3], %s225
        %s227 = sand.u32 %s30, 1
        %s228 = smul.addr %s227, 64
        %s229 = scalar_lea.vmem [#allocation2], %s228
        %p230 = pneg %p43
        %p231 = pneg %p40
        %p232 = pneg %p64
        %p233 = pneg %p61
        %p234 = pneg %p85
        %p235 = pneg %p82
        %p236 = pneg %p106
        %p237 = pneg %p103
        %p238 = pneg %p132
        %p239 = pneg %p129
        %s240 = sand.u32 %s119, 1
        %s241 = scalar_lea.sflag [#allocation4], %s240
        %s242 = sand.u32 %s119, 1
        %s243 = smul.addr %s242, 64
        %s244 = scalar_lea.vmem [#allocation8], %s243
        %v245 = vld [vmem:[%s212] sm:$0xff]
        %v246 = vld [vmem:[%s212 + $0x8] sm:$0xff]
        %v247 = vld [vmem:[%s212 + $0x10] sm:$0xff]
        %v248 = vld [vmem:[%s212 + $0x18] sm:$0xff]
        %v249 = vld [vmem:[%s212 + $0x20] sm:$0xff]
        %v250 = vld [vmem:[%s212 + $0x28] sm:$0xff]
        %v251 = vld [vmem:[%s212 + $0x30] sm:$0xff]
        %v252 = vld [vmem:[%s212 + $0x38] sm:$0xff]
        %v253 = vld [vmem:[#allocation5] sm:$0xff]
        %v254 = vld [vmem:[#allocation5 + $0x8] sm:$0xff]
        %v255 = vld [vmem:[#allocation5 + $0x10] sm:$0xff]
        %v256 = vld [vmem:[#allocation5 + $0x18] sm:$0xff]
        %v257 = vld [vmem:[#allocation5 + $0x20] sm:$0xff]
        %v258 = vld [vmem:[#allocation5 + $0x28] sm:$0xff]
        %v259 = vld [vmem:[#allocation5 + $0x30] sm:$0xff]
        %v260 = vld [vmem:[#allocation5 + $0x38] sm:$0xff]
        %v261 = vld [vmem:[#allocation5 + $0x40] sm:$0xff]
        %v262 = vld [vmem:[#allocation5 + $0x48] sm:$0xff]
        %v263 = vld [vmem:[#allocation5 + $0x50] sm:$0xff]
        %v264 = vld [vmem:[#allocation5 + $0x58] sm:$0xff]
        %v265 = vld [vmem:[#allocation5 + $0x60] sm:$0xff]
        %v266 = vld [vmem:[#allocation5 + $0x68] sm:$0xff]
        %v267 = vld [vmem:[#allocation5 + $0x70] sm:$0xff]
        %v268 = vld [vmem:[#allocation5 + $0x78] sm:$0xff]
        %v269 = vld [vmem:[#allocation5 + $0x80] sm:$0xff]
        %v270 = vld [vmem:[#allocation5 + $0x88] sm:$0xff]
        %v271 = vld [vmem:[#allocation5 + $0x90] sm:$0xff]
        %v272 = vld [vmem:[#allocation5 + $0x98] sm:$0xff]
        %v273 = vld [vmem:[#allocation5 + $0xa0] sm:$0xff]
        %v274 = vld [vmem:[#allocation5 + $0xa8] sm:$0xff]
        %v275 = vld [vmem:[#allocation5 + $0xb0] sm:$0xff]
        %v276 = vld [vmem:[#allocation5 + $0xb8] sm:$0xff]
        %v277 = vld [vmem:[#allocation5 + $0xc0] sm:$0xff]
        %v278 = vld [vmem:[#allocation5 + $0xc8] sm:$0xff]
        %v279 = vld [vmem:[#allocation5 + $0xd0] sm:$0xff]
        %v280 = vld [vmem:[#allocation5 + $0xd8] sm:$0xff]
        %v281 = vld [vmem:[#allocation5 + $0xe0] sm:$0xff]
        %v282 = vld [vmem:[#allocation5 + $0xe8] sm:$0xff]
        %v283 = vld [vmem:[#allocation5 + $0xf0] sm:$0xff]
        %v284 = vld [vmem:[#allocation5 + $0xf8] sm:$0xff]
        %v285 = vld [vmem:[#allocation5 + $0x100] sm:$0xff]
        %v286 = vld [vmem:[#allocation5 + $0x108] sm:$0xff]
        %v287 = vld [vmem:[#allocation5 + $0x110] sm:$0xff]
        %v288 = vld [vmem:[#allocation5 + $0x118] sm:$0xff]
        %v289 = vld [vmem:[#allocation5 + $0x120] sm:$0xff]
        %v290 = vld [vmem:[#allocation5 + $0x128] sm:$0xff]
        %v291 = vld [vmem:[#allocation5 + $0x130] sm:$0xff]
        %v292 = vld [vmem:[#allocation5 + $0x138] sm:$0xff]
        %v293 = vld [vmem:[#allocation5 + $0x140] sm:$0xff]
        %v294 = vld [vmem:[#allocation5 + $0x148] sm:$0xff]
        %v295 = vld [vmem:[#allocation5 + $0x150] sm:$0xff]
        %v296 = vld [vmem:[#allocation5 + $0x158] sm:$0xff]
        %v297 = vld [vmem:[#allocation5 + $0x160] sm:$0xff]
        %v298 = vld [vmem:[#allocation5 + $0x168] sm:$0xff]
        %v299 = vld [vmem:[#allocation5 + $0x170] sm:$0xff]
        %v300 = vld [vmem:[#allocation5 + $0x178] sm:$0xff]
        %301 = vmatprep.subr.mxu0 %v299
        %302 = vmatpush1.msra.mxu0 %v298
        %303 = vmatprep.subr.mxu0 %v296
        %304 = vmatpush1.msra.mxu0 %v295
        %305 = vmatprep.subr.mxu0 %v293
        %306 = vmatpush1.msra.mxu0 %v292
        %307 = vmatprep.subr.mxu0 %v290
        %308 = vmatpush1.msra.mxu0 %v289
        %309 = vmatprep.subr.mxu0 %v287
        %310 = vmatpush1.msra.mxu0 %v286
        %311 = vmatprep.subr.mxu0 %v284
        %312 = vmatpush1.msra.mxu0 %v283
        %313 = vmatprep.subr.mxu0 %v281
        %314 = vmatpush1.msra.mxu0 %v280
        %315 = vmatprep.subr.mxu0 %v278
        %316 = vmatpush1.msra.mxu0 %v277
        %317 = vmatprep.subr.mxu0 %v275
        %318 = vmatpush1.msra.mxu0 %v274
        %319 = vmatprep.subr.mxu0 %v272
        %320 = vmatpush1.msra.mxu0 %v271
        %321 = vmatprep.subr.mxu0 %v269
        %322 = vmatpush1.msra.mxu0 %v268
        %323 = vmatprep.subr.mxu0 %v266
        %324 = vmatpush1.msra.mxu0 %v265
        %325 = vmatprep.subr.mxu0 %v263
        %326 = vmatpush1.msra.mxu0 %v262
        %327 = vmatprep.subr.mxu0 %v260
        %328 = vmatpush1.msra.mxu0 %v259
        %329 = vmatprep.subr.mxu0 %v257
        %330 = vmatpush1.msra.mxu0 %v256
        %331 = vmatprep.subr.mxu0 %v254
        %332 = vmatpush1.msra.mxu0 %v253
        %333 = vmatprep.subr.mxu0 0.0
        %334 = vmatpush2.msra.mxu0 0.0
        %335 = vmatprep.subr.mxu0 0.0
        %336 = vmatpush2.msra.mxu0 0.0
        %337 = vmatprep.subr.mxu0 0.0
        %338 = vmatpush2.msra.mxu0 0.0
        %339 = vmatprep.subr.mxu0 0.0
        %340 = vmatpush2.msra.mxu0 0.0
        %341 = vmatprep.subr.mxu0 0.0
        %342 = vmatpush2.msra.mxu0 0.0
        %343 = vmatprep.subr.mxu0 0.0
        %344 = vmatpush2.msra.mxu0 0.0
        %345 = vmatprep.subr.mxu0 0.0
        %346 = vmatpush2.msra.mxu0 0.0
        %347 = vmatprep.subr.mxu0 0.0
        %348 = vmatpush2.msra.mxu0 0.0
        %349 = vmatprep.subr.mxu0 0.0
        %350 = vmatpush2.msra.mxu0 0.0
        %351 = vmatprep.subr.mxu0 0.0
        %352 = vmatpush2.msra.mxu0 0.0
        %353 = vmatprep.subr.mxu0 0.0
        %354 = vmatpush2.msra.mxu0 0.0
        %355 = vmatprep.subr.mxu0 0.0
        %356 = vmatpush2.msra.mxu0 0.0
        %357 = vmatprep.subr.mxu0 0.0
        %358 = vmatpush2.msra.mxu0 0.0
        %359 = vmatprep.subr.mxu0 0.0
        %360 = vmatpush2.msra.mxu0 0.0
        %361 = vmatprep.subr.mxu0 0.0
        %362 = vmatpush2.msra.mxu0 0.0
        %363 = vmatprep.subr.mxu0 0.0
        %364 = vmatpush2.msra.mxu0 0.0
        %365 = vmatprep.mubr.f32.mxu0 0.0
        %366 = vmatmul.mubr.f32.gmra.mxu0 %v245
        %v367 = vpop.f32.mrf.mxu0
        %v368 = vadd.f32 0.0, %v367
        %v369 = vpop.f32.mrf.mxu0
        %v370 = vadd.f32 0.0, %v369
        %371 = vmatprep.mubr.f32.mxu0 0.0
        %372 = vmatmul.mubr.f32.gmra.mxu0 %v246
        %v373 = vpop.f32.mrf.mxu0
        %v374 = vadd.f32 0.0, %v373
        %v375 = vpop.f32.mrf.mxu0
        %v376 = vadd.f32 0.0, %v375
        %377 = vmatprep.mubr.f32.mxu0 0.0
        %378 = vmatmul.mubr.f32.gmra.mxu0 %v247
        %v379 = vpop.f32.mrf.mxu0
        %v380 = vadd.f32 0.0, %v379
        %v381 = vpop.f32.mrf.mxu0
        %v382 = vadd.f32 0.0, %v381
        %383 = vmatprep.mubr.f32.mxu0 0.0
        %384 = vmatmul.mubr.f32.gmra.mxu0 %v248
        %v385 = vpop.f32.mrf.mxu0
        %v386 = vadd.f32 0.0, %v385
        %v387 = vpop.f32.mrf.mxu0
        %v388 = vadd.f32 0.0, %v387
        %389 = vmatprep.mubr.f32.mxu0 0.0
        %390 = vmatmul.mubr.f32.gmra.mxu0 %v249
        %v391 = vpop.f32.mrf.mxu0
        %v392 = vadd.f32 0.0, %v391
        %v393 = vpop.f32.mrf.mxu0
        %v394 = vadd.f32 0.0, %v393
        %395 = vmatprep.mubr.f32.mxu0 0.0
        %396 = vmatmul.mubr.f32.gmra.mxu0 %v250
        %v397 = vpop.f32.mrf.mxu0
        %v398 = vadd.f32 0.0, %v397
        %v399 = vpop.f32.mrf.mxu0
        %v400 = vadd.f32 0.0, %v399
        %401 = vmatprep.mubr.f32.mxu0 0.0
        %402 = vmatmul.mubr.f32.gmra.mxu0 %v251
        %v403 = vpop.f32.mrf.mxu0
        %v404 = vadd.f32 0.0, %v403
        %v405 = vpop.f32.mrf.mxu0
        %v406 = vadd.f32 0.0, %v405
        %407 = vmatprep.mubr.f32.mxu0 0.0
        %408 = vmatmul.mubr.f32.gmra.mxu0 %v252
        %v409 = vpop.f32.mrf.mxu0
        %v410 = vadd.f32 0.0, %v409
        %v411 = vpop.f32.mrf.mxu0
        %v412 = vadd.f32 0.0, %v411
        %413 = vdwg.mxu0
        %414 = vmatprep.subr.mxu0 0.0
        %415 = vmatpush1.msra.mxu0 %v300
        %416 = vmatprep.subr.mxu0 0.0
        %417 = vmatpush1.msra.mxu0 %v297
        %418 = vmatprep.subr.mxu0 0.0
        %419 = vmatpush1.msra.mxu0 %v294
        %420 = vmatprep.subr.mxu0 0.0
        %421 = vmatpush1.msra.mxu0 %v291
        %422 = vmatprep.subr.mxu0 0.0
        %423 = vmatpush1.msra.mxu0 %v288
        %424 = vmatprep.subr.mxu0 0.0
        %425 = vmatpush1.msra.mxu0 %v285
        %426 = vmatprep.subr.mxu0 0.0
        %427 = vmatpush1.msra.mxu0 %v282
        %428 = vmatprep.subr.mxu0 0.0
        %429 = vmatpush1.msra.mxu0 %v279
        %430 = vmatprep.subr.mxu0 0.0
        %431 = vmatpush1.msra.mxu0 %v276
        %432 = vmatprep.subr.mxu0 0.0
        %433 = vmatpush1.msra.mxu0 %v273
        %434 = vmatprep.subr.mxu0 0.0
        %435 = vmatpush1.msra.mxu0 %v270
        %436 = vmatprep.subr.mxu0 0.0
        %437 = vmatpush1.msra.mxu0 %v267
        %438 = vmatprep.subr.mxu0 0.0
        %439 = vmatpush1.msra.mxu0 %v264
        %440 = vmatprep.subr.mxu0 0.0
        %441 = vmatpush1.msra.mxu0 %v261
        %442 = vmatprep.subr.mxu0 0.0
        %443 = vmatpush1.msra.mxu0 %v258
        %444 = vmatprep.subr.mxu0 0.0
        %445 = vmatpush1.msra.mxu0 %v255
        %446 = vmatprep.subr.mxu0 0.0
        %447 = vmatpush2.msra.mxu0 0.0
        %448 = vmatprep.subr.mxu0 0.0
        %449 = vmatpush2.msra.mxu0 0.0
        %450 = vmatprep.subr.mxu0 0.0
        %451 = vmatpush2.msra.mxu0 0.0
        %452 = vmatprep.subr.mxu0 0.0
        %453 = vmatpush2.msra.mxu0 0.0
        %454 = vmatprep.subr.mxu0 0.0
        %455 = vmatpush2.msra.mxu0 0.0
        %456 = vmatprep.subr.mxu0 0.0
        %457 = vmatpush2.msra.mxu0 0.0
        %458 = vmatprep.subr.mxu0 0.0
        %459 = vmatpush2.msra.mxu0 0.0
        %460 = vmatprep.subr.mxu0 0.0
        %461 = vmatpush2.msra.mxu0 0.0
        %462 = vmatprep.subr.mxu0 0.0
        %463 = vmatpush2.msra.mxu0 0.0
        %464 = vmatprep.subr.mxu0 0.0
        %465 = vmatpush2.msra.mxu0 0.0
        %466 = vmatprep.subr.mxu0 0.0
        %467 = vmatpush2.msra.mxu0 0.0
        %468 = vmatprep.subr.mxu0 0.0
        %469 = vmatpush2.msra.mxu0 0.0
        %470 = vmatprep.subr.mxu0 0.0
        %471 = vmatpush2.msra.mxu0 0.0
        %472 = vmatprep.subr.mxu0 0.0
        %473 = vmatpush2.msra.mxu0 0.0
        %474 = vmatprep.subr.mxu0 0.0
        %475 = vmatpush2.msra.mxu0 0.0
        %476 = vmatprep.subr.mxu0 0.0
        %477 = vmatpush2.msra.mxu0 0.0
        %478 = vmatprep.mubr.f32.mxu0 0.0
        %479 = vmatmul.mubr.f32.gmra.mxu0 %v245
        %v480 = vpop.f32.mrf.mxu0
        %v481 = vadd.f32 0.0, %v480
        %v482 = vpop.f32.mrf.mxu0
        %483 = vmatprep.mubr.f32.mxu0 0.0
        %484 = vmatmul.mubr.f32.gmra.mxu0 %v246
        %v485 = vpop.f32.mrf.mxu0
        %v486 = vadd.f32 0.0, %v485
        %v487 = vpop.f32.mrf.mxu0
        %488 = vmatprep.mubr.f32.mxu0 0.0
        %489 = vmatmul.mubr.f32.gmra.mxu0 %v247
        %v490 = vpop.f32.mrf.mxu0
        %v491 = vadd.f32 0.0, %v490
        %v492 = vpop.f32.mrf.mxu0
        %493 = vmatprep.mubr.f32.mxu0 0.0
        %494 = vmatmul.mubr.f32.gmra.mxu0 %v248
        %v495 = vpop.f32.mrf.mxu0
        %v496 = vadd.f32 0.0, %v495
        %v497 = vpop.f32.mrf.mxu0
        %498 = vmatprep.mubr.f32.mxu0 0.0
        %499 = vmatmul.mubr.f32.gmra.mxu0 %v249
        %v500 = vpop.f32.mrf.mxu0
        %v501 = vadd.f32 0.0, %v500
        %v502 = vpop.f32.mrf.mxu0
        %503 = vmatprep.mubr.f32.mxu0 0.0
        %504 = vmatmul.mubr.f32.gmra.mxu0 %v250
        %v505 = vpop.f32.mrf.mxu0
        %v506 = vadd.f32 0.0, %v505
        %v507 = vpop.f32.mrf.mxu0
        %508 = vmatprep.mubr.f32.mxu0 0.0
        %509 = vmatmul.mubr.f32.gmra.mxu0 %v251
        %v510 = vpop.f32.mrf.mxu0
        %v511 = vadd.f32 0.0, %v510
        %v512 = vpop.f32.mrf.mxu0
        %513 = vmatprep.mubr.f32.mxu0 0.0
        %514 = vmatmul.mubr.f32.gmra.mxu0 %v252
        %v515 = vpop.f32.mrf.mxu0
        %v516 = vadd.f32 0.0, %v515
        %v517 = vpop.f32.mrf.mxu0
        %518 = vdwg.mxu0
        %527 = vrot.lane.b32.xlu0 %v368, 96
        %v528 = vpop.permute.xlu0 %527
        %529 = vrot.lane.b32.xlu0 %v374, 96
        %v530 = vpop.permute.xlu0 %529
        %531 = vrot.lane.b32.xlu0 %v380, 96
        %v532 = vpop.permute.xlu0 %531
        %533 = vrot.lane.b32.xlu0 %v386, 96
        %v534 = vpop.permute.xlu0 %533
        %535 = vrot.lane.b32.xlu0 %v392, 96
        %v536 = vpop.permute.xlu0 %535
        %537 = vrot.lane.b32.xlu0 %v398, 96
        %v538 = vpop.permute.xlu0 %537
        %539 = vrot.lane.b32.xlu0 %v404, 96
        %v540 = vpop.permute.xlu0 %539
        %541 = vrot.lane.b32.xlu0 %v410, 96
        %v542 = vpop.permute.xlu0 %541
        %551 = vrot.lane.b32.xlu0 %v368, 64
        %v552 = vpop.permute.xlu0 %551
        %553 = vrot.lane.b32.xlu0 %v374, 64
        %v554 = vpop.permute.xlu0 %553
        %555 = vrot.lane.b32.xlu0 %v380, 64
        %v556 = vpop.permute.xlu0 %555
        %557 = vrot.lane.b32.xlu0 %v386, 64
        %v558 = vpop.permute.xlu0 %557
        %559 = vrot.lane.b32.xlu0 %v392, 64
        %v560 = vpop.permute.xlu0 %559
        %561 = vrot.lane.b32.xlu0 %v398, 64
        %v562 = vpop.permute.xlu0 %561
        %563 = vrot.lane.b32.xlu0 %v404, 64
        %v564 = vpop.permute.xlu0 %563
        %565 = vrot.lane.b32.xlu0 %v410, 64
        %v566 = vpop.permute.xlu0 %565
        %575 = vrot.lane.b32.xlu0 %v368, 32
        %v576 = vpop.permute.xlu0 %575
        %577 = vrot.lane.b32.xlu0 %v374, 32
        %v578 = vpop.permute.xlu0 %577
        %579 = vrot.lane.b32.xlu0 %v380, 32
        %v580 = vpop.permute.xlu0 %579
        %581 = vrot.lane.b32.xlu0 %v386, 32
        %v582 = vpop.permute.xlu0 %581
        %583 = vrot.lane.b32.xlu0 %v392, 32
        %v584 = vpop.permute.xlu0 %583
        %585 = vrot.lane.b32.xlu0 %v398, 32
        %v586 = vpop.permute.xlu0 %585
        %587 = vrot.lane.b32.xlu0 %v404, 32
        %v588 = vpop.permute.xlu0 %587
        %589 = vrot.lane.b32.xlu0 %v410, 32
        %v590 = vpop.permute.xlu0 %589
        %v599 = vcombine.low %v368, %v552
        %v600 = vcombine.high %v368, %v552
        %v602 = vunpack.c.l.s4 1983009808
        %v603 = vunpack.c.0.s8 %v602
        %v604 = vlaneseq
        %v605 = vshrl.u32 %v604, 7
        %v606 = vsub.s32 %v603, %v605
        %v607 = vrot.slane %v599, %v606
        %v609 = vunpack.c.l.s4 1983009808
        %v610 = vunpack.c.0.s8 %v609
        %v611 = vlaneseq
        %v612 = vshrl.u32 %v611, 7
        %v613 = vsub.s32 %v610, %v612
        %v614 = vrot.slane %v600, %v613
        %v615 = vcombine.low %v528, %v576
        %v616 = vcombine.high %v528, %v576
        %v618 = vunpack.c.l.s4 1983009808
        %v619 = vunpack.c.0.s8 %v618
        %v620 = vlaneseq
        %v621 = vshrl.u32 %v620, 7
        %v622 = vsub.s32 %v619, %v621
        %v623 = vrot.slane %v615, %v622
        %v625 = vunpack.c.l.s4 1983009808
        %v626 = vunpack.c.0.s8 %v625
        %v627 = vlaneseq
        %v628 = vshrl.u32 %v627, 7
        %v629 = vsub.s32 %v626, %v628
        %v630 = vrot.slane %v616, %v629
        %v631 = vcombine.low %v607, %v623
        %v632 = vcombine.high %v607, %v623
        %v634 = vunpack.c.l.s4 1934713408
        %v635 = vunpack.c.0.s8 %v634
        %v636 = vlaneseq
        %v637 = vshrl.u32 %v636, 7
        %v638 = vsub.s32 %v635, %v637
        %v639 = vrot.slane %v631, %v638
        %v641 = vunpack.c.l.s4 1934713408
        %v642 = vunpack.c.0.s8 %v641
        %v643 = vlaneseq
        %v644 = vshrl.u32 %v643, 7
        %v645 = vsub.s32 %v642, %v644
        %v646 = vrot.slane %v632, %v645
        %v647 = vcombine.low %v614, %v630
        %v648 = vcombine.high %v614, %v630
        %v650 = vunpack.c.l.s4 1934713408
        %v651 = vunpack.c.0.s8 %v650
        %v652 = vlaneseq
        %v653 = vshrl.u32 %v652, 7
        %v654 = vsub.s32 %v651, %v653
        %v655 = vrot.slane %v647, %v654
        %v657 = vunpack.c.l.s4 1934713408
        %v658 = vunpack.c.0.s8 %v657
        %v659 = vlaneseq
        %v660 = vshrl.u32 %v659, 7
        %v661 = vsub.s32 %v658, %v660
        %v662 = vrot.slane %v648, %v661
        %v663 = vcombine.high %v639, 0.0
        %v664 = vcombine.high %v646, 0.0
        %v665 = vcombine.high %v655, 0.0
        %v666 = vcombine.high %v662, 0.0
        %v667 = vcombine.low %v374, %v554
        %v668 = vcombine.high %v374, %v554
        %v670 = vunpack.c.l.s4 1983009808
        %v671 = vunpack.c.0.s8 %v670
        %v672 = vlaneseq
        %v673 = vshrl.u32 %v672, 7
        %v674 = vsub.s32 %v671, %v673
        %v675 = vrot.slane %v667, %v674
        %v677 = vunpack.c.l.s4 1983009808
        %v678 = vunpack.c.0.s8 %v677
        %v679 = vlaneseq
        %v680 = vshrl.u32 %v679, 7
        %v681 = vsub.s32 %v678, %v680
        %v682 = vrot.slane %v668, %v681
        %v683 = vcombine.low %v530, %v578
        %v684 = vcombine.high %v530, %v578
        %v686 = vunpack.c.l.s4 1983009808
        %v687 = vunpack.c.0.s8 %v686
        %v688 = vlaneseq
        %v689 = vshrl.u32 %v688, 7
        %v690 = vsub.s32 %v687, %v689
        %v691 = vrot.slane %v683, %v690
        %v693 = vunpack.c.l.s4 1983009808
        %v694 = vunpack.c.0.s8 %v693
        %v695 = vlaneseq
        %v696 = vshrl.u32 %v695, 7
        %v697 = vsub.s32 %v694, %v696
        %v698 = vrot.slane %v684, %v697
        %v699 = vcombine.low %v675, %v691
        %v700 = vcombine.high %v675, %v691
        %v702 = vunpack.c.l.s4 1934713408
        %v703 = vunpack.c.0.s8 %v702
        %v704 = vlaneseq
        %v705 = vshrl.u32 %v704, 7
        %v706 = vsub.s32 %v703, %v705
        %v707 = vrot.slane %v699, %v706
        %v709 = vunpack.c.l.s4 1934713408
        %v710 = vunpack.c.0.s8 %v709
        %v711 = vlaneseq
        %v712 = vshrl.u32 %v711, 7
        %v713 = vsub.s32 %v710, %v712
        %v714 = vrot.slane %v700, %v713
        %v715 = vcombine.low %v682, %v698
        %v716 = vcombine.high %v682, %v698
        %v718 = vunpack.c.l.s4 1934713408
        %v719 = vunpack.c.0.s8 %v718
        %v720 = vlaneseq
        %v721 = vshrl.u32 %v720, 7
        %v722 = vsub.s32 %v719, %v721
        %v723 = vrot.slane %v715, %v722
        %v725 = vunpack.c.l.s4 1934713408
        %v726 = vunpack.c.0.s8 %v725
        %v727 = vlaneseq
        %v728 = vshrl.u32 %v727, 7
        %v729 = vsub.s32 %v726, %v728
        %v730 = vrot.slane %v716, %v729
        %v731 = vcombine.high %v707, 0.0
        %v732 = vcombine.high %v714, 0.0
        %v733 = vcombine.high %v723, 0.0
        %v734 = vcombine.high %v730, 0.0
        %v735 = vcombine.low %v380, %v556
        %v736 = vcombine.high %v380, %v556
        %v738 = vunpack.c.l.s4 1983009808
        %v739 = vunpack.c.0.s8 %v738
        %v740 = vlaneseq
        %v741 = vshrl.u32 %v740, 7
        %v742 = vsub.s32 %v739, %v741
        %v743 = vrot.slane %v735, %v742
        %v745 = vunpack.c.l.s4 1983009808
        %v746 = vunpack.c.0.s8 %v745
        %v747 = vlaneseq
        %v748 = vshrl.u32 %v747, 7
        %v749 = vsub.s32 %v746, %v748
        %v750 = vrot.slane %v736, %v749
        %v751 = vcombine.low %v532, %v580
        %v752 = vcombine.high %v532, %v580
        %v754 = vunpack.c.l.s4 1983009808
        %v755 = vunpack.c.0.s8 %v754
        %v756 = vlaneseq
        %v757 = vshrl.u32 %v756, 7
        %v758 = vsub.s32 %v755, %v757
        %v759 = vrot.slane %v751, %v758
        %v761 = vunpack.c.l.s4 1983009808
        %v762 = vunpack.c.0.s8 %v761
        %v763 = vlaneseq
        %v764 = vshrl.u32 %v763, 7
        %v765 = vsub.s32 %v762, %v764
        %v766 = vrot.slane %v752, %v765
        %v767 = vcombine.low %v743, %v759
        %v768 = vcombine.high %v743, %v759
        %v770 = vunpack.c.l.s4 1934713408
        %v771 = vunpack.c.0.s8 %v770
        %v772 = vlaneseq
        %v773 = vshrl.u32 %v772, 7
        %v774 = vsub.s32 %v771, %v773
        %v775 = vrot.slane %v767, %v774
        %v777 = vunpack.c.l.s4 1934713408
        %v778 = vunpack.c.0.s8 %v777
        %v779 = vlaneseq
        %v780 = vshrl.u32 %v779, 7
        %v781 = vsub.s32 %v778, %v780
        %v782 = vrot.slane %v768, %v781
        %v783 = vcombine.low %v750, %v766
        %v784 = vcombine.high %v750, %v766
        %v786 = vunpack.c.l.s4 1934713408
        %v787 = vunpack.c.0.s8 %v786
        %v788 = vlaneseq
        %v789 = vshrl.u32 %v788, 7
        %v790 = vsub.s32 %v787, %v789
        %v791 = vrot.slane %v783, %v790
        %v793 = vunpack.c.l.s4 1934713408
        %v794 = vunpack.c.0.s8 %v793
        %v795 = vlaneseq
        %v796 = vshrl.u32 %v795, 7
        %v797 = vsub.s32 %v794, %v796
        %v798 = vrot.slane %v784, %v797
        %v799 = vcombine.high %v775, 0.0
        %v800 = vcombine.high %v782, 0.0
        %v801 = vcombine.high %v791, 0.0
        %v802 = vcombine.high %v798, 0.0
        %v803 = vcombine.low %v386, %v558
        %v804 = vcombine.high %v386, %v558
        %v806 = vunpack.c.l.s4 1983009808
        %v807 = vunpack.c.0.s8 %v806
        %v808 = vlaneseq
        %v809 = vshrl.u32 %v808, 7
        %v810 = vsub.s32 %v807, %v809
        %v811 = vrot.slane %v803, %v810
        %v813 = vunpack.c.l.s4 1983009808
        %v814 = vunpack.c.0.s8 %v813
        %v815 = vlaneseq
        %v816 = vshrl.u32 %v815, 7
        %v817 = vsub.s32 %v814, %v816
        %v818 = vrot.slane %v804, %v817
        %v819 = vcombine.low %v534, %v582
        %v820 = vcombine.high %v534, %v582
        %v822 = vunpack.c.l.s4 1983009808
        %v823 = vunpack.c.0.s8 %v822
        %v824 = vlaneseq
        %v825 = vshrl.u32 %v824, 7
        %v826 = vsub.s32 %v823, %v825
        %v827 = vrot.slane %v819, %v826
        %v829 = vunpack.c.l.s4 1983009808
        %v830 = vunpack.c.0.s8 %v829
        %v831 = vlaneseq
        %v832 = vshrl.u32 %v831, 7
        %v833 = vsub.s32 %v830, %v832
        %v834 = vrot.slane %v820, %v833
        %v835 = vcombine.low %v811, %v827
        %v836 = vcombine.high %v811, %v827
        %v838 = vunpack.c.l.s4 1934713408
        %v839 = vunpack.c.0.s8 %v838
        %v840 = vlaneseq
        %v841 = vshrl.u32 %v840, 7
        %v842 = vsub.s32 %v839, %v841
        %v843 = vrot.slane %v835, %v842
        %v845 = vunpack.c.l.s4 1934713408
        %v846 = vunpack.c.0.s8 %v845
        %v847 = vlaneseq
        %v848 = vshrl.u32 %v847, 7
        %v849 = vsub.s32 %v846, %v848
        %v850 = vrot.slane %v836, %v849
        %v851 = vcombine.low %v818, %v834
        %v852 = vcombine.high %v818, %v834
        %v854 = vunpack.c.l.s4 1934713408
        %v855 = vunpack.c.0.s8 %v854
        %v856 = vlaneseq
        %v857 = vshrl.u32 %v856, 7
        %v858 = vsub.s32 %v855, %v857
        %v859 = vrot.slane %v851, %v858
        %v861 = vunpack.c.l.s4 1934713408
        %v862 = vunpack.c.0.s8 %v861
        %v863 = vlaneseq
        %v864 = vshrl.u32 %v863, 7
        %v865 = vsub.s32 %v862, %v864
        %v866 = vrot.slane %v852, %v865
        %v867 = vcombine.high %v843, 0.0
        %v868 = vcombine.high %v850, 0.0
        %v869 = vcombine.high %v859, 0.0
        %v870 = vcombine.high %v866, 0.0
        %v871 = vcombine.low %v392, %v560
        %v872 = vcombine.high %v392, %v560
        %v874 = vunpack.c.l.s4 1983009808
        %v875 = vunpack.c.0.s8 %v874
        %v876 = vlaneseq
        %v877 = vshrl.u32 %v876, 7
        %v878 = vsub.s32 %v875, %v877
        %v879 = vrot.slane %v871, %v878
        %v881 = vunpack.c.l.s4 1983009808
        %v882 = vunpack.c.0.s8 %v881
        %v883 = vlaneseq
        %v884 = vshrl.u32 %v883, 7
        %v885 = vsub.s32 %v882, %v884
        %v886 = vrot.slane %v872, %v885
        %v887 = vcombine.low %v536, %v584
        %v888 = vcombine.high %v536, %v584
        %v890 = vunpack.c.l.s4 1983009808
        %v891 = vunpack.c.0.s8 %v890
        %v892 = vlaneseq
        %v893 = vshrl.u32 %v892, 7
        %v894 = vsub.s32 %v891, %v893
        %v895 = vrot.slane %v887, %v894
        %v897 = vunpack.c.l.s4 1983009808
        %v898 = vunpack.c.0.s8 %v897
        %v899 = vlaneseq
        %v900 = vshrl.u32 %v899, 7
        %v901 = vsub.s32 %v898, %v900
        %v902 = vrot.slane %v888, %v901
        %v903 = vcombine.low %v879, %v895
        %v904 = vcombine.high %v879, %v895
        %v906 = vunpack.c.l.s4 1934713408
        %v907 = vunpack.c.0.s8 %v906
        %v908 = vlaneseq
        %v909 = vshrl.u32 %v908, 7
        %v910 = vsub.s32 %v907, %v909
        %v911 = vrot.slane %v903, %v910
        %v913 = vunpack.c.l.s4 1934713408
        %v914 = vunpack.c.0.s8 %v913
        %v915 = vlaneseq
        %v916 = vshrl.u32 %v915, 7
        %v917 = vsub.s32 %v914, %v916
        %v918 = vrot.slane %v904, %v917
        %v919 = vcombine.low %v886, %v902
        %v920 = vcombine.high %v886, %v902
        %v922 = vunpack.c.l.s4 1934713408
        %v923 = vunpack.c.0.s8 %v922
        %v924 = vlaneseq
        %v925 = vshrl.u32 %v924, 7
        %v926 = vsub.s32 %v923, %v925
        %v927 = vrot.slane %v919, %v926
        %v929 = vunpack.c.l.s4 1934713408
        %v930 = vunpack.c.0.s8 %v929
        %v931 = vlaneseq
        %v932 = vshrl.u32 %v931, 7
        %v933 = vsub.s32 %v930, %v932
        %v934 = vrot.slane %v920, %v933
        %v935 = vcombine.high %v911, 0.0
        %v936 = vcombine.high %v918, 0.0
        %v937 = vcombine.high %v927, 0.0
        %v938 = vcombine.high %v934, 0.0
        %v939 = vcombine.low %v398, %v562
        %v940 = vcombine.high %v398, %v562
        %v942 = vunpack.c.l.s4 1983009808
        %v943 = vunpack.c.0.s8 %v942
        %v944 = vlaneseq
        %v945 = vshrl.u32 %v944, 7
        %v946 = vsub.s32 %v943, %v945
        %v947 = vrot.slane %v939, %v946
        %v949 = vunpack.c.l.s4 1983009808
        %v950 = vunpack.c.0.s8 %v949
        %v951 = vlaneseq
        %v952 = vshrl.u32 %v951, 7
        %v953 = vsub.s32 %v950, %v952
        %v954 = vrot.slane %v940, %v953
        %v955 = vcombine.low %v538, %v586
        %v956 = vcombine.high %v538, %v586
        %v958 = vunpack.c.l.s4 1983009808
        %v959 = vunpack.c.0.s8 %v958
        %v960 = vlaneseq
        %v961 = vshrl.u32 %v960, 7
        %v962 = vsub.s32 %v959, %v961
        %v963 = vrot.slane %v955, %v962
        %v965 = vunpack.c.l.s4 1983009808
        %v966 = vunpack.c.0.s8 %v965
        %v967 = vlaneseq
        %v968 = vshrl.u32 %v967, 7
        %v969 = vsub.s32 %v966, %v968
        %v970 = vrot.slane %v956, %v969
        %v971 = vcombine.low %v947, %v963
        %v972 = vcombine.high %v947, %v963
        %v974 = vunpack.c.l.s4 1934713408
        %v975 = vunpack.c.0.s8 %v974
        %v976 = vlaneseq
        %v977 = vshrl.u32 %v976, 7
        %v978 = vsub.s32 %v975, %v977
        %v979 = vrot.slane %v971, %v978
        %v981 = vunpack.c.l.s4 1934713408
        %v982 = vunpack.c.0.s8 %v981
        %v983 = vlaneseq
        %v984 = vshrl.u32 %v983, 7
        %v985 = vsub.s32 %v982, %v984
        %v986 = vrot.slane %v972, %v985
        %v987 = vcombine.low %v954, %v970
        %v988 = vcombine.high %v954, %v970
        %v990 = vunpack.c.l.s4 1934713408
        %v991 = vunpack.c.0.s8 %v990
        %v992 = vlaneseq
        %v993 = vshrl.u32 %v992, 7
        %v994 = vsub.s32 %v991, %v993
        %v995 = vrot.slane %v987, %v994
        %v997 = vunpack.c.l.s4 1934713408
        %v998 = vunpack.c.0.s8 %v997
        %v999 = vlaneseq
        %v1000 = vshrl.u32 %v999, 7
        %v1001 = vsub.s32 %v998, %v1000
        %v1002 = vrot.slane %v988, %v1001
        %v1003 = vcombine.high %v979, 0.0
        %v1004 = vcombine.high %v986, 0.0
        %v1005 = vcombine.high %v995, 0.0
        %v1006 = vcombine.high %v1002, 0.0
        %v1007 = vcombine.low %v404, %v564
        %v1008 = vcombine.high %v404, %v564
        %v1010 = vunpack.c.l.s4 1983009808
        %v1011 = vunpack.c.0.s8 %v1010
        %v1012 = vlaneseq
        %v1013 = vshrl.u32 %v1012, 7
        %v1014 = vsub.s32 %v1011, %v1013
        %v1015 = vrot.slane %v1007, %v1014
        %v1017 = vunpack.c.l.s4 1983009808
        %v1018 = vunpack.c.0.s8 %v1017
        %v1019 = vlaneseq
        %v1020 = vshrl.u32 %v1019, 7
        %v1021 = vsub.s32 %v1018, %v1020
        %v1022 = vrot.slane %v1008, %v1021
        %v1023 = vcombine.low %v540, %v588
        %v1024 = vcombine.high %v540, %v588
        %v1026 = vunpack.c.l.s4 1983009808
        %v1027 = vunpack.c.0.s8 %v1026
        %v1028 = vlaneseq
        %v1029 = vshrl.u32 %v1028, 7
        %v1030 = vsub.s32 %v1027, %v1029
        %v1031 = vrot.slane %v1023, %v1030
        %v1033 = vunpack.c.l.s4 1983009808
        %v1034 = vunpack.c.0.s8 %v1033
        %v1035 = vlaneseq
        %v1036 = vshrl.u32 %v1035, 7
        %v1037 = vsub.s32 %v1034, %v1036
        %v1038 = vrot.slane %v1024, %v1037
        %v1039 = vcombine.low %v1015, %v1031
        %v1040 = vcombine.high %v1015, %v1031
        %v1042 = vunpack.c.l.s4 1934713408
        %v1043 = vunpack.c.0.s8 %v1042
        %v1044 = vlaneseq
        %v1045 = vshrl.u32 %v1044, 7
        %v1046 = vsub.s32 %v1043, %v1045
        %v1047 = vrot.slane %v1039, %v1046
        %v1049 = vunpack.c.l.s4 1934713408
        %v1050 = vunpack.c.0.s8 %v1049
        %v1051 = vlaneseq
        %v1052 = vshrl.u32 %v1051, 7
        %v1053 = vsub.s32 %v1050, %v1052
        %v1054 = vrot.slane %v1040, %v1053
        %v1055 = vcombine.low %v1022, %v1038
        %v1056 = vcombine.high %v1022, %v1038
        %v1058 = vunpack.c.l.s4 1934713408
        %v1059 = vunpack.c.0.s8 %v1058
        %v1060 = vlaneseq
        %v1061 = vshrl.u32 %v1060, 7
        %v1062 = vsub.s32 %v1059, %v1061
        %v1063 = vrot.slane %v1055, %v1062
        %v1065 = vunpack.c.l.s4 1934713408
        %v1066 = vunpack.c.0.s8 %v1065
        %v1067 = vlaneseq
        %v1068 = vshrl.u32 %v1067, 7
        %v1069 = vsub.s32 %v1066, %v1068
        %v1070 = vrot.slane %v1056, %v1069
        %v1071 = vcombine.high %v1047, 0.0
        %v1072 = vcombine.high %v1054, 0.0
        %v1073 = vcombine.high %v1063, 0.0
        %v1074 = vcombine.high %v1070, 0.0
        %v1075 = vcombine.low %v410, %v566
        %v1076 = vcombine.high %v410, %v566
        %v1078 = vunpack.c.l.s4 1983009808
        %v1079 = vunpack.c.0.s8 %v1078
        %v1080 = vlaneseq
        %v1081 = vshrl.u32 %v1080, 7
        %v1082 = vsub.s32 %v1079, %v1081
        %v1083 = vrot.slane %v1075, %v1082
        %v1085 = vunpack.c.l.s4 1983009808
        %v1086 = vunpack.c.0.s8 %v1085
        %v1087 = vlaneseq
        %v1088 = vshrl.u32 %v1087, 7
        %v1089 = vsub.s32 %v1086, %v1088
        %v1090 = vrot.slane %v1076, %v1089
        %v1091 = vcombine.low %v542, %v590
        %v1092 = vcombine.high %v542, %v590
        %v1094 = vunpack.c.l.s4 1983009808
        %v1095 = vunpack.c.0.s8 %v1094
        %v1096 = vlaneseq
        %v1097 = vshrl.u32 %v1096, 7
        %v1098 = vsub.s32 %v1095, %v1097
        %v1099 = vrot.slane %v1091, %v1098
        %v1101 = vunpack.c.l.s4 1983009808
        %v1102 = vunpack.c.0.s8 %v1101
        %v1103 = vlaneseq
        %v1104 = vshrl.u32 %v1103, 7
        %v1105 = vsub.s32 %v1102, %v1104
        %v1106 = vrot.slane %v1092, %v1105
        %v1107 = vcombine.low %v1083, %v1099
        %v1108 = vcombine.high %v1083, %v1099
        %v1110 = vunpack.c.l.s4 1934713408
        %v1111 = vunpack.c.0.s8 %v1110
        %v1112 = vlaneseq
        %v1113 = vshrl.u32 %v1112, 7
        %v1114 = vsub.s32 %v1111, %v1113
        %v1115 = vrot.slane %v1107, %v1114
        %v1117 = vunpack.c.l.s4 1934713408
        %v1118 = vunpack.c.0.s8 %v1117
        %v1119 = vlaneseq
        %v1120 = vshrl.u32 %v1119, 7
        %v1121 = vsub.s32 %v1118, %v1120
        %v1122 = vrot.slane %v1108, %v1121
        %v1123 = vcombine.low %v1090, %v1106
        %v1124 = vcombine.high %v1090, %v1106
        %v1126 = vunpack.c.l.s4 1934713408
        %v1127 = vunpack.c.0.s8 %v1126
        %v1128 = vlaneseq
        %v1129 = vshrl.u32 %v1128, 7
        %v1130 = vsub.s32 %v1127, %v1129
        %v1131 = vrot.slane %v1123, %v1130
        %v1133 = vunpack.c.l.s4 1934713408
        %v1134 = vunpack.c.0.s8 %v1133
        %v1135 = vlaneseq
        %v1136 = vshrl.u32 %v1135, 7
        %v1137 = vsub.s32 %v1134, %v1136
        %v1138 = vrot.slane %v1124, %v1137
        %v1139 = vcombine.high %v1115, 0.0
        %v1140 = vcombine.high %v1122, 0.0
        %v1141 = vcombine.high %v1131, 0.0
        %v1142 = vcombine.high %v1138, 0.0
        %v1143 = vcombine.low %v639, %v646
        %v1145 = vunpack.c.l.s4 1983009808
        %v1146 = vunpack.c.0.s8 %v1145
        %v1147 = vlaneseq
        %v1148 = vshrl.u32 %v1147, 7
        %v1149 = vsub.s32 %v1146, %v1148
        %v1150 = vrot.slane %v1143, %v1149
        %v1151 = vcombine.low %v663, %v664
        %v1153 = vunpack.c.l.s4 1983009808
        %v1154 = vunpack.c.0.s8 %v1153
        %v1155 = vlaneseq
        %v1156 = vshrl.u32 %v1155, 7
        %v1157 = vsub.s32 %v1154, %v1156
        %v1158 = vrot.slane %v1151, %v1157
        %v1159 = vcombine.low %v655, %v662
        %v1161 = vunpack.c.l.s4 1983009808
        %v1162 = vunpack.c.0.s8 %v1161
        %v1163 = vlaneseq
        %v1164 = vshrl.u32 %v1163, 7
        %v1165 = vsub.s32 %v1162, %v1164
        %v1166 = vrot.slane %v1159, %v1165
        %v1167 = vcombine.low %v665, %v666
        %v1169 = vunpack.c.l.s4 1983009808
        %v1170 = vunpack.c.0.s8 %v1169
        %v1171 = vlaneseq
        %v1172 = vshrl.u32 %v1171, 7
        %v1173 = vsub.s32 %v1170, %v1172
        %v1174 = vrot.slane %v1167, %v1173
        %v1175 = vcombine.low %v1150, %v1158
        %v1176 = vcombine.high %v1150, %v1158
        %v1178 = vunpack.c.l.s4 1934713408
        %v1179 = vunpack.c.0.s8 %v1178
        %v1180 = vlaneseq
        %v1181 = vshrl.u32 %v1180, 7
        %v1182 = vsub.s32 %v1179, %v1181
        %v1183 = vrot.slane %v1175, %v1182
        %v1185 = vunpack.c.l.s4 1934713408
        %v1186 = vunpack.c.0.s8 %v1185
        %v1187 = vlaneseq
        %v1188 = vshrl.u32 %v1187, 7
        %v1189 = vsub.s32 %v1186, %v1188
        %v1190 = vrot.slane %v1176, %v1189
        %v1191 = vcombine.low %v1166, %v1174
        %v1192 = vcombine.high %v1166, %v1174
        %v1194 = vunpack.c.l.s4 1934713408
        %v1195 = vunpack.c.0.s8 %v1194
        %v1196 = vlaneseq
        %v1197 = vshrl.u32 %v1196, 7
        %v1198 = vsub.s32 %v1195, %v1197
        %v1199 = vrot.slane %v1191, %v1198
        %v1201 = vunpack.c.l.s4 1934713408
        %v1202 = vunpack.c.0.s8 %v1201
        %v1203 = vlaneseq
        %v1204 = vshrl.u32 %v1203, 7
        %v1205 = vsub.s32 %v1202, %v1204
        %v1206 = vrot.slane %v1192, %v1205
        %v1207 = vcombine.low %v1183, %v1199
        %v1208 = vcombine.high %v1183, %v1199
        %v1209 = vcombine.low %v1190, %v1206
        %v1210 = vcombine.high %v1190, %v1206
        %v1211 = vcombine.low %v707, %v714
        %v1213 = vunpack.c.l.s4 1983009808
        %v1214 = vunpack.c.0.s8 %v1213
        %v1215 = vlaneseq
        %v1216 = vshrl.u32 %v1215, 7
        %v1217 = vsub.s32 %v1214, %v1216
        %v1218 = vrot.slane %v1211, %v1217
        %v1219 = vcombine.low %v731, %v732
        %v1221 = vunpack.c.l.s4 1983009808
        %v1222 = vunpack.c.0.s8 %v1221
        %v1223 = vlaneseq
        %v1224 = vshrl.u32 %v1223, 7
        %v1225 = vsub.s32 %v1222, %v1224
        %v1226 = vrot.slane %v1219, %v1225
        %v1227 = vcombine.low %v723, %v730
        %v1229 = vunpack.c.l.s4 1983009808
        %v1230 = vunpack.c.0.s8 %v1229
        %v1231 = vlaneseq
        %v1232 = vshrl.u32 %v1231, 7
        %v1233 = vsub.s32 %v1230, %v1232
        %v1234 = vrot.slane %v1227, %v1233
        %v1235 = vcombine.low %v733, %v734
        %v1237 = vunpack.c.l.s4 1983009808
        %v1238 = vunpack.c.0.s8 %v1237
        %v1239 = vlaneseq
        %v1240 = vshrl.u32 %v1239, 7
        %v1241 = vsub.s32 %v1238, %v1240
        %v1242 = vrot.slane %v1235, %v1241
        %v1243 = vcombine.low %v1218, %v1226
        %v1244 = vcombine.high %v1218, %v1226
        %v1246 = vunpack.c.l.s4 1934713408
        %v1247 = vunpack.c.0.s8 %v1246
        %v1248 = vlaneseq
        %v1249 = vshrl.u32 %v1248, 7
        %v1250 = vsub.s32 %v1247, %v1249
        %v1251 = vrot.slane %v1243, %v1250
        %v1253 = vunpack.c.l.s4 1934713408
        %v1254 = vunpack.c.0.s8 %v1253
        %v1255 = vlaneseq
        %v1256 = vshrl.u32 %v1255, 7
        %v1257 = vsub.s32 %v1254, %v1256
        %v1258 = vrot.slane %v1244, %v1257
        %v1259 = vcombine.low %v1234, %v1242
        %v1260 = vcombine.high %v1234, %v1242
        %v1262 = vunpack.c.l.s4 1934713408
        %v1263 = vunpack.c.0.s8 %v1262
        %v1264 = vlaneseq
        %v1265 = vshrl.u32 %v1264, 7
        %v1266 = vsub.s32 %v1263, %v1265
        %v1267 = vrot.slane %v1259, %v1266
        %v1269 = vunpack.c.l.s4 1934713408
        %v1270 = vunpack.c.0.s8 %v1269
        %v1271 = vlaneseq
        %v1272 = vshrl.u32 %v1271, 7
        %v1273 = vsub.s32 %v1270, %v1272
        %v1274 = vrot.slane %v1260, %v1273
        %v1275 = vcombine.low %v1251, %v1267
        %v1276 = vcombine.high %v1251, %v1267
        %v1277 = vcombine.low %v1258, %v1274
        %v1278 = vcombine.high %v1258, %v1274
        %v1279 = vcombine.low %v775, %v782
        %v1281 = vunpack.c.l.s4 1983009808
        %v1282 = vunpack.c.0.s8 %v1281
        %v1283 = vlaneseq
        %v1284 = vshrl.u32 %v1283, 7
        %v1285 = vsub.s32 %v1282, %v1284
        %v1286 = vrot.slane %v1279, %v1285
        %v1287 = vcombine.low %v799, %v800
        %v1289 = vunpack.c.l.s4 1983009808
        %v1290 = vunpack.c.0.s8 %v1289
        %v1291 = vlaneseq
        %v1292 = vshrl.u32 %v1291, 7
        %v1293 = vsub.s32 %v1290, %v1292
        %v1294 = vrot.slane %v1287, %v1293
        %v1295 = vcombine.low %v791, %v798
        %v1297 = vunpack.c.l.s4 1983009808
        %v1298 = vunpack.c.0.s8 %v1297
        %v1299 = vlaneseq
        %v1300 = vshrl.u32 %v1299, 7
        %v1301 = vsub.s32 %v1298, %v1300
        %v1302 = vrot.slane %v1295, %v1301
        %v1303 = vcombine.low %v801, %v802
        %v1305 = vunpack.c.l.s4 1983009808
        %v1306 = vunpack.c.0.s8 %v1305
        %v1307 = vlaneseq
        %v1308 = vshrl.u32 %v1307, 7
        %v1309 = vsub.s32 %v1306, %v1308
        %v1310 = vrot.slane %v1303, %v1309
        %v1311 = vcombine.low %v1286, %v1294
        %v1312 = vcombine.high %v1286, %v1294
        %v1314 = vunpack.c.l.s4 1934713408
        %v1315 = vunpack.c.0.s8 %v1314
        %v1316 = vlaneseq
        %v1317 = vshrl.u32 %v1316, 7
        %v1318 = vsub.s32 %v1315, %v1317
        %v1319 = vrot.slane %v1311, %v1318
        %v1321 = vunpack.c.l.s4 1934713408
        %v1322 = vunpack.c.0.s8 %v1321
        %v1323 = vlaneseq
        %v1324 = vshrl.u32 %v1323, 7
        %v1325 = vsub.s32 %v1322, %v1324
        %v1326 = vrot.slane %v1312, %v1325
        %v1327 = vcombine.low %v1302, %v1310
        %v1328 = vcombine.high %v1302, %v1310
        %v1330 = vunpack.c.l.s4 1934713408
        %v1331 = vunpack.c.0.s8 %v1330
        %v1332 = vlaneseq
        %v1333 = vshrl.u32 %v1332, 7
        %v1334 = vsub.s32 %v1331, %v1333
        %v1335 = vrot.slane %v1327, %v1334
        %v1337 = vunpack.c.l.s4 1934713408
        %v1338 = vunpack.c.0.s8 %v1337
        %v1339 = vlaneseq
        %v1340 = vshrl.u32 %v1339, 7
        %v1341 = vsub.s32 %v1338, %v1340
        %v1342 = vrot.slane %v1328, %v1341
        %v1343 = vcombine.low %v1319, %v1335
        %v1344 = vcombine.high %v1319, %v1335
        %v1345 = vcombine.low %v1326, %v1342
        %v1346 = vcombine.high %v1326, %v1342
        %v1347 = vcombine.low %v843, %v850
        %v1349 = vunpack.c.l.s4 1983009808
        %v1350 = vunpack.c.0.s8 %v1349
        %v1351 = vlaneseq
        %v1352 = vshrl.u32 %v1351, 7
        %v1353 = vsub.s32 %v1350, %v1352
        %v1354 = vrot.slane %v1347, %v1353
        %v1355 = vcombine.low %v867, %v868
        %v1357 = vunpack.c.l.s4 1983009808
        %v1358 = vunpack.c.0.s8 %v1357
        %v1359 = vlaneseq
        %v1360 = vshrl.u32 %v1359, 7
        %v1361 = vsub.s32 %v1358, %v1360
        %v1362 = vrot.slane %v1355, %v1361
        %v1363 = vcombine.low %v859, %v866
        %v1365 = vunpack.c.l.s4 1983009808
        %v1366 = vunpack.c.0.s8 %v1365
        %v1367 = vlaneseq
        %v1368 = vshrl.u32 %v1367, 7
        %v1369 = vsub.s32 %v1366, %v1368
        %v1370 = vrot.slane %v1363, %v1369
        %v1371 = vcombine.low %v869, %v870
        %v1373 = vunpack.c.l.s4 1983009808
        %v1374 = vunpack.c.0.s8 %v1373
        %v1375 = vlaneseq
        %v1376 = vshrl.u32 %v1375, 7
        %v1377 = vsub.s32 %v1374, %v1376
        %v1378 = vrot.slane %v1371, %v1377
        %v1379 = vcombine.low %v1354, %v1362
        %v1380 = vcombine.high %v1354, %v1362
        %v1382 = vunpack.c.l.s4 1934713408
        %v1383 = vunpack.c.0.s8 %v1382
        %v1384 = vlaneseq
        %v1385 = vshrl.u32 %v1384, 7
        %v1386 = vsub.s32 %v1383, %v1385
        %v1387 = vrot.slane %v1379, %v1386
        %v1389 = vunpack.c.l.s4 1934713408
        %v1390 = vunpack.c.0.s8 %v1389
        %v1391 = vlaneseq
        %v1392 = vshrl.u32 %v1391, 7
        %v1393 = vsub.s32 %v1390, %v1392
        %v1394 = vrot.slane %v1380, %v1393
        %v1395 = vcombine.low %v1370, %v1378
        %v1396 = vcombine.high %v1370, %v1378
        %v1398 = vunpack.c.l.s4 1934713408
        %v1399 = vunpack.c.0.s8 %v1398
        %v1400 = vlaneseq
        %v1401 = vshrl.u32 %v1400, 7
        %v1402 = vsub.s32 %v1399, %v1401
        %v1403 = vrot.slane %v1395, %v1402
        %v1405 = vunpack.c.l.s4 1934713408
        %v1406 = vunpack.c.0.s8 %v1405
        %v1407 = vlaneseq
        %v1408 = vshrl.u32 %v1407, 7
        %v1409 = vsub.s32 %v1406, %v1408
        %v1410 = vrot.slane %v1396, %v1409
        %v1411 = vcombine.low %v1387, %v1403
        %v1412 = vcombine.high %v1387, %v1403
        %v1413 = vcombine.low %v1394, %v1410
        %v1414 = vcombine.high %v1394, %v1410
        %v1415 = vcombine.low %v911, %v918
        %v1417 = vunpack.c.l.s4 1983009808
        %v1418 = vunpack.c.0.s8 %v1417
        %v1419 = vlaneseq
        %v1420 = vshrl.u32 %v1419, 7
        %v1421 = vsub.s32 %v1418, %v1420
        %v1422 = vrot.slane %v1415, %v1421
        %v1423 = vcombine.low %v935, %v936
        %v1425 = vunpack.c.l.s4 1983009808
        %v1426 = vunpack.c.0.s8 %v1425
        %v1427 = vlaneseq
        %v1428 = vshrl.u32 %v1427, 7
        %v1429 = vsub.s32 %v1426, %v1428
        %v1430 = vrot.slane %v1423, %v1429
        %v1431 = vcombine.low %v927, %v934
        %v1433 = vunpack.c.l.s4 1983009808
        %v1434 = vunpack.c.0.s8 %v1433
        %v1435 = vlaneseq
        %v1436 = vshrl.u32 %v1435, 7
        %v1437 = vsub.s32 %v1434, %v1436
        %v1438 = vrot.slane %v1431, %v1437
        %v1439 = vcombine.low %v937, %v938
        %v1441 = vunpack.c.l.s4 1983009808
        %v1442 = vunpack.c.0.s8 %v1441
        %v1443 = vlaneseq
        %v1444 = vshrl.u32 %v1443, 7
        %v1445 = vsub.s32 %v1442, %v1444
        %v1446 = vrot.slane %v1439, %v1445
        %v1447 = vcombine.low %v1422, %v1430
        %v1448 = vcombine.high %v1422, %v1430
        %v1450 = vunpack.c.l.s4 1934713408
        %v1451 = vunpack.c.0.s8 %v1450
        %v1452 = vlaneseq
        %v1453 = vshrl.u32 %v1452, 7
        %v1454 = vsub.s32 %v1451, %v1453
        %v1455 = vrot.slane %v1447, %v1454
        %v1457 = vunpack.c.l.s4 1934713408
        %v1458 = vunpack.c.0.s8 %v1457
        %v1459 = vlaneseq
        %v1460 = vshrl.u32 %v1459, 7
        %v1461 = vsub.s32 %v1458, %v1460
        %v1462 = vrot.slane %v1448, %v1461
        %v1463 = vcombine.low %v1438, %v1446
        %v1464 = vcombine.high %v1438, %v1446
        %v1466 = vunpack.c.l.s4 1934713408
        %v1467 = vunpack.c.0.s8 %v1466
        %v1468 = vlaneseq
        %v1469 = vshrl.u32 %v1468, 7
        %v1470 = vsub.s32 %v1467, %v1469
        %v1471 = vrot.slane %v1463, %v1470
        %v1473 = vunpack.c.l.s4 1934713408
        %v1474 = vunpack.c.0.s8 %v1473
        %v1475 = vlaneseq
        %v1476 = vshrl.u32 %v1475, 7
        %v1477 = vsub.s32 %v1474, %v1476
        %v1478 = vrot.slane %v1464, %v1477
        %v1479 = vcombine.low %v1455, %v1471
        %v1480 = vcombine.high %v1455, %v1471
        %v1481 = vcombine.low %v1462, %v1478
        %v1482 = vcombine.high %v1462, %v1478
        %v1483 = vcombine.low %v979, %v986
        %v1485 = vunpack.c.l.s4 1983009808
        %v1486 = vunpack.c.0.s8 %v1485
        %v1487 = vlaneseq
        %v1488 = vshrl.u32 %v1487, 7
        %v1489 = vsub.s32 %v1486, %v1488
        %v1490 = vrot.slane %v1483, %v1489
        %v1491 = vcombine.low %v1003, %v1004
        %v1493 = vunpack.c.l.s4 1983009808
        %v1494 = vunpack.c.0.s8 %v1493
        %v1495 = vlaneseq
        %v1496 = vshrl.u32 %v1495, 7
        %v1497 = vsub.s32 %v1494, %v1496
        %v1498 = vrot.slane %v1491, %v1497
        %v1499 = vcombine.low %v995, %v1002
        %v1501 = vunpack.c.l.s4 1983009808
        %v1502 = vunpack.c.0.s8 %v1501
        %v1503 = vlaneseq
        %v1504 = vshrl.u32 %v1503, 7
        %v1505 = vsub.s32 %v1502, %v1504
        %v1506 = vrot.slane %v1499, %v1505
        %v1507 = vcombine.low %v1005, %v1006
        %v1509 = vunpack.c.l.s4 1983009808
        %v1510 = vunpack.c.0.s8 %v1509
        %v1511 = vlaneseq
        %v1512 = vshrl.u32 %v1511, 7
        %v1513 = vsub.s32 %v1510, %v1512
        %v1514 = vrot.slane %v1507, %v1513
        %v1515 = vcombine.low %v1490, %v1498
        %v1516 = vcombine.high %v1490, %v1498
        %v1518 = vunpack.c.l.s4 1934713408
        %v1519 = vunpack.c.0.s8 %v1518
        %v1520 = vlaneseq
        %v1521 = vshrl.u32 %v1520, 7
        %v1522 = vsub.s32 %v1519, %v1521
        %v1523 = vrot.slane %v1515, %v1522
        %v1525 = vunpack.c.l.s4 1934713408
        %v1526 = vunpack.c.0.s8 %v1525
        %v1527 = vlaneseq
        %v1528 = vshrl.u32 %v1527, 7
        %v1529 = vsub.s32 %v1526, %v1528
        %v1530 = vrot.slane %v1516, %v1529
        %v1531 = vcombine.low %v1506, %v1514
        %v1532 = vcombine.high %v1506, %v1514
        %v1534 = vunpack.c.l.s4 1934713408
        %v1535 = vunpack.c.0.s8 %v1534
        %v1536 = vlaneseq
        %v1537 = vshrl.u32 %v1536, 7
        %v1538 = vsub.s32 %v1535, %v1537
        %v1539 = vrot.slane %v1531, %v1538
        %v1541 = vunpack.c.l.s4 1934713408
        %v1542 = vunpack.c.0.s8 %v1541
        %v1543 = vlaneseq
        %v1544 = vshrl.u32 %v1543, 7
        %v1545 = vsub.s32 %v1542, %v1544
        %v1546 = vrot.slane %v1532, %v1545
        %v1547 = vcombine.low %v1523, %v1539
        %v1548 = vcombine.high %v1523, %v1539
        %v1549 = vcombine.low %v1530, %v1546
        %v1550 = vcombine.high %v1530, %v1546
        %v1551 = vcombine.low %v1047, %v1054
        %v1553 = vunpack.c.l.s4 1983009808
        %v1554 = vunpack.c.0.s8 %v1553
        %v1555 = vlaneseq
        %v1556 = vshrl.u32 %v1555, 7
        %v1557 = vsub.s32 %v1554, %v1556
        %v1558 = vrot.slane %v1551, %v1557
        %v1559 = vcombine.low %v1071, %v1072
        %v1561 = vunpack.c.l.s4 1983009808
        %v1562 = vunpack.c.0.s8 %v1561
        %v1563 = vlaneseq
        %v1564 = vshrl.u32 %v1563, 7
        %v1565 = vsub.s32 %v1562, %v1564
        %v1566 = vrot.slane %v1559, %v1565
        %v1567 = vcombine.low %v1063, %v1070
        %v1569 = vunpack.c.l.s4 1983009808
        %v1570 = vunpack.c.0.s8 %v1569
        %v1571 = vlaneseq
        %v1572 = vshrl.u32 %v1571, 7
        %v1573 = vsub.s32 %v1570, %v1572
        %v1574 = vrot.slane %v1567, %v1573
        %v1575 = vcombine.low %v1073, %v1074
        %v1577 = vunpack.c.l.s4 1983009808
        %v1578 = vunpack.c.0.s8 %v1577
        %v1579 = vlaneseq
        %v1580 = vshrl.u32 %v1579, 7
        %v1581 = vsub.s32 %v1578, %v1580
        %v1582 = vrot.slane %v1575, %v1581
        %v1583 = vcombine.low %v1558, %v1566
        %v1584 = vcombine.high %v1558, %v1566
        %v1586 = vunpack.c.l.s4 1934713408
        %v1587 = vunpack.c.0.s8 %v1586
        %v1588 = vlaneseq
        %v1589 = vshrl.u32 %v1588, 7
        %v1590 = vsub.s32 %v1587, %v1589
        %v1591 = vrot.slane %v1583, %v1590
        %v1593 = vunpack.c.l.s4 1934713408
        %v1594 = vunpack.c.0.s8 %v1593
        %v1595 = vlaneseq
        %v1596 = vshrl.u32 %v1595, 7
        %v1597 = vsub.s32 %v1594, %v1596
        %v1598 = vrot.slane %v1584, %v1597
        %v1599 = vcombine.low %v1574, %v1582
        %v1600 = vcombine.high %v1574, %v1582
        %v1602 = vunpack.c.l.s4 1934713408
        %v1603 = vunpack.c.0.s8 %v1602
        %v1604 = vlaneseq
        %v1605 = vshrl.u32 %v1604, 7
        %v1606 = vsub.s32 %v1603, %v1605
        %v1607 = vrot.slane %v1599, %v1606
        %v1609 = vunpack.c.l.s4 1934713408
        %v1610 = vunpack.c.0.s8 %v1609
        %v1611 = vlaneseq
        %v1612 = vshrl.u32 %v1611, 7
        %v1613 = vsub.s32 %v1610, %v1612
        %v1614 = vrot.slane %v1600, %v1613
        %v1615 = vcombine.low %v1591, %v1607
        %v1616 = vcombine.high %v1591, %v1607
        %v1617 = vcombine.low %v1598, %v1614
        %v1618 = vcombine.high %v1598, %v1614
        %v1619 = vcombine.low %v1115, %v1122
        %v1621 = vunpack.c.l.s4 1983009808
        %v1622 = vunpack.c.0.s8 %v1621
        %v1623 = vlaneseq
        %v1624 = vshrl.u32 %v1623, 7
        %v1625 = vsub.s32 %v1622, %v1624
        %v1626 = vrot.slane %v1619, %v1625
        %v1627 = vcombine.low %v1139, %v1140
        %v1629 = vunpack.c.l.s4 1983009808
        %v1630 = vunpack.c.0.s8 %v1629
        %v1631 = vlaneseq
        %v1632 = vshrl.u32 %v1631, 7
        %v1633 = vsub.s32 %v1630, %v1632
        %v1634 = vrot.slane %v1627, %v1633
        %v1635 = vcombine.low %v1131, %v1138
        %v1637 = vunpack.c.l.s4 1983009808
        %v1638 = vunpack.c.0.s8 %v1637
        %v1639 = vlaneseq
        %v1640 = vshrl.u32 %v1639, 7
        %v1641 = vsub.s32 %v1638, %v1640
        %v1642 = vrot.slane %v1635, %v1641
        %v1643 = vcombine.low %v1141, %v1142
        %v1645 = vunpack.c.l.s4 1983009808
        %v1646 = vunpack.c.0.s8 %v1645
        %v1647 = vlaneseq
        %v1648 = vshrl.u32 %v1647, 7
        %v1649 = vsub.s32 %v1646, %v1648
        %v1650 = vrot.slane %v1643, %v1649
        %v1651 = vcombine.low %v1626, %v1634
        %v1652 = vcombine.high %v1626, %v1634
        %v1654 = vunpack.c.l.s4 1934713408
        %v1655 = vunpack.c.0.s8 %v1654
        %v1656 = vlaneseq
        %v1657 = vshrl.u32 %v1656, 7
        %v1658 = vsub.s32 %v1655, %v1657
        %v1659 = vrot.slane %v1651, %v1658
        %v1661 = vunpack.c.l.s4 1934713408
        %v1662 = vunpack.c.0.s8 %v1661
        %v1663 = vlaneseq
        %v1664 = vshrl.u32 %v1663, 7
        %v1665 = vsub.s32 %v1662, %v1664
        %v1666 = vrot.slane %v1652, %v1665
        %v1667 = vcombine.low %v1642, %v1650
        %v1668 = vcombine.high %v1642, %v1650
        %v1670 = vunpack.c.l.s4 1934713408
        %v1671 = vunpack.c.0.s8 %v1670
        %v1672 = vlaneseq
        %v1673 = vshrl.u32 %v1672, 7
        %v1674 = vsub.s32 %v1671, %v1673
        %v1675 = vrot.slane %v1667, %v1674
        %v1677 = vunpack.c.l.s4 1934713408
        %v1678 = vunpack.c.0.s8 %v1677
        %v1679 = vlaneseq
        %v1680 = vshrl.u32 %v1679, 7
        %v1681 = vsub.s32 %v1678, %v1680
        %v1682 = vrot.slane %v1668, %v1681
        %v1683 = vcombine.low %v1659, %v1675
        %v1684 = vcombine.high %v1659, %v1675
        %v1685 = vcombine.low %v1666, %v1682
        %v1686 = vcombine.high %v1666, %v1682
        %v1687 = vmul.f32 %v1207, 0.17677669
        %v1688 = vmul.f32 %v1275, 0.17677669
        %v1689 = vmul.f32 %v1343, 0.17677669
        %v1690 = vmul.f32 %v1411, 0.17677669
        %v1691 = vmul.f32 %v1479, 0.17677669
        %v1692 = vmul.f32 %v1547, 0.17677669
        %v1693 = vmul.f32 %v1615, 0.17677669
        %v1694 = vmul.f32 %v1683, 0.17677669
        %v1695 = vmul.f32 %v1208, 0.17677669
        %v1696 = vmul.f32 %v1276, 0.17677669
        %v1697 = vmul.f32 %v1344, 0.17677669
        %v1698 = vmul.f32 %v1412, 0.17677669
        %v1699 = vmul.f32 %v1480, 0.17677669
        %v1700 = vmul.f32 %v1548, 0.17677669
        %v1701 = vmul.f32 %v1616, 0.17677669
        %v1702 = vmul.f32 %v1684, 0.17677669
        %v1703 = vmul.f32 %v1209, 0.17677669
        %v1704 = vmul.f32 %v1277, 0.17677669
        %v1705 = vmul.f32 %v1345, 0.17677669
        %v1706 = vmul.f32 %v1413, 0.17677669
        %v1707 = vmul.f32 %v1481, 0.17677669
        %v1708 = vmul.f32 %v1549, 0.17677669
        %v1709 = vmul.f32 %v1617, 0.17677669
        %v1710 = vmul.f32 %v1685, 0.17677669
        %v1711 = vmul.f32 %v1210, 0.17677669
        %v1712 = vmul.f32 %v1278, 0.17677669
        %v1713 = vmul.f32 %v1346, 0.17677669
        %v1714 = vmul.f32 %v1414, 0.17677669
        %v1715 = vmul.f32 %v1482, 0.17677669
        %v1716 = vmul.f32 %v1550, 0.17677669
        %v1717 = vmul.f32 %v1618, 0.17677669
        %v1718 = vmul.f32 %v1686, 0.17677669
        %1727 = vrot.lane.b32.xlu0 %v370, 96
        %v1728 = vpop.permute.xlu0 %1727
        %1729 = vrot.lane.b32.xlu0 %v376, 96
        %v1730 = vpop.permute.xlu0 %1729
        %1731 = vrot.lane.b32.xlu0 %v382, 96
        %v1732 = vpop.permute.xlu0 %1731
        %1733 = vrot.lane.b32.xlu0 %v388, 96
        %v1734 = vpop.permute.xlu0 %1733
        %1735 = vrot.lane.b32.xlu0 %v394, 96
        %v1736 = vpop.permute.xlu0 %1735
        %1737 = vrot.lane.b32.xlu0 %v400, 96
        %v1738 = vpop.permute.xlu0 %1737
        %1739 = vrot.lane.b32.xlu0 %v406, 96
        %v1740 = vpop.permute.xlu0 %1739
        %1741 = vrot.lane.b32.xlu0 %v412, 96
        %v1742 = vpop.permute.xlu0 %1741
        %1751 = vrot.lane.b32.xlu0 %v370, 64
        %v1752 = vpop.permute.xlu0 %1751
        %1753 = vrot.lane.b32.xlu0 %v376, 64
        %v1754 = vpop.permute.xlu0 %1753
        %1755 = vrot.lane.b32.xlu0 %v382, 64
        %v1756 = vpop.permute.xlu0 %1755
        %1757 = vrot.lane.b32.xlu0 %v388, 64
        %v1758 = vpop.permute.xlu0 %1757
        %1759 = vrot.lane.b32.xlu0 %v394, 64
        %v1760 = vpop.permute.xlu0 %1759
        %1761 = vrot.lane.b32.xlu0 %v400, 64
        %v1762 = vpop.permute.xlu0 %1761
        %1763 = vrot.lane.b32.xlu0 %v406, 64
        %v1764 = vpop.permute.xlu0 %1763
        %1765 = vrot.lane.b32.xlu0 %v412, 64
        %v1766 = vpop.permute.xlu0 %1765
        %1775 = vrot.lane.b32.xlu0 %v370, 32
        %v1776 = vpop.permute.xlu0 %1775
        %1777 = vrot.lane.b32.xlu0 %v376, 32
        %v1778 = vpop.permute.xlu0 %1777
        %1779 = vrot.lane.b32.xlu0 %v382, 32
        %v1780 = vpop.permute.xlu0 %1779
        %1781 = vrot.lane.b32.xlu0 %v388, 32
        %v1782 = vpop.permute.xlu0 %1781
        %1783 = vrot.lane.b32.xlu0 %v394, 32
        %v1784 = vpop.permute.xlu0 %1783
        %1785 = vrot.lane.b32.xlu0 %v400, 32
        %v1786 = vpop.permute.xlu0 %1785
        %1787 = vrot.lane.b32.xlu0 %v406, 32
        %v1788 = vpop.permute.xlu0 %1787
        %1789 = vrot.lane.b32.xlu0 %v412, 32
        %v1790 = vpop.permute.xlu0 %1789
        %v1799 = vcombine.low %v370, %v1752
        %v1800 = vcombine.high %v370, %v1752
        %v1802 = vunpack.c.l.s4 1983009808
        %v1803 = vunpack.c.0.s8 %v1802
        %v1804 = vlaneseq
        %v1805 = vshrl.u32 %v1804, 7
        %v1806 = vsub.s32 %v1803, %v1805
        %v1807 = vrot.slane %v1799, %v1806
        %v1809 = vunpack.c.l.s4 1983009808
        %v1810 = vunpack.c.0.s8 %v1809
        %v1811 = vlaneseq
        %v1812 = vshrl.u32 %v1811, 7
        %v1813 = vsub.s32 %v1810, %v1812
        %v1814 = vrot.slane %v1800, %v1813
        %v1815 = vcombine.low %v1728, %v1776
        %v1816 = vcombine.high %v1728, %v1776
        %v1818 = vunpack.c.l.s4 1983009808
        %v1819 = vunpack.c.0.s8 %v1818
        %v1820 = vlaneseq
        %v1821 = vshrl.u32 %v1820, 7
        %v1822 = vsub.s32 %v1819, %v1821
        %v1823 = vrot.slane %v1815, %v1822
        %v1825 = vunpack.c.l.s4 1983009808
        %v1826 = vunpack.c.0.s8 %v1825
        %v1827 = vlaneseq
        %v1828 = vshrl.u32 %v1827, 7
        %v1829 = vsub.s32 %v1826, %v1828
        %v1830 = vrot.slane %v1816, %v1829
        %v1831 = vcombine.low %v1807, %v1823
        %v1832 = vcombine.high %v1807, %v1823
        %v1834 = vunpack.c.l.s4 1934713408
        %v1835 = vunpack.c.0.s8 %v1834
        %v1836 = vlaneseq
        %v1837 = vshrl.u32 %v1836, 7
        %v1838 = vsub.s32 %v1835, %v1837
        %v1839 = vrot.slane %v1831, %v1838
        %v1841 = vunpack.c.l.s4 1934713408
        %v1842 = vunpack.c.0.s8 %v1841
        %v1843 = vlaneseq
        %v1844 = vshrl.u32 %v1843, 7
        %v1845 = vsub.s32 %v1842, %v1844
        %v1846 = vrot.slane %v1832, %v1845
        %v1847 = vcombine.low %v1814, %v1830
        %v1848 = vcombine.high %v1814, %v1830
        %v1850 = vunpack.c.l.s4 1934713408
        %v1851 = vunpack.c.0.s8 %v1850
        %v1852 = vlaneseq
        %v1853 = vshrl.u32 %v1852, 7
        %v1854 = vsub.s32 %v1851, %v1853
        %v1855 = vrot.slane %v1847, %v1854
        %v1857 = vunpack.c.l.s4 1934713408
        %v1858 = vunpack.c.0.s8 %v1857
        %v1859 = vlaneseq
        %v1860 = vshrl.u32 %v1859, 7
        %v1861 = vsub.s32 %v1858, %v1860
        %v1862 = vrot.slane %v1848, %v1861
        %v1863 = vcombine.high %v1839, 0.0
        %v1864 = vcombine.high %v1846, 0.0
        %v1865 = vcombine.high %v1855, 0.0
        %v1866 = vcombine.high %v1862, 0.0
        %v1867 = vcombine.low %v376, %v1754
        %v1868 = vcombine.high %v376, %v1754
        %v1870 = vunpack.c.l.s4 1983009808
        %v1871 = vunpack.c.0.s8 %v1870
        %v1872 = vlaneseq
        %v1873 = vshrl.u32 %v1872, 7
        %v1874 = vsub.s32 %v1871, %v1873
        %v1875 = vrot.slane %v1867, %v1874
        %v1877 = vunpack.c.l.s4 1983009808
        %v1878 = vunpack.c.0.s8 %v1877
        %v1879 = vlaneseq
        %v1880 = vshrl.u32 %v1879, 7
        %v1881 = vsub.s32 %v1878, %v1880
        %v1882 = vrot.slane %v1868, %v1881
        %v1883 = vcombine.low %v1730, %v1778
        %v1884 = vcombine.high %v1730, %v1778
        %v1886 = vunpack.c.l.s4 1983009808
        %v1887 = vunpack.c.0.s8 %v1886
        %v1888 = vlaneseq
        %v1889 = vshrl.u32 %v1888, 7
        %v1890 = vsub.s32 %v1887, %v1889
        %v1891 = vrot.slane %v1883, %v1890
        %v1893 = vunpack.c.l.s4 1983009808
        %v1894 = vunpack.c.0.s8 %v1893
        %v1895 = vlaneseq
        %v1896 = vshrl.u32 %v1895, 7
        %v1897 = vsub.s32 %v1894, %v1896
        %v1898 = vrot.slane %v1884, %v1897
        %v1899 = vcombine.low %v1875, %v1891
        %v1900 = vcombine.high %v1875, %v1891
        %v1902 = vunpack.c.l.s4 1934713408
        %v1903 = vunpack.c.0.s8 %v1902
        %v1904 = vlaneseq
        %v1905 = vshrl.u32 %v1904, 7
        %v1906 = vsub.s32 %v1903, %v1905
        %v1907 = vrot.slane %v1899, %v1906
        %v1909 = vunpack.c.l.s4 1934713408
        %v1910 = vunpack.c.0.s8 %v1909
        %v1911 = vlaneseq
        %v1912 = vshrl.u32 %v1911, 7
        %v1913 = vsub.s32 %v1910, %v1912
        %v1914 = vrot.slane %v1900, %v1913
        %v1915 = vcombine.low %v1882, %v1898
        %v1916 = vcombine.high %v1882, %v1898
        %v1918 = vunpack.c.l.s4 1934713408
        %v1919 = vunpack.c.0.s8 %v1918
        %v1920 = vlaneseq
        %v1921 = vshrl.u32 %v1920, 7
        %v1922 = vsub.s32 %v1919, %v1921
        %v1923 = vrot.slane %v1915, %v1922
        %v1925 = vunpack.c.l.s4 1934713408
        %v1926 = vunpack.c.0.s8 %v1925
        %v1927 = vlaneseq
        %v1928 = vshrl.u32 %v1927, 7
        %v1929 = vsub.s32 %v1926, %v1928
        %v1930 = vrot.slane %v1916, %v1929
        %v1931 = vcombine.high %v1907, 0.0
        %v1932 = vcombine.high %v1914, 0.0
        %v1933 = vcombine.high %v1923, 0.0
        %v1934 = vcombine.high %v1930, 0.0
        %v1935 = vcombine.low %v382, %v1756
        %v1936 = vcombine.high %v382, %v1756
        %v1938 = vunpack.c.l.s4 1983009808
        %v1939 = vunpack.c.0.s8 %v1938
        %v1940 = vlaneseq
        %v1941 = vshrl.u32 %v1940, 7
        %v1942 = vsub.s32 %v1939, %v1941
        %v1943 = vrot.slane %v1935, %v1942
        %v1945 = vunpack.c.l.s4 1983009808
        %v1946 = vunpack.c.0.s8 %v1945
        %v1947 = vlaneseq
        %v1948 = vshrl.u32 %v1947, 7
        %v1949 = vsub.s32 %v1946, %v1948
        %v1950 = vrot.slane %v1936, %v1949
        %v1951 = vcombine.low %v1732, %v1780
        %v1952 = vcombine.high %v1732, %v1780
        %v1954 = vunpack.c.l.s4 1983009808
        %v1955 = vunpack.c.0.s8 %v1954
        %v1956 = vlaneseq
        %v1957 = vshrl.u32 %v1956, 7
        %v1958 = vsub.s32 %v1955, %v1957
        %v1959 = vrot.slane %v1951, %v1958
        %v1961 = vunpack.c.l.s4 1983009808
        %v1962 = vunpack.c.0.s8 %v1961
        %v1963 = vlaneseq
        %v1964 = vshrl.u32 %v1963, 7
        %v1965 = vsub.s32 %v1962, %v1964
        %v1966 = vrot.slane %v1952, %v1965
        %v1967 = vcombine.low %v1943, %v1959
        %v1968 = vcombine.high %v1943, %v1959
        %v1970 = vunpack.c.l.s4 1934713408
        %v1971 = vunpack.c.0.s8 %v1970
        %v1972 = vlaneseq
        %v1973 = vshrl.u32 %v1972, 7
        %v1974 = vsub.s32 %v1971, %v1973
        %v1975 = vrot.slane %v1967, %v1974
        %v1977 = vunpack.c.l.s4 1934713408
        %v1978 = vunpack.c.0.s8 %v1977
        %v1979 = vlaneseq
        %v1980 = vshrl.u32 %v1979, 7
        %v1981 = vsub.s32 %v1978, %v1980
        %v1982 = vrot.slane %v1968, %v1981
        %v1983 = vcombine.low %v1950, %v1966
        %v1984 = vcombine.high %v1950, %v1966
        %v1986 = vunpack.c.l.s4 1934713408
        %v1987 = vunpack.c.0.s8 %v1986
        %v1988 = vlaneseq
        %v1989 = vshrl.u32 %v1988, 7
        %v1990 = vsub.s32 %v1987, %v1989
        %v1991 = vrot.slane %v1983, %v1990
        %v1993 = vunpack.c.l.s4 1934713408
        %v1994 = vunpack.c.0.s8 %v1993
        %v1995 = vlaneseq
        %v1996 = vshrl.u32 %v1995, 7
        %v1997 = vsub.s32 %v1994, %v1996
        %v1998 = vrot.slane %v1984, %v1997
        %v1999 = vcombine.high %v1975, 0.0
        %v2000 = vcombine.high %v1982, 0.0
        %v2001 = vcombine.high %v1991, 0.0
        %v2002 = vcombine.high %v1998, 0.0
        %v2003 = vcombine.low %v388, %v1758
        %v2004 = vcombine.high %v388, %v1758
        %v2006 = vunpack.c.l.s4 1983009808
        %v2007 = vunpack.c.0.s8 %v2006
        %v2008 = vlaneseq
        %v2009 = vshrl.u32 %v2008, 7
        %v2010 = vsub.s32 %v2007, %v2009
        %v2011 = vrot.slane %v2003, %v2010
        %v2013 = vunpack.c.l.s4 1983009808
        %v2014 = vunpack.c.0.s8 %v2013
        %v2015 = vlaneseq
        %v2016 = vshrl.u32 %v2015, 7
        %v2017 = vsub.s32 %v2014, %v2016
        %v2018 = vrot.slane %v2004, %v2017
        %v2019 = vcombine.low %v1734, %v1782
        %v2020 = vcombine.high %v1734, %v1782
        %v2022 = vunpack.c.l.s4 1983009808
        %v2023 = vunpack.c.0.s8 %v2022
        %v2024 = vlaneseq
        %v2025 = vshrl.u32 %v2024, 7
        %v2026 = vsub.s32 %v2023, %v2025
        %v2027 = vrot.slane %v2019, %v2026
        %v2029 = vunpack.c.l.s4 1983009808
        %v2030 = vunpack.c.0.s8 %v2029
        %v2031 = vlaneseq
        %v2032 = vshrl.u32 %v2031, 7
        %v2033 = vsub.s32 %v2030, %v2032
        %v2034 = vrot.slane %v2020, %v2033
        %v2035 = vcombine.low %v2011, %v2027
        %v2036 = vcombine.high %v2011, %v2027
        %v2038 = vunpack.c.l.s4 1934713408
        %v2039 = vunpack.c.0.s8 %v2038
        %v2040 = vlaneseq
        %v2041 = vshrl.u32 %v2040, 7
        %v2042 = vsub.s32 %v2039, %v2041
        %v2043 = vrot.slane %v2035, %v2042
        %v2045 = vunpack.c.l.s4 1934713408
        %v2046 = vunpack.c.0.s8 %v2045
        %v2047 = vlaneseq
        %v2048 = vshrl.u32 %v2047, 7
        %v2049 = vsub.s32 %v2046, %v2048
        %v2050 = vrot.slane %v2036, %v2049
        %v2051 = vcombine.low %v2018, %v2034
        %v2052 = vcombine.high %v2018, %v2034
        %v2054 = vunpack.c.l.s4 1934713408
        %v2055 = vunpack.c.0.s8 %v2054
        %v2056 = vlaneseq
        %v2057 = vshrl.u32 %v2056, 7
        %v2058 = vsub.s32 %v2055, %v2057
        %v2059 = vrot.slane %v2051, %v2058
        %v2061 = vunpack.c.l.s4 1934713408
        %v2062 = vunpack.c.0.s8 %v2061
        %v2063 = vlaneseq
        %v2064 = vshrl.u32 %v2063, 7
        %v2065 = vsub.s32 %v2062, %v2064
        %v2066 = vrot.slane %v2052, %v2065
        %v2067 = vcombine.high %v2043, 0.0
        %v2068 = vcombine.high %v2050, 0.0
        %v2069 = vcombine.high %v2059, 0.0
        %v2070 = vcombine.high %v2066, 0.0
        %v2071 = vcombine.low %v394, %v1760
        %v2072 = vcombine.high %v394, %v1760
        %v2074 = vunpack.c.l.s4 1983009808
        %v2075 = vunpack.c.0.s8 %v2074
        %v2076 = vlaneseq
        %v2077 = vshrl.u32 %v2076, 7
        %v2078 = vsub.s32 %v2075, %v2077
        %v2079 = vrot.slane %v2071, %v2078
        %v2081 = vunpack.c.l.s4 1983009808
        %v2082 = vunpack.c.0.s8 %v2081
        %v2083 = vlaneseq
        %v2084 = vshrl.u32 %v2083, 7
        %v2085 = vsub.s32 %v2082, %v2084
        %v2086 = vrot.slane %v2072, %v2085
        %v2087 = vcombine.low %v1736, %v1784
        %v2088 = vcombine.high %v1736, %v1784
        %v2090 = vunpack.c.l.s4 1983009808
        %v2091 = vunpack.c.0.s8 %v2090
        %v2092 = vlaneseq
        %v2093 = vshrl.u32 %v2092, 7
        %v2094 = vsub.s32 %v2091, %v2093
        %v2095 = vrot.slane %v2087, %v2094
        %v2097 = vunpack.c.l.s4 1983009808
        %v2098 = vunpack.c.0.s8 %v2097
        %v2099 = vlaneseq
        %v2100 = vshrl.u32 %v2099, 7
        %v2101 = vsub.s32 %v2098, %v2100
        %v2102 = vrot.slane %v2088, %v2101
        %v2103 = vcombine.low %v2079, %v2095
        %v2104 = vcombine.high %v2079, %v2095
        %v2106 = vunpack.c.l.s4 1934713408
        %v2107 = vunpack.c.0.s8 %v2106
        %v2108 = vlaneseq
        %v2109 = vshrl.u32 %v2108, 7
        %v2110 = vsub.s32 %v2107, %v2109
        %v2111 = vrot.slane %v2103, %v2110
        %v2113 = vunpack.c.l.s4 1934713408
        %v2114 = vunpack.c.0.s8 %v2113
        %v2115 = vlaneseq
        %v2116 = vshrl.u32 %v2115, 7
        %v2117 = vsub.s32 %v2114, %v2116
        %v2118 = vrot.slane %v2104, %v2117
        %v2119 = vcombine.low %v2086, %v2102
        %v2120 = vcombine.high %v2086, %v2102
        %v2122 = vunpack.c.l.s4 1934713408
        %v2123 = vunpack.c.0.s8 %v2122
        %v2124 = vlaneseq
        %v2125 = vshrl.u32 %v2124, 7
        %v2126 = vsub.s32 %v2123, %v2125
        %v2127 = vrot.slane %v2119, %v2126
        %v2129 = vunpack.c.l.s4 1934713408
        %v2130 = vunpack.c.0.s8 %v2129
        %v2131 = vlaneseq
        %v2132 = vshrl.u32 %v2131, 7
        %v2133 = vsub.s32 %v2130, %v2132
        %v2134 = vrot.slane %v2120, %v2133
        %v2135 = vcombine.high %v2111, 0.0
        %v2136 = vcombine.high %v2118, 0.0
        %v2137 = vcombine.high %v2127, 0.0
        %v2138 = vcombine.high %v2134, 0.0
        %v2139 = vcombine.low %v400, %v1762
        %v2140 = vcombine.high %v400, %v1762
        %v2142 = vunpack.c.l.s4 1983009808
        %v2143 = vunpack.c.0.s8 %v2142
        %v2144 = vlaneseq
        %v2145 = vshrl.u32 %v2144, 7
        %v2146 = vsub.s32 %v2143, %v2145
        %v2147 = vrot.slane %v2139, %v2146
        %v2149 = vunpack.c.l.s4 1983009808
        %v2150 = vunpack.c.0.s8 %v2149
        %v2151 = vlaneseq
        %v2152 = vshrl.u32 %v2151, 7
        %v2153 = vsub.s32 %v2150, %v2152
        %v2154 = vrot.slane %v2140, %v2153
        %v2155 = vcombine.low %v1738, %v1786
        %v2156 = vcombine.high %v1738, %v1786
        %v2158 = vunpack.c.l.s4 1983009808
        %v2159 = vunpack.c.0.s8 %v2158
        %v2160 = vlaneseq
        %v2161 = vshrl.u32 %v2160, 7
        %v2162 = vsub.s32 %v2159, %v2161
        %v2163 = vrot.slane %v2155, %v2162
        %v2165 = vunpack.c.l.s4 1983009808
        %v2166 = vunpack.c.0.s8 %v2165
        %v2167 = vlaneseq
        %v2168 = vshrl.u32 %v2167, 7
        %v2169 = vsub.s32 %v2166, %v2168
        %v2170 = vrot.slane %v2156, %v2169
        %v2171 = vcombine.low %v2147, %v2163
        %v2172 = vcombine.high %v2147, %v2163
        %v2174 = vunpack.c.l.s4 1934713408
        %v2175 = vunpack.c.0.s8 %v2174
        %v2176 = vlaneseq
        %v2177 = vshrl.u32 %v2176, 7
        %v2178 = vsub.s32 %v2175, %v2177
        %v2179 = vrot.slane %v2171, %v2178
        %v2181 = vunpack.c.l.s4 1934713408
        %v2182 = vunpack.c.0.s8 %v2181
        %v2183 = vlaneseq
        %v2184 = vshrl.u32 %v2183, 7
        %v2185 = vsub.s32 %v2182, %v2184
        %v2186 = vrot.slane %v2172, %v2185
        %v2187 = vcombine.low %v2154, %v2170
        %v2188 = vcombine.high %v2154, %v2170
        %v2190 = vunpack.c.l.s4 1934713408
        %v2191 = vunpack.c.0.s8 %v2190
        %v2192 = vlaneseq
        %v2193 = vshrl.u32 %v2192, 7
        %v2194 = vsub.s32 %v2191, %v2193
        %v2195 = vrot.slane %v2187, %v2194
        %v2197 = vunpack.c.l.s4 1934713408
        %v2198 = vunpack.c.0.s8 %v2197
        %v2199 = vlaneseq
        %v2200 = vshrl.u32 %v2199, 7
        %v2201 = vsub.s32 %v2198, %v2200
        %v2202 = vrot.slane %v2188, %v2201
        %v2203 = vcombine.high %v2179, 0.0
        %v2204 = vcombine.high %v2186, 0.0
        %v2205 = vcombine.high %v2195, 0.0
        %v2206 = vcombine.high %v2202, 0.0
        %v2207 = vcombine.low %v406, %v1764
        %v2208 = vcombine.high %v406, %v1764
        %v2210 = vunpack.c.l.s4 1983009808
        %v2211 = vunpack.c.0.s8 %v2210
        %v2212 = vlaneseq
        %v2213 = vshrl.u32 %v2212, 7
        %v2214 = vsub.s32 %v2211, %v2213
        %v2215 = vrot.slane %v2207, %v2214
        %v2217 = vunpack.c.l.s4 1983009808
        %v2218 = vunpack.c.0.s8 %v2217
        %v2219 = vlaneseq
        %v2220 = vshrl.u32 %v2219, 7
        %v2221 = vsub.s32 %v2218, %v2220
        %v2222 = vrot.slane %v2208, %v2221
        %v2223 = vcombine.low %v1740, %v1788
        %v2224 = vcombine.high %v1740, %v1788
        %v2226 = vunpack.c.l.s4 1983009808
        %v2227 = vunpack.c.0.s8 %v2226
        %v2228 = vlaneseq
        %v2229 = vshrl.u32 %v2228, 7
        %v2230 = vsub.s32 %v2227, %v2229
        %v2231 = vrot.slane %v2223, %v2230
        %v2233 = vunpack.c.l.s4 1983009808
        %v2234 = vunpack.c.0.s8 %v2233
        %v2235 = vlaneseq
        %v2236 = vshrl.u32 %v2235, 7
        %v2237 = vsub.s32 %v2234, %v2236
        %v2238 = vrot.slane %v2224, %v2237
        %v2239 = vcombine.low %v2215, %v2231
        %v2240 = vcombine.high %v2215, %v2231
        %v2242 = vunpack.c.l.s4 1934713408
        %v2243 = vunpack.c.0.s8 %v2242
        %v2244 = vlaneseq
        %v2245 = vshrl.u32 %v2244, 7
        %v2246 = vsub.s32 %v2243, %v2245
        %v2247 = vrot.slane %v2239, %v2246
        %v2249 = vunpack.c.l.s4 1934713408
        %v2250 = vunpack.c.0.s8 %v2249
        %v2251 = vlaneseq
        %v2252 = vshrl.u32 %v2251, 7
        %v2253 = vsub.s32 %v2250, %v2252
        %v2254 = vrot.slane %v2240, %v2253
        %v2255 = vcombine.low %v2222, %v2238
        %v2256 = vcombine.high %v2222, %v2238
        %v2258 = vunpack.c.l.s4 1934713408
        %v2259 = vunpack.c.0.s8 %v2258
        %v2260 = vlaneseq
        %v2261 = vshrl.u32 %v2260, 7
        %v2262 = vsub.s32 %v2259, %v2261
        %v2263 = vrot.slane %v2255, %v2262
        %v2265 = vunpack.c.l.s4 1934713408
        %v2266 = vunpack.c.0.s8 %v2265
        %v2267 = vlaneseq
        %v2268 = vshrl.u32 %v2267, 7
        %v2269 = vsub.s32 %v2266, %v2268
        %v2270 = vrot.slane %v2256, %v2269
        %v2271 = vcombine.high %v2247, 0.0
        %v2272 = vcombine.high %v2254, 0.0
        %v2273 = vcombine.high %v2263, 0.0
        %v2274 = vcombine.high %v2270, 0.0
        %v2275 = vcombine.low %v412, %v1766
        %v2276 = vcombine.high %v412, %v1766
        %v2278 = vunpack.c.l.s4 1983009808
        %v2279 = vunpack.c.0.s8 %v2278
        %v2280 = vlaneseq
        %v2281 = vshrl.u32 %v2280, 7
        %v2282 = vsub.s32 %v2279, %v2281
        %v2283 = vrot.slane %v2275, %v2282
        %v2285 = vunpack.c.l.s4 1983009808
        %v2286 = vunpack.c.0.s8 %v2285
        %v2287 = vlaneseq
        %v2288 = vshrl.u32 %v2287, 7
        %v2289 = vsub.s32 %v2286, %v2288
        %v2290 = vrot.slane %v2276, %v2289
        %v2291 = vcombine.low %v1742, %v1790
        %v2292 = vcombine.high %v1742, %v1790
        %v2294 = vunpack.c.l.s4 1983009808
        %v2295 = vunpack.c.0.s8 %v2294
        %v2296 = vlaneseq
        %v2297 = vshrl.u32 %v2296, 7
        %v2298 = vsub.s32 %v2295, %v2297
        %v2299 = vrot.slane %v2291, %v2298
        %v2301 = vunpack.c.l.s4 1983009808
        %v2302 = vunpack.c.0.s8 %v2301
        %v2303 = vlaneseq
        %v2304 = vshrl.u32 %v2303, 7
        %v2305 = vsub.s32 %v2302, %v2304
        %v2306 = vrot.slane %v2292, %v2305
        %v2307 = vcombine.low %v2283, %v2299
        %v2308 = vcombine.high %v2283, %v2299
        %v2310 = vunpack.c.l.s4 1934713408
        %v2311 = vunpack.c.0.s8 %v2310
        %v2312 = vlaneseq
        %v2313 = vshrl.u32 %v2312, 7
        %v2314 = vsub.s32 %v2311, %v2313
        %v2315 = vrot.slane %v2307, %v2314
        %v2317 = vunpack.c.l.s4 1934713408
        %v2318 = vunpack.c.0.s8 %v2317
        %v2319 = vlaneseq
        %v2320 = vshrl.u32 %v2319, 7
        %v2321 = vsub.s32 %v2318, %v2320
        %v2322 = vrot.slane %v2308, %v2321
        %v2323 = vcombine.low %v2290, %v2306
        %v2324 = vcombine.high %v2290, %v2306
        %v2326 = vunpack.c.l.s4 1934713408
        %v2327 = vunpack.c.0.s8 %v2326
        %v2328 = vlaneseq
        %v2329 = vshrl.u32 %v2328, 7
        %v2330 = vsub.s32 %v2327, %v2329
        %v2331 = vrot.slane %v2323, %v2330
        %v2333 = vunpack.c.l.s4 1934713408
        %v2334 = vunpack.c.0.s8 %v2333
        %v2335 = vlaneseq
        %v2336 = vshrl.u32 %v2335, 7
        %v2337 = vsub.s32 %v2334, %v2336
        %v2338 = vrot.slane %v2324, %v2337
        %v2339 = vcombine.high %v2315, 0.0
        %v2340 = vcombine.high %v2322, 0.0
        %v2341 = vcombine.high %v2331, 0.0
        %v2342 = vcombine.high %v2338, 0.0
        %v2343 = vcombine.low %v1839, %v1846
        %v2345 = vunpack.c.l.s4 1983009808
        %v2346 = vunpack.c.0.s8 %v2345
        %v2347 = vlaneseq
        %v2348 = vshrl.u32 %v2347, 7
        %v2349 = vsub.s32 %v2346, %v2348
        %v2350 = vrot.slane %v2343, %v2349
        %v2351 = vcombine.low %v1863, %v1864
        %v2353 = vunpack.c.l.s4 1983009808
        %v2354 = vunpack.c.0.s8 %v2353
        %v2355 = vlaneseq
        %v2356 = vshrl.u32 %v2355, 7
        %v2357 = vsub.s32 %v2354, %v2356
        %v2358 = vrot.slane %v2351, %v2357
        %v2359 = vcombine.low %v1855, %v1862
        %v2361 = vunpack.c.l.s4 1983009808
        %v2362 = vunpack.c.0.s8 %v2361
        %v2363 = vlaneseq
        %v2364 = vshrl.u32 %v2363, 7
        %v2365 = vsub.s32 %v2362, %v2364
        %v2366 = vrot.slane %v2359, %v2365
        %v2367 = vcombine.low %v1865, %v1866
        %v2369 = vunpack.c.l.s4 1983009808
        %v2370 = vunpack.c.0.s8 %v2369
        %v2371 = vlaneseq
        %v2372 = vshrl.u32 %v2371, 7
        %v2373 = vsub.s32 %v2370, %v2372
        %v2374 = vrot.slane %v2367, %v2373
        %v2375 = vcombine.low %v2350, %v2358
        %v2376 = vcombine.high %v2350, %v2358
        %v2378 = vunpack.c.l.s4 1934713408
        %v2379 = vunpack.c.0.s8 %v2378
        %v2380 = vlaneseq
        %v2381 = vshrl.u32 %v2380, 7
        %v2382 = vsub.s32 %v2379, %v2381
        %v2383 = vrot.slane %v2375, %v2382
        %v2385 = vunpack.c.l.s4 1934713408
        %v2386 = vunpack.c.0.s8 %v2385
        %v2387 = vlaneseq
        %v2388 = vshrl.u32 %v2387, 7
        %v2389 = vsub.s32 %v2386, %v2388
        %v2390 = vrot.slane %v2376, %v2389
        %v2391 = vcombine.low %v2366, %v2374
        %v2392 = vcombine.high %v2366, %v2374
        %v2394 = vunpack.c.l.s4 1934713408
        %v2395 = vunpack.c.0.s8 %v2394
        %v2396 = vlaneseq
        %v2397 = vshrl.u32 %v2396, 7
        %v2398 = vsub.s32 %v2395, %v2397
        %v2399 = vrot.slane %v2391, %v2398
        %v2401 = vunpack.c.l.s4 1934713408
        %v2402 = vunpack.c.0.s8 %v2401
        %v2403 = vlaneseq
        %v2404 = vshrl.u32 %v2403, 7
        %v2405 = vsub.s32 %v2402, %v2404
        %v2406 = vrot.slane %v2392, %v2405
        %v2407 = vcombine.low %v2383, %v2399
        %v2408 = vcombine.high %v2383, %v2399
        %v2409 = vcombine.low %v2390, %v2406
        %v2410 = vcombine.high %v2390, %v2406
        %v2411 = vcombine.low %v1907, %v1914
        %v2413 = vunpack.c.l.s4 1983009808
        %v2414 = vunpack.c.0.s8 %v2413
        %v2415 = vlaneseq
        %v2416 = vshrl.u32 %v2415, 7
        %v2417 = vsub.s32 %v2414, %v2416
        %v2418 = vrot.slane %v2411, %v2417
        %v2419 = vcombine.low %v1931, %v1932
        %v2421 = vunpack.c.l.s4 1983009808
        %v2422 = vunpack.c.0.s8 %v2421
        %v2423 = vlaneseq
        %v2424 = vshrl.u32 %v2423, 7
        %v2425 = vsub.s32 %v2422, %v2424
        %v2426 = vrot.slane %v2419, %v2425
        %v2427 = vcombine.low %v1923, %v1930
        %v2429 = vunpack.c.l.s4 1983009808
        %v2430 = vunpack.c.0.s8 %v2429
        %v2431 = vlaneseq
        %v2432 = vshrl.u32 %v2431, 7
        %v2433 = vsub.s32 %v2430, %v2432
        %v2434 = vrot.slane %v2427, %v2433
        %v2435 = vcombine.low %v1933, %v1934
        %v2437 = vunpack.c.l.s4 1983009808
        %v2438 = vunpack.c.0.s8 %v2437
        %v2439 = vlaneseq
        %v2440 = vshrl.u32 %v2439, 7
        %v2441 = vsub.s32 %v2438, %v2440
        %v2442 = vrot.slane %v2435, %v2441
        %v2443 = vcombine.low %v2418, %v2426
        %v2444 = vcombine.high %v2418, %v2426
        %v2446 = vunpack.c.l.s4 1934713408
        %v2447 = vunpack.c.0.s8 %v2446
        %v2448 = vlaneseq
        %v2449 = vshrl.u32 %v2448, 7
        %v2450 = vsub.s32 %v2447, %v2449
        %v2451 = vrot.slane %v2443, %v2450
        %v2453 = vunpack.c.l.s4 1934713408
        %v2454 = vunpack.c.0.s8 %v2453
        %v2455 = vlaneseq
        %v2456 = vshrl.u32 %v2455, 7
        %v2457 = vsub.s32 %v2454, %v2456
        %v2458 = vrot.slane %v2444, %v2457
        %v2459 = vcombine.low %v2434, %v2442
        %v2460 = vcombine.high %v2434, %v2442
        %v2462 = vunpack.c.l.s4 1934713408
        %v2463 = vunpack.c.0.s8 %v2462
        %v2464 = vlaneseq
        %v2465 = vshrl.u32 %v2464, 7
        %v2466 = vsub.s32 %v2463, %v2465
        %v2467 = vrot.slane %v2459, %v2466
        %v2469 = vunpack.c.l.s4 1934713408
        %v2470 = vunpack.c.0.s8 %v2469
        %v2471 = vlaneseq
        %v2472 = vshrl.u32 %v2471, 7
        %v2473 = vsub.s32 %v2470, %v2472
        %v2474 = vrot.slane %v2460, %v2473
        %v2475 = vcombine.low %v2451, %v2467
        %v2476 = vcombine.high %v2451, %v2467
        %v2477 = vcombine.low %v2458, %v2474
        %v2478 = vcombine.high %v2458, %v2474
        %v2479 = vcombine.low %v1975, %v1982
        %v2481 = vunpack.c.l.s4 1983009808
        %v2482 = vunpack.c.0.s8 %v2481
        %v2483 = vlaneseq
        %v2484 = vshrl.u32 %v2483, 7
        %v2485 = vsub.s32 %v2482, %v2484
        %v2486 = vrot.slane %v2479, %v2485
        %v2487 = vcombine.low %v1999, %v2000
        %v2489 = vunpack.c.l.s4 1983009808
        %v2490 = vunpack.c.0.s8 %v2489
        %v2491 = vlaneseq
        %v2492 = vshrl.u32 %v2491, 7
        %v2493 = vsub.s32 %v2490, %v2492
        %v2494 = vrot.slane %v2487, %v2493
        %v2495 = vcombine.low %v1991, %v1998
        %v2497 = vunpack.c.l.s4 1983009808
        %v2498 = vunpack.c.0.s8 %v2497
        %v2499 = vlaneseq
        %v2500 = vshrl.u32 %v2499, 7
        %v2501 = vsub.s32 %v2498, %v2500
        %v2502 = vrot.slane %v2495, %v2501
        %v2503 = vcombine.low %v2001, %v2002
        %v2505 = vunpack.c.l.s4 1983009808
        %v2506 = vunpack.c.0.s8 %v2505
        %v2507 = vlaneseq
        %v2508 = vshrl.u32 %v2507, 7
        %v2509 = vsub.s32 %v2506, %v2508
        %v2510 = vrot.slane %v2503, %v2509
        %v2511 = vcombine.low %v2486, %v2494
        %v2512 = vcombine.high %v2486, %v2494
        %v2514 = vunpack.c.l.s4 1934713408
        %v2515 = vunpack.c.0.s8 %v2514
        %v2516 = vlaneseq
        %v2517 = vshrl.u32 %v2516, 7
        %v2518 = vsub.s32 %v2515, %v2517
        %v2519 = vrot.slane %v2511, %v2518
        %v2521 = vunpack.c.l.s4 1934713408
        %v2522 = vunpack.c.0.s8 %v2521
        %v2523 = vlaneseq
        %v2524 = vshrl.u32 %v2523, 7
        %v2525 = vsub.s32 %v2522, %v2524
        %v2526 = vrot.slane %v2512, %v2525
        %v2527 = vcombine.low %v2502, %v2510
        %v2528 = vcombine.high %v2502, %v2510
        %v2530 = vunpack.c.l.s4 1934713408
        %v2531 = vunpack.c.0.s8 %v2530
        %v2532 = vlaneseq
        %v2533 = vshrl.u32 %v2532, 7
        %v2534 = vsub.s32 %v2531, %v2533
        %v2535 = vrot.slane %v2527, %v2534
        %v2537 = vunpack.c.l.s4 1934713408
        %v2538 = vunpack.c.0.s8 %v2537
        %v2539 = vlaneseq
        %v2540 = vshrl.u32 %v2539, 7
        %v2541 = vsub.s32 %v2538, %v2540
        %v2542 = vrot.slane %v2528, %v2541
        %v2543 = vcombine.low %v2519, %v2535
        %v2544 = vcombine.high %v2519, %v2535
        %v2545 = vcombine.low %v2526, %v2542
        %v2546 = vcombine.high %v2526, %v2542
        %v2547 = vcombine.low %v2043, %v2050
        %v2549 = vunpack.c.l.s4 1983009808
        %v2550 = vunpack.c.0.s8 %v2549
        %v2551 = vlaneseq
        %v2552 = vshrl.u32 %v2551, 7
        %v2553 = vsub.s32 %v2550, %v2552
        %v2554 = vrot.slane %v2547, %v2553
        %v2555 = vcombine.low %v2067, %v2068
        %v2557 = vunpack.c.l.s4 1983009808
        %v2558 = vunpack.c.0.s8 %v2557
        %v2559 = vlaneseq
        %v2560 = vshrl.u32 %v2559, 7
        %v2561 = vsub.s32 %v2558, %v2560
        %v2562 = vrot.slane %v2555, %v2561
        %v2563 = vcombine.low %v2059, %v2066
        %v2565 = vunpack.c.l.s4 1983009808
        %v2566 = vunpack.c.0.s8 %v2565
        %v2567 = vlaneseq
        %v2568 = vshrl.u32 %v2567, 7
        %v2569 = vsub.s32 %v2566, %v2568
        %v2570 = vrot.slane %v2563, %v2569
        %v2571 = vcombine.low %v2069, %v2070
        %v2573 = vunpack.c.l.s4 1983009808
        %v2574 = vunpack.c.0.s8 %v2573
        %v2575 = vlaneseq
        %v2576 = vshrl.u32 %v2575, 7
        %v2577 = vsub.s32 %v2574, %v2576
        %v2578 = vrot.slane %v2571, %v2577
        %v2579 = vcombine.low %v2554, %v2562
        %v2580 = vcombine.high %v2554, %v2562
        %v2582 = vunpack.c.l.s4 1934713408
        %v2583 = vunpack.c.0.s8 %v2582
        %v2584 = vlaneseq
        %v2585 = vshrl.u32 %v2584, 7
        %v2586 = vsub.s32 %v2583, %v2585
        %v2587 = vrot.slane %v2579, %v2586
        %v2589 = vunpack.c.l.s4 1934713408
        %v2590 = vunpack.c.0.s8 %v2589
        %v2591 = vlaneseq
        %v2592 = vshrl.u32 %v2591, 7
        %v2593 = vsub.s32 %v2590, %v2592
        %v2594 = vrot.slane %v2580, %v2593
        %v2595 = vcombine.low %v2570, %v2578
        %v2596 = vcombine.high %v2570, %v2578
        %v2598 = vunpack.c.l.s4 1934713408
        %v2599 = vunpack.c.0.s8 %v2598
        %v2600 = vlaneseq
        %v2601 = vshrl.u32 %v2600, 7
        %v2602 = vsub.s32 %v2599, %v2601
        %v2603 = vrot.slane %v2595, %v2602
        %v2605 = vunpack.c.l.s4 1934713408
        %v2606 = vunpack.c.0.s8 %v2605
        %v2607 = vlaneseq
        %v2608 = vshrl.u32 %v2607, 7
        %v2609 = vsub.s32 %v2606, %v2608
        %v2610 = vrot.slane %v2596, %v2609
        %v2611 = vcombine.low %v2587, %v2603
        %v2612 = vcombine.high %v2587, %v2603
        %v2613 = vcombine.low %v2594, %v2610
        %v2614 = vcombine.high %v2594, %v2610
        %v2615 = vcombine.low %v2111, %v2118
        %v2617 = vunpack.c.l.s4 1983009808
        %v2618 = vunpack.c.0.s8 %v2617
        %v2619 = vlaneseq
        %v2620 = vshrl.u32 %v2619, 7
        %v2621 = vsub.s32 %v2618, %v2620
        %v2622 = vrot.slane %v2615, %v2621
        %v2623 = vcombine.low %v2135, %v2136
        %v2625 = vunpack.c.l.s4 1983009808
        %v2626 = vunpack.c.0.s8 %v2625
        %v2627 = vlaneseq
        %v2628 = vshrl.u32 %v2627, 7
        %v2629 = vsub.s32 %v2626, %v2628
        %v2630 = vrot.slane %v2623, %v2629
        %v2631 = vcombine.low %v2127, %v2134
        %v2633 = vunpack.c.l.s4 1983009808
        %v2634 = vunpack.c.0.s8 %v2633
        %v2635 = vlaneseq
        %v2636 = vshrl.u32 %v2635, 7
        %v2637 = vsub.s32 %v2634, %v2636
        %v2638 = vrot.slane %v2631, %v2637
        %v2639 = vcombine.low %v2137, %v2138
        %v2641 = vunpack.c.l.s4 1983009808
        %v2642 = vunpack.c.0.s8 %v2641
        %v2643 = vlaneseq
        %v2644 = vshrl.u32 %v2643, 7
        %v2645 = vsub.s32 %v2642, %v2644
        %v2646 = vrot.slane %v2639, %v2645
        %v2647 = vcombine.low %v2622, %v2630
        %v2648 = vcombine.high %v2622, %v2630
        %v2650 = vunpack.c.l.s4 1934713408
        %v2651 = vunpack.c.0.s8 %v2650
        %v2652 = vlaneseq
        %v2653 = vshrl.u32 %v2652, 7
        %v2654 = vsub.s32 %v2651, %v2653
        %v2655 = vrot.slane %v2647, %v2654
        %v2657 = vunpack.c.l.s4 1934713408
        %v2658 = vunpack.c.0.s8 %v2657
        %v2659 = vlaneseq
        %v2660 = vshrl.u32 %v2659, 7
        %v2661 = vsub.s32 %v2658, %v2660
        %v2662 = vrot.slane %v2648, %v2661
        %v2663 = vcombine.low %v2638, %v2646
        %v2664 = vcombine.high %v2638, %v2646
        %v2666 = vunpack.c.l.s4 1934713408
        %v2667 = vunpack.c.0.s8 %v2666
        %v2668 = vlaneseq
        %v2669 = vshrl.u32 %v2668, 7
        %v2670 = vsub.s32 %v2667, %v2669
        %v2671 = vrot.slane %v2663, %v2670
        %v2673 = vunpack.c.l.s4 1934713408
        %v2674 = vunpack.c.0.s8 %v2673
        %v2675 = vlaneseq
        %v2676 = vshrl.u32 %v2675, 7
        %v2677 = vsub.s32 %v2674, %v2676
        %v2678 = vrot.slane %v2664, %v2677
        %v2679 = vcombine.low %v2655, %v2671
        %v2680 = vcombine.high %v2655, %v2671
        %v2681 = vcombine.low %v2662, %v2678
        %v2682 = vcombine.high %v2662, %v2678
        %v2683 = vcombine.low %v2179, %v2186
        %v2685 = vunpack.c.l.s4 1983009808
        %v2686 = vunpack.c.0.s8 %v2685
        %v2687 = vlaneseq
        %v2688 = vshrl.u32 %v2687, 7
        %v2689 = vsub.s32 %v2686, %v2688
        %v2690 = vrot.slane %v2683, %v2689
        %v2691 = vcombine.low %v2203, %v2204
        %v2693 = vunpack.c.l.s4 1983009808
        %v2694 = vunpack.c.0.s8 %v2693
        %v2695 = vlaneseq
        %v2696 = vshrl.u32 %v2695, 7
        %v2697 = vsub.s32 %v2694, %v2696
        %v2698 = vrot.slane %v2691, %v2697
        %v2699 = vcombine.low %v2195, %v2202
        %v2701 = vunpack.c.l.s4 1983009808
        %v2702 = vunpack.c.0.s8 %v2701
        %v2703 = vlaneseq
        %v2704 = vshrl.u32 %v2703, 7
        %v2705 = vsub.s32 %v2702, %v2704
        %v2706 = vrot.slane %v2699, %v2705
        %v2707 = vcombine.low %v2205, %v2206
        %v2709 = vunpack.c.l.s4 1983009808
        %v2710 = vunpack.c.0.s8 %v2709
        %v2711 = vlaneseq
        %v2712 = vshrl.u32 %v2711, 7
        %v2713 = vsub.s32 %v2710, %v2712
        %v2714 = vrot.slane %v2707, %v2713
        %v2715 = vcombine.low %v2690, %v2698
        %v2716 = vcombine.high %v2690, %v2698
        %v2718 = vunpack.c.l.s4 1934713408
        %v2719 = vunpack.c.0.s8 %v2718
        %v2720 = vlaneseq
        %v2721 = vshrl.u32 %v2720, 7
        %v2722 = vsub.s32 %v2719, %v2721
        %v2723 = vrot.slane %v2715, %v2722
        %v2725 = vunpack.c.l.s4 1934713408
        %v2726 = vunpack.c.0.s8 %v2725
        %v2727 = vlaneseq
        %v2728 = vshrl.u32 %v2727, 7
        %v2729 = vsub.s32 %v2726, %v2728
        %v2730 = vrot.slane %v2716, %v2729
        %v2731 = vcombine.low %v2706, %v2714
        %v2732 = vcombine.high %v2706, %v2714
        %v2734 = vunpack.c.l.s4 1934713408
        %v2735 = vunpack.c.0.s8 %v2734
        %v2736 = vlaneseq
        %v2737 = vshrl.u32 %v2736, 7
        %v2738 = vsub.s32 %v2735, %v2737
        %v2739 = vrot.slane %v2731, %v2738
        %v2741 = vunpack.c.l.s4 1934713408
        %v2742 = vunpack.c.0.s8 %v2741
        %v2743 = vlaneseq
        %v2744 = vshrl.u32 %v2743, 7
        %v2745 = vsub.s32 %v2742, %v2744
        %v2746 = vrot.slane %v2732, %v2745
        %v2747 = vcombine.low %v2723, %v2739
        %v2748 = vcombine.high %v2723, %v2739
        %v2749 = vcombine.low %v2730, %v2746
        %v2750 = vcombine.high %v2730, %v2746
        %v2751 = vcombine.low %v2247, %v2254
        %v2753 = vunpack.c.l.s4 1983009808
        %v2754 = vunpack.c.0.s8 %v2753
        %v2755 = vlaneseq
        %v2756 = vshrl.u32 %v2755, 7
        %v2757 = vsub.s32 %v2754, %v2756
        %v2758 = vrot.slane %v2751, %v2757
        %v2759 = vcombine.low %v2271, %v2272
        %v2761 = vunpack.c.l.s4 1983009808
        %v2762 = vunpack.c.0.s8 %v2761
        %v2763 = vlaneseq
        %v2764 = vshrl.u32 %v2763, 7
        %v2765 = vsub.s32 %v2762, %v2764
        %v2766 = vrot.slane %v2759, %v2765
        %v2767 = vcombine.low %v2263, %v2270
        %v2769 = vunpack.c.l.s4 1983009808
        %v2770 = vunpack.c.0.s8 %v2769
        %v2771 = vlaneseq
        %v2772 = vshrl.u32 %v2771, 7
        %v2773 = vsub.s32 %v2770, %v2772
        %v2774 = vrot.slane %v2767, %v2773
        %v2775 = vcombine.low %v2273, %v2274
        %v2777 = vunpack.c.l.s4 1983009808
        %v2778 = vunpack.c.0.s8 %v2777
        %v2779 = vlaneseq
        %v2780 = vshrl.u32 %v2779, 7
        %v2781 = vsub.s32 %v2778, %v2780
        %v2782 = vrot.slane %v2775, %v2781
        %v2783 = vcombine.low %v2758, %v2766
        %v2784 = vcombine.high %v2758, %v2766
        %v2786 = vunpack.c.l.s4 1934713408
        %v2787 = vunpack.c.0.s8 %v2786
        %v2788 = vlaneseq
        %v2789 = vshrl.u32 %v2788, 7
        %v2790 = vsub.s32 %v2787, %v2789
        %v2791 = vrot.slane %v2783, %v2790
        %v2793 = vunpack.c.l.s4 1934713408
        %v2794 = vunpack.c.0.s8 %v2793
        %v2795 = vlaneseq
        %v2796 = vshrl.u32 %v2795, 7
        %v2797 = vsub.s32 %v2794, %v2796
        %v2798 = vrot.slane %v2784, %v2797
        %v2799 = vcombine.low %v2774, %v2782
        %v2800 = vcombine.high %v2774, %v2782
        %v2802 = vunpack.c.l.s4 1934713408
        %v2803 = vunpack.c.0.s8 %v2802
        %v2804 = vlaneseq
        %v2805 = vshrl.u32 %v2804, 7
        %v2806 = vsub.s32 %v2803, %v2805
        %v2807 = vrot.slane %v2799, %v2806
        %v2809 = vunpack.c.l.s4 1934713408
        %v2810 = vunpack.c.0.s8 %v2809
        %v2811 = vlaneseq
        %v2812 = vshrl.u32 %v2811, 7
        %v2813 = vsub.s32 %v2810, %v2812
        %v2814 = vrot.slane %v2800, %v2813
        %v2815 = vcombine.low %v2791, %v2807
        %v2816 = vcombine.high %v2791, %v2807
        %v2817 = vcombine.low %v2798, %v2814
        %v2818 = vcombine.high %v2798, %v2814
        %v2819 = vcombine.low %v2315, %v2322
        %v2821 = vunpack.c.l.s4 1983009808
        %v2822 = vunpack.c.0.s8 %v2821
        %v2823 = vlaneseq
        %v2824 = vshrl.u32 %v2823, 7
        %v2825 = vsub.s32 %v2822, %v2824
        %v2826 = vrot.slane %v2819, %v2825
        %v2827 = vcombine.low %v2339, %v2340
        %v2829 = vunpack.c.l.s4 1983009808
        %v2830 = vunpack.c.0.s8 %v2829
        %v2831 = vlaneseq
        %v2832 = vshrl.u32 %v2831, 7
        %v2833 = vsub.s32 %v2830, %v2832
        %v2834 = vrot.slane %v2827, %v2833
        %v2835 = vcombine.low %v2331, %v2338
        %v2837 = vunpack.c.l.s4 1983009808
        %v2838 = vunpack.c.0.s8 %v2837
        %v2839 = vlaneseq
        %v2840 = vshrl.u32 %v2839, 7
        %v2841 = vsub.s32 %v2838, %v2840
        %v2842 = vrot.slane %v2835, %v2841
        %v2843 = vcombine.low %v2341, %v2342
        %v2845 = vunpack.c.l.s4 1983009808
        %v2846 = vunpack.c.0.s8 %v2845
        %v2847 = vlaneseq
        %v2848 = vshrl.u32 %v2847, 7
        %v2849 = vsub.s32 %v2846, %v2848
        %v2850 = vrot.slane %v2843, %v2849
        %v2851 = vcombine.low %v2826, %v2834
        %v2852 = vcombine.high %v2826, %v2834
        %v2854 = vunpack.c.l.s4 1934713408
        %v2855 = vunpack.c.0.s8 %v2854
        %v2856 = vlaneseq
        %v2857 = vshrl.u32 %v2856, 7
        %v2858 = vsub.s32 %v2855, %v2857
        %v2859 = vrot.slane %v2851, %v2858
        %v2861 = vunpack.c.l.s4 1934713408
        %v2862 = vunpack.c.0.s8 %v2861
        %v2863 = vlaneseq
        %v2864 = vshrl.u32 %v2863, 7
        %v2865 = vsub.s32 %v2862, %v2864
        %v2866 = vrot.slane %v2852, %v2865
        %v2867 = vcombine.low %v2842, %v2850
        %v2868 = vcombine.high %v2842, %v2850
        %v2870 = vunpack.c.l.s4 1934713408
        %v2871 = vunpack.c.0.s8 %v2870
        %v2872 = vlaneseq
        %v2873 = vshrl.u32 %v2872, 7
        %v2874 = vsub.s32 %v2871, %v2873
        %v2875 = vrot.slane %v2867, %v2874
        %v2877 = vunpack.c.l.s4 1934713408
        %v2878 = vunpack.c.0.s8 %v2877
        %v2879 = vlaneseq
        %v2880 = vshrl.u32 %v2879, 7
        %v2881 = vsub.s32 %v2878, %v2880
        %v2882 = vrot.slane %v2868, %v2881
        %v2883 = vcombine.low %v2859, %v2875
        %v2884 = vcombine.high %v2859, %v2875
        %v2885 = vcombine.low %v2866, %v2882
        %v2886 = vcombine.high %v2866, %v2882
        %2895 = vrot.lane.b32.xlu0 %v481, 96
        %v2896 = vpop.permute.xlu0 %2895
        %2897 = vrot.lane.b32.xlu0 %v486, 96
        %v2898 = vpop.permute.xlu0 %2897
        %2899 = vrot.lane.b32.xlu0 %v491, 96
        %v2900 = vpop.permute.xlu0 %2899
        %2901 = vrot.lane.b32.xlu0 %v496, 96
        %v2902 = vpop.permute.xlu0 %2901
        %2903 = vrot.lane.b32.xlu0 %v501, 96
        %v2904 = vpop.permute.xlu0 %2903
        %2905 = vrot.lane.b32.xlu0 %v506, 96
        %v2906 = vpop.permute.xlu0 %2905
        %2907 = vrot.lane.b32.xlu0 %v511, 96
        %v2908 = vpop.permute.xlu0 %2907
        %2909 = vrot.lane.b32.xlu0 %v516, 96
        %v2910 = vpop.permute.xlu0 %2909
        %2919 = vrot.lane.b32.xlu0 %v481, 64
        %v2920 = vpop.permute.xlu0 %2919
        %2921 = vrot.lane.b32.xlu0 %v486, 64
        %v2922 = vpop.permute.xlu0 %2921
        %2923 = vrot.lane.b32.xlu0 %v491, 64
        %v2924 = vpop.permute.xlu0 %2923
        %2925 = vrot.lane.b32.xlu0 %v496, 64
        %v2926 = vpop.permute.xlu0 %2925
        %2927 = vrot.lane.b32.xlu0 %v501, 64
        %v2928 = vpop.permute.xlu0 %2927
        %2929 = vrot.lane.b32.xlu0 %v506, 64
        %v2930 = vpop.permute.xlu0 %2929
        %2931 = vrot.lane.b32.xlu0 %v511, 64
        %v2932 = vpop.permute.xlu0 %2931
        %2933 = vrot.lane.b32.xlu0 %v516, 64
        %v2934 = vpop.permute.xlu0 %2933
        %2943 = vrot.lane.b32.xlu0 %v481, 32
        %v2944 = vpop.permute.xlu0 %2943
        %2945 = vrot.lane.b32.xlu0 %v486, 32
        %v2946 = vpop.permute.xlu0 %2945
        %2947 = vrot.lane.b32.xlu0 %v491, 32
        %v2948 = vpop.permute.xlu0 %2947
        %2949 = vrot.lane.b32.xlu0 %v496, 32
        %v2950 = vpop.permute.xlu0 %2949
        %2951 = vrot.lane.b32.xlu0 %v501, 32
        %v2952 = vpop.permute.xlu0 %2951
        %2953 = vrot.lane.b32.xlu0 %v506, 32
        %v2954 = vpop.permute.xlu0 %2953
        %2955 = vrot.lane.b32.xlu0 %v511, 32
        %v2956 = vpop.permute.xlu0 %2955
        %2957 = vrot.lane.b32.xlu0 %v516, 32
        %v2958 = vpop.permute.xlu0 %2957
        %v2967 = vcombine.low %v481, %v2920
        %v2968 = vcombine.high %v481, %v2920
        %v2970 = vunpack.c.l.s4 1983009808
        %v2971 = vunpack.c.0.s8 %v2970
        %v2972 = vlaneseq
        %v2973 = vshrl.u32 %v2972, 7
        %v2974 = vsub.s32 %v2971, %v2973
        %v2975 = vrot.slane %v2967, %v2974
        %v2977 = vunpack.c.l.s4 1983009808
        %v2978 = vunpack.c.0.s8 %v2977
        %v2979 = vlaneseq
        %v2980 = vshrl.u32 %v2979, 7
        %v2981 = vsub.s32 %v2978, %v2980
        %v2982 = vrot.slane %v2968, %v2981
        %v2983 = vcombine.low %v2896, %v2944
        %v2984 = vcombine.high %v2896, %v2944
        %v2986 = vunpack.c.l.s4 1983009808
        %v2987 = vunpack.c.0.s8 %v2986
        %v2988 = vlaneseq
        %v2989 = vshrl.u32 %v2988, 7
        %v2990 = vsub.s32 %v2987, %v2989
        %v2991 = vrot.slane %v2983, %v2990
        %v2993 = vunpack.c.l.s4 1983009808
        %v2994 = vunpack.c.0.s8 %v2993
        %v2995 = vlaneseq
        %v2996 = vshrl.u32 %v2995, 7
        %v2997 = vsub.s32 %v2994, %v2996
        %v2998 = vrot.slane %v2984, %v2997
        %v2999 = vcombine.low %v2975, %v2991
        %v3000 = vcombine.high %v2975, %v2991
        %v3002 = vunpack.c.l.s4 1934713408
        %v3003 = vunpack.c.0.s8 %v3002
        %v3004 = vlaneseq
        %v3005 = vshrl.u32 %v3004, 7
        %v3006 = vsub.s32 %v3003, %v3005
        %v3007 = vrot.slane %v2999, %v3006
        %v3009 = vunpack.c.l.s4 1934713408
        %v3010 = vunpack.c.0.s8 %v3009
        %v3011 = vlaneseq
        %v3012 = vshrl.u32 %v3011, 7
        %v3013 = vsub.s32 %v3010, %v3012
        %v3014 = vrot.slane %v3000, %v3013
        %v3015 = vcombine.low %v2982, %v2998
        %v3016 = vcombine.high %v2982, %v2998
        %v3018 = vunpack.c.l.s4 1934713408
        %v3019 = vunpack.c.0.s8 %v3018
        %v3020 = vlaneseq
        %v3021 = vshrl.u32 %v3020, 7
        %v3022 = vsub.s32 %v3019, %v3021
        %v3023 = vrot.slane %v3015, %v3022
        %v3025 = vunpack.c.l.s4 1934713408
        %v3026 = vunpack.c.0.s8 %v3025
        %v3027 = vlaneseq
        %v3028 = vshrl.u32 %v3027, 7
        %v3029 = vsub.s32 %v3026, %v3028
        %v3030 = vrot.slane %v3016, %v3029
        %v3031 = vcombine.high %v3007, 0.0
        %v3032 = vcombine.high %v3014, 0.0
        %v3033 = vcombine.high %v3023, 0.0
        %v3034 = vcombine.high %v3030, 0.0
        %v3035 = vcombine.low %v486, %v2922
        %v3036 = vcombine.high %v486, %v2922
        %v3038 = vunpack.c.l.s4 1983009808
        %v3039 = vunpack.c.0.s8 %v3038
        %v3040 = vlaneseq
        %v3041 = vshrl.u32 %v3040, 7
        %v3042 = vsub.s32 %v3039, %v3041
        %v3043 = vrot.slane %v3035, %v3042
        %v3045 = vunpack.c.l.s4 1983009808
        %v3046 = vunpack.c.0.s8 %v3045
        %v3047 = vlaneseq
        %v3048 = vshrl.u32 %v3047, 7
        %v3049 = vsub.s32 %v3046, %v3048
        %v3050 = vrot.slane %v3036, %v3049
        %v3051 = vcombine.low %v2898, %v2946
        %v3052 = vcombine.high %v2898, %v2946
        %v3054 = vunpack.c.l.s4 1983009808
        %v3055 = vunpack.c.0.s8 %v3054
        %v3056 = vlaneseq
        %v3057 = vshrl.u32 %v3056, 7
        %v3058 = vsub.s32 %v3055, %v3057
        %v3059 = vrot.slane %v3051, %v3058
        %v3061 = vunpack.c.l.s4 1983009808
        %v3062 = vunpack.c.0.s8 %v3061
        %v3063 = vlaneseq
        %v3064 = vshrl.u32 %v3063, 7
        %v3065 = vsub.s32 %v3062, %v3064
        %v3066 = vrot.slane %v3052, %v3065
        %v3067 = vcombine.low %v3043, %v3059
        %v3068 = vcombine.high %v3043, %v3059
        %v3070 = vunpack.c.l.s4 1934713408
        %v3071 = vunpack.c.0.s8 %v3070
        %v3072 = vlaneseq
        %v3073 = vshrl.u32 %v3072, 7
        %v3074 = vsub.s32 %v3071, %v3073
        %v3075 = vrot.slane %v3067, %v3074
        %v3077 = vunpack.c.l.s4 1934713408
        %v3078 = vunpack.c.0.s8 %v3077
        %v3079 = vlaneseq
        %v3080 = vshrl.u32 %v3079, 7
        %v3081 = vsub.s32 %v3078, %v3080
        %v3082 = vrot.slane %v3068, %v3081
        %v3083 = vcombine.low %v3050, %v3066
        %v3084 = vcombine.high %v3050, %v3066
        %v3086 = vunpack.c.l.s4 1934713408
        %v3087 = vunpack.c.0.s8 %v3086
        %v3088 = vlaneseq
        %v3089 = vshrl.u32 %v3088, 7
        %v3090 = vsub.s32 %v3087, %v3089
        %v3091 = vrot.slane %v3083, %v3090
        %v3093 = vunpack.c.l.s4 1934713408
        %v3094 = vunpack.c.0.s8 %v3093
        %v3095 = vlaneseq
        %v3096 = vshrl.u32 %v3095, 7
        %v3097 = vsub.s32 %v3094, %v3096
        %v3098 = vrot.slane %v3084, %v3097
        %v3099 = vcombine.high %v3075, 0.0
        %v3100 = vcombine.high %v3082, 0.0
        %v3101 = vcombine.high %v3091, 0.0
        %v3102 = vcombine.high %v3098, 0.0
        %v3103 = vcombine.low %v491, %v2924
        %v3104 = vcombine.high %v491, %v2924
        %v3106 = vunpack.c.l.s4 1983009808
        %v3107 = vunpack.c.0.s8 %v3106
        %v3108 = vlaneseq
        %v3109 = vshrl.u32 %v3108, 7
        %v3110 = vsub.s32 %v3107, %v3109
        %v3111 = vrot.slane %v3103, %v3110
        %v3113 = vunpack.c.l.s4 1983009808
        %v3114 = vunpack.c.0.s8 %v3113
        %v3115 = vlaneseq
        %v3116 = vshrl.u32 %v3115, 7
        %v3117 = vsub.s32 %v3114, %v3116
        %v3118 = vrot.slane %v3104, %v3117
        %v3119 = vcombine.low %v2900, %v2948
        %v3120 = vcombine.high %v2900, %v2948
        %v3122 = vunpack.c.l.s4 1983009808
        %v3123 = vunpack.c.0.s8 %v3122
        %v3124 = vlaneseq
        %v3125 = vshrl.u32 %v3124, 7
        %v3126 = vsub.s32 %v3123, %v3125
        %v3127 = vrot.slane %v3119, %v3126
        %v3129 = vunpack.c.l.s4 1983009808
        %v3130 = vunpack.c.0.s8 %v3129
        %v3131 = vlaneseq
        %v3132 = vshrl.u32 %v3131, 7
        %v3133 = vsub.s32 %v3130, %v3132
        %v3134 = vrot.slane %v3120, %v3133
        %v3135 = vcombine.low %v3111, %v3127
        %v3136 = vcombine.high %v3111, %v3127
        %v3138 = vunpack.c.l.s4 1934713408
        %v3139 = vunpack.c.0.s8 %v3138
        %v3140 = vlaneseq
        %v3141 = vshrl.u32 %v3140, 7
        %v3142 = vsub.s32 %v3139, %v3141
        %v3143 = vrot.slane %v3135, %v3142
        %v3145 = vunpack.c.l.s4 1934713408
        %v3146 = vunpack.c.0.s8 %v3145
        %v3147 = vlaneseq
        %v3148 = vshrl.u32 %v3147, 7
        %v3149 = vsub.s32 %v3146, %v3148
        %v3150 = vrot.slane %v3136, %v3149
        %v3151 = vcombine.low %v3118, %v3134
        %v3152 = vcombine.high %v3118, %v3134
        %v3154 = vunpack.c.l.s4 1934713408
        %v3155 = vunpack.c.0.s8 %v3154
        %v3156 = vlaneseq
        %v3157 = vshrl.u32 %v3156, 7
        %v3158 = vsub.s32 %v3155, %v3157
        %v3159 = vrot.slane %v3151, %v3158
        %v3161 = vunpack.c.l.s4 1934713408
        %v3162 = vunpack.c.0.s8 %v3161
        %v3163 = vlaneseq
        %v3164 = vshrl.u32 %v3163, 7
        %v3165 = vsub.s32 %v3162, %v3164
        %v3166 = vrot.slane %v3152, %v3165
        %v3167 = vcombine.high %v3143, 0.0
        %v3168 = vcombine.high %v3150, 0.0
        %v3169 = vcombine.high %v3159, 0.0
        %v3170 = vcombine.high %v3166, 0.0
        %v3171 = vcombine.low %v496, %v2926
        %v3172 = vcombine.high %v496, %v2926
        %v3174 = vunpack.c.l.s4 1983009808
        %v3175 = vunpack.c.0.s8 %v3174
        %v3176 = vlaneseq
        %v3177 = vshrl.u32 %v3176, 7
        %v3178 = vsub.s32 %v3175, %v3177
        %v3179 = vrot.slane %v3171, %v3178
        %v3181 = vunpack.c.l.s4 1983009808
        %v3182 = vunpack.c.0.s8 %v3181
        %v3183 = vlaneseq
        %v3184 = vshrl.u32 %v3183, 7
        %v3185 = vsub.s32 %v3182, %v3184
        %v3186 = vrot.slane %v3172, %v3185
        %v3187 = vcombine.low %v2902, %v2950
        %v3188 = vcombine.high %v2902, %v2950
        %v3190 = vunpack.c.l.s4 1983009808
        %v3191 = vunpack.c.0.s8 %v3190
        %v3192 = vlaneseq
        %v3193 = vshrl.u32 %v3192, 7
        %v3194 = vsub.s32 %v3191, %v3193
        %v3195 = vrot.slane %v3187, %v3194
        %v3197 = vunpack.c.l.s4 1983009808
        %v3198 = vunpack.c.0.s8 %v3197
        %v3199 = vlaneseq
        %v3200 = vshrl.u32 %v3199, 7
        %v3201 = vsub.s32 %v3198, %v3200
        %v3202 = vrot.slane %v3188, %v3201
        %v3203 = vcombine.low %v3179, %v3195
        %v3204 = vcombine.high %v3179, %v3195
        %v3206 = vunpack.c.l.s4 1934713408
        %v3207 = vunpack.c.0.s8 %v3206
        %v3208 = vlaneseq
        %v3209 = vshrl.u32 %v3208, 7
        %v3210 = vsub.s32 %v3207, %v3209
        %v3211 = vrot.slane %v3203, %v3210
        %v3213 = vunpack.c.l.s4 1934713408
        %v3214 = vunpack.c.0.s8 %v3213
        %v3215 = vlaneseq
        %v3216 = vshrl.u32 %v3215, 7
        %v3217 = vsub.s32 %v3214, %v3216
        %v3218 = vrot.slane %v3204, %v3217
        %v3219 = vcombine.low %v3186, %v3202
        %v3220 = vcombine.high %v3186, %v3202
        %v3222 = vunpack.c.l.s4 1934713408
        %v3223 = vunpack.c.0.s8 %v3222
        %v3224 = vlaneseq
        %v3225 = vshrl.u32 %v3224, 7
        %v3226 = vsub.s32 %v3223, %v3225
        %v3227 = vrot.slane %v3219, %v3226
        %v3229 = vunpack.c.l.s4 1934713408
        %v3230 = vunpack.c.0.s8 %v3229
        %v3231 = vlaneseq
        %v3232 = vshrl.u32 %v3231, 7
        %v3233 = vsub.s32 %v3230, %v3232
        %v3234 = vrot.slane %v3220, %v3233
        %v3235 = vcombine.high %v3211, 0.0
        %v3236 = vcombine.high %v3218, 0.0
        %v3237 = vcombine.high %v3227, 0.0
        %v3238 = vcombine.high %v3234, 0.0
        %v3239 = vcombine.low %v501, %v2928
        %v3240 = vcombine.high %v501, %v2928
        %v3242 = vunpack.c.l.s4 1983009808
        %v3243 = vunpack.c.0.s8 %v3242
        %v3244 = vlaneseq
        %v3245 = vshrl.u32 %v3244, 7
        %v3246 = vsub.s32 %v3243, %v3245
        %v3247 = vrot.slane %v3239, %v3246
        %v3249 = vunpack.c.l.s4 1983009808
        %v3250 = vunpack.c.0.s8 %v3249
        %v3251 = vlaneseq
        %v3252 = vshrl.u32 %v3251, 7
        %v3253 = vsub.s32 %v3250, %v3252
        %v3254 = vrot.slane %v3240, %v3253
        %v3255 = vcombine.low %v2904, %v2952
        %v3256 = vcombine.high %v2904, %v2952
        %v3258 = vunpack.c.l.s4 1983009808
        %v3259 = vunpack.c.0.s8 %v3258
        %v3260 = vlaneseq
        %v3261 = vshrl.u32 %v3260, 7
        %v3262 = vsub.s32 %v3259, %v3261
        %v3263 = vrot.slane %v3255, %v3262
        %v3265 = vunpack.c.l.s4 1983009808
        %v3266 = vunpack.c.0.s8 %v3265
        %v3267 = vlaneseq
        %v3268 = vshrl.u32 %v3267, 7
        %v3269 = vsub.s32 %v3266, %v3268
        %v3270 = vrot.slane %v3256, %v3269
        %v3271 = vcombine.low %v3247, %v3263
        %v3272 = vcombine.high %v3247, %v3263
        %v3274 = vunpack.c.l.s4 1934713408
        %v3275 = vunpack.c.0.s8 %v3274
        %v3276 = vlaneseq
        %v3277 = vshrl.u32 %v3276, 7
        %v3278 = vsub.s32 %v3275, %v3277
        %v3279 = vrot.slane %v3271, %v3278
        %v3281 = vunpack.c.l.s4 1934713408
        %v3282 = vunpack.c.0.s8 %v3281
        %v3283 = vlaneseq
        %v3284 = vshrl.u32 %v3283, 7
        %v3285 = vsub.s32 %v3282, %v3284
        %v3286 = vrot.slane %v3272, %v3285
        %v3287 = vcombine.low %v3254, %v3270
        %v3288 = vcombine.high %v3254, %v3270
        %v3290 = vunpack.c.l.s4 1934713408
        %v3291 = vunpack.c.0.s8 %v3290
        %v3292 = vlaneseq
        %v3293 = vshrl.u32 %v3292, 7
        %v3294 = vsub.s32 %v3291, %v3293
        %v3295 = vrot.slane %v3287, %v3294
        %v3297 = vunpack.c.l.s4 1934713408
        %v3298 = vunpack.c.0.s8 %v3297
        %v3299 = vlaneseq
        %v3300 = vshrl.u32 %v3299, 7
        %v3301 = vsub.s32 %v3298, %v3300
        %v3302 = vrot.slane %v3288, %v3301
        %v3303 = vcombine.high %v3279, 0.0
        %v3304 = vcombine.high %v3286, 0.0
        %v3305 = vcombine.high %v3295, 0.0
        %v3306 = vcombine.high %v3302, 0.0
        %v3307 = vcombine.low %v506, %v2930
        %v3308 = vcombine.high %v506, %v2930
        %v3310 = vunpack.c.l.s4 1983009808
        %v3311 = vunpack.c.0.s8 %v3310
        %v3312 = vlaneseq
        %v3313 = vshrl.u32 %v3312, 7
        %v3314 = vsub.s32 %v3311, %v3313
        %v3315 = vrot.slane %v3307, %v3314
        %v3317 = vunpack.c.l.s4 1983009808
        %v3318 = vunpack.c.0.s8 %v3317
        %v3319 = vlaneseq
        %v3320 = vshrl.u32 %v3319, 7
        %v3321 = vsub.s32 %v3318, %v3320
        %v3322 = vrot.slane %v3308, %v3321
        %v3323 = vcombine.low %v2906, %v2954
        %v3324 = vcombine.high %v2906, %v2954
        %v3326 = vunpack.c.l.s4 1983009808
        %v3327 = vunpack.c.0.s8 %v3326
        %v3328 = vlaneseq
        %v3329 = vshrl.u32 %v3328, 7
        %v3330 = vsub.s32 %v3327, %v3329
        %v3331 = vrot.slane %v3323, %v3330
        %v3333 = vunpack.c.l.s4 1983009808
        %v3334 = vunpack.c.0.s8 %v3333
        %v3335 = vlaneseq
        %v3336 = vshrl.u32 %v3335, 7
        %v3337 = vsub.s32 %v3334, %v3336
        %v3338 = vrot.slane %v3324, %v3337
        %v3339 = vcombine.low %v3315, %v3331
        %v3340 = vcombine.high %v3315, %v3331
        %v3342 = vunpack.c.l.s4 1934713408
        %v3343 = vunpack.c.0.s8 %v3342
        %v3344 = vlaneseq
        %v3345 = vshrl.u32 %v3344, 7
        %v3346 = vsub.s32 %v3343, %v3345
        %v3347 = vrot.slane %v3339, %v3346
        %v3349 = vunpack.c.l.s4 1934713408
        %v3350 = vunpack.c.0.s8 %v3349
        %v3351 = vlaneseq
        %v3352 = vshrl.u32 %v3351, 7
        %v3353 = vsub.s32 %v3350, %v3352
        %v3354 = vrot.slane %v3340, %v3353
        %v3355 = vcombine.low %v3322, %v3338
        %v3356 = vcombine.high %v3322, %v3338
        %v3358 = vunpack.c.l.s4 1934713408
        %v3359 = vunpack.c.0.s8 %v3358
        %v3360 = vlaneseq
        %v3361 = vshrl.u32 %v3360, 7
        %v3362 = vsub.s32 %v3359, %v3361
        %v3363 = vrot.slane %v3355, %v3362
        %v3365 = vunpack.c.l.s4 1934713408
        %v3366 = vunpack.c.0.s8 %v3365
        %v3367 = vlaneseq
        %v3368 = vshrl.u32 %v3367, 7
        %v3369 = vsub.s32 %v3366, %v3368
        %v3370 = vrot.slane %v3356, %v3369
        %v3371 = vcombine.high %v3347, 0.0
        %v3372 = vcombine.high %v3354, 0.0
        %v3373 = vcombine.high %v3363, 0.0
        %v3374 = vcombine.high %v3370, 0.0
        %v3375 = vcombine.low %v511, %v2932
        %v3376 = vcombine.high %v511, %v2932
        %v3378 = vunpack.c.l.s4 1983009808
        %v3379 = vunpack.c.0.s8 %v3378
        %v3380 = vlaneseq
        %v3381 = vshrl.u32 %v3380, 7
        %v3382 = vsub.s32 %v3379, %v3381
        %v3383 = vrot.slane %v3375, %v3382
        %v3385 = vunpack.c.l.s4 1983009808
        %v3386 = vunpack.c.0.s8 %v3385
        %v3387 = vlaneseq
        %v3388 = vshrl.u32 %v3387, 7
        %v3389 = vsub.s32 %v3386, %v3388
        %v3390 = vrot.slane %v3376, %v3389
        %v3391 = vcombine.low %v2908, %v2956
        %v3392 = vcombine.high %v2908, %v2956
        %v3394 = vunpack.c.l.s4 1983009808
        %v3395 = vunpack.c.0.s8 %v3394
        %v3396 = vlaneseq
        %v3397 = vshrl.u32 %v3396, 7
        %v3398 = vsub.s32 %v3395, %v3397
        %v3399 = vrot.slane %v3391, %v3398
        %v3401 = vunpack.c.l.s4 1983009808
        %v3402 = vunpack.c.0.s8 %v3401
        %v3403 = vlaneseq
        %v3404 = vshrl.u32 %v3403, 7
        %v3405 = vsub.s32 %v3402, %v3404
        %v3406 = vrot.slane %v3392, %v3405
        %v3407 = vcombine.low %v3383, %v3399
        %v3408 = vcombine.high %v3383, %v3399
        %v3410 = vunpack.c.l.s4 1934713408
        %v3411 = vunpack.c.0.s8 %v3410
        %v3412 = vlaneseq
        %v3413 = vshrl.u32 %v3412, 7
        %v3414 = vsub.s32 %v3411, %v3413
        %v3415 = vrot.slane %v3407, %v3414
        %v3417 = vunpack.c.l.s4 1934713408
        %v3418 = vunpack.c.0.s8 %v3417
        %v3419 = vlaneseq
        %v3420 = vshrl.u32 %v3419, 7
        %v3421 = vsub.s32 %v3418, %v3420
        %v3422 = vrot.slane %v3408, %v3421
        %v3423 = vcombine.low %v3390, %v3406
        %v3424 = vcombine.high %v3390, %v3406
        %v3426 = vunpack.c.l.s4 1934713408
        %v3427 = vunpack.c.0.s8 %v3426
        %v3428 = vlaneseq
        %v3429 = vshrl.u32 %v3428, 7
        %v3430 = vsub.s32 %v3427, %v3429
        %v3431 = vrot.slane %v3423, %v3430
        %v3433 = vunpack.c.l.s4 1934713408
        %v3434 = vunpack.c.0.s8 %v3433
        %v3435 = vlaneseq
        %v3436 = vshrl.u32 %v3435, 7
        %v3437 = vsub.s32 %v3434, %v3436
        %v3438 = vrot.slane %v3424, %v3437
        %v3439 = vcombine.high %v3415, 0.0
        %v3440 = vcombine.high %v3422, 0.0
        %v3441 = vcombine.high %v3431, 0.0
        %v3442 = vcombine.high %v3438, 0.0
        %v3443 = vcombine.low %v516, %v2934
        %v3444 = vcombine.high %v516, %v2934
        %v3446 = vunpack.c.l.s4 1983009808
        %v3447 = vunpack.c.0.s8 %v3446
        %v3448 = vlaneseq
        %v3449 = vshrl.u32 %v3448, 7
        %v3450 = vsub.s32 %v3447, %v3449
        %v3451 = vrot.slane %v3443, %v3450
        %v3453 = vunpack.c.l.s4 1983009808
        %v3454 = vunpack.c.0.s8 %v3453
        %v3455 = vlaneseq
        %v3456 = vshrl.u32 %v3455, 7
        %v3457 = vsub.s32 %v3454, %v3456
        %v3458 = vrot.slane %v3444, %v3457
        %v3459 = vcombine.low %v2910, %v2958
        %v3460 = vcombine.high %v2910, %v2958
        %v3462 = vunpack.c.l.s4 1983009808
        %v3463 = vunpack.c.0.s8 %v3462
        %v3464 = vlaneseq
        %v3465 = vshrl.u32 %v3464, 7
        %v3466 = vsub.s32 %v3463, %v3465
        %v3467 = vrot.slane %v3459, %v3466
        %v3469 = vunpack.c.l.s4 1983009808
        %v3470 = vunpack.c.0.s8 %v3469
        %v3471 = vlaneseq
        %v3472 = vshrl.u32 %v3471, 7
        %v3473 = vsub.s32 %v3470, %v3472
        %v3474 = vrot.slane %v3460, %v3473
        %v3475 = vcombine.low %v3451, %v3467
        %v3476 = vcombine.high %v3451, %v3467
        %v3478 = vunpack.c.l.s4 1934713408
        %v3479 = vunpack.c.0.s8 %v3478
        %v3480 = vlaneseq
        %v3481 = vshrl.u32 %v3480, 7
        %v3482 = vsub.s32 %v3479, %v3481
        %v3483 = vrot.slane %v3475, %v3482
        %v3485 = vunpack.c.l.s4 1934713408
        %v3486 = vunpack.c.0.s8 %v3485
        %v3487 = vlaneseq
        %v3488 = vshrl.u32 %v3487, 7
        %v3489 = vsub.s32 %v3486, %v3488
        %v3490 = vrot.slane %v3476, %v3489
        %v3491 = vcombine.low %v3458, %v3474
        %v3492 = vcombine.high %v3458, %v3474
        %v3494 = vunpack.c.l.s4 1934713408
        %v3495 = vunpack.c.0.s8 %v3494
        %v3496 = vlaneseq
        %v3497 = vshrl.u32 %v3496, 7
        %v3498 = vsub.s32 %v3495, %v3497
        %v3499 = vrot.slane %v3491, %v3498
        %v3501 = vunpack.c.l.s4 1934713408
        %v3502 = vunpack.c.0.s8 %v3501
        %v3503 = vlaneseq
        %v3504 = vshrl.u32 %v3503, 7
        %v3505 = vsub.s32 %v3502, %v3504
        %v3506 = vrot.slane %v3492, %v3505
        %v3507 = vcombine.high %v3483, 0.0
        %v3508 = vcombine.high %v3490, 0.0
        %v3509 = vcombine.high %v3499, 0.0
        %v3510 = vcombine.high %v3506, 0.0
        %v3511 = vcombine.low %v3007, %v3014
        %v3513 = vunpack.c.l.s4 1983009808
        %v3514 = vunpack.c.0.s8 %v3513
        %v3515 = vlaneseq
        %v3516 = vshrl.u32 %v3515, 7
        %v3517 = vsub.s32 %v3514, %v3516
        %v3518 = vrot.slane %v3511, %v3517
        %v3519 = vcombine.low %v3031, %v3032
        %v3521 = vunpack.c.l.s4 1983009808
        %v3522 = vunpack.c.0.s8 %v3521
        %v3523 = vlaneseq
        %v3524 = vshrl.u32 %v3523, 7
        %v3525 = vsub.s32 %v3522, %v3524
        %v3526 = vrot.slane %v3519, %v3525
        %v3527 = vcombine.low %v3023, %v3030
        %v3529 = vunpack.c.l.s4 1983009808
        %v3530 = vunpack.c.0.s8 %v3529
        %v3531 = vlaneseq
        %v3532 = vshrl.u32 %v3531, 7
        %v3533 = vsub.s32 %v3530, %v3532
        %v3534 = vrot.slane %v3527, %v3533
        %v3535 = vcombine.low %v3033, %v3034
        %v3537 = vunpack.c.l.s4 1983009808
        %v3538 = vunpack.c.0.s8 %v3537
        %v3539 = vlaneseq
        %v3540 = vshrl.u32 %v3539, 7
        %v3541 = vsub.s32 %v3538, %v3540
        %v3542 = vrot.slane %v3535, %v3541
        %v3543 = vcombine.low %v3518, %v3526
        %v3544 = vcombine.high %v3518, %v3526
        %v3546 = vunpack.c.l.s4 1934713408
        %v3547 = vunpack.c.0.s8 %v3546
        %v3548 = vlaneseq
        %v3549 = vshrl.u32 %v3548, 7
        %v3550 = vsub.s32 %v3547, %v3549
        %v3551 = vrot.slane %v3543, %v3550
        %v3553 = vunpack.c.l.s4 1934713408
        %v3554 = vunpack.c.0.s8 %v3553
        %v3555 = vlaneseq
        %v3556 = vshrl.u32 %v3555, 7
        %v3557 = vsub.s32 %v3554, %v3556
        %v3558 = vrot.slane %v3544, %v3557
        %v3559 = vcombine.low %v3534, %v3542
        %v3560 = vcombine.high %v3534, %v3542
        %v3562 = vunpack.c.l.s4 1934713408
        %v3563 = vunpack.c.0.s8 %v3562
        %v3564 = vlaneseq
        %v3565 = vshrl.u32 %v3564, 7
        %v3566 = vsub.s32 %v3563, %v3565
        %v3567 = vrot.slane %v3559, %v3566
        %v3569 = vunpack.c.l.s4 1934713408
        %v3570 = vunpack.c.0.s8 %v3569
        %v3571 = vlaneseq
        %v3572 = vshrl.u32 %v3571, 7
        %v3573 = vsub.s32 %v3570, %v3572
        %v3574 = vrot.slane %v3560, %v3573
        %v3575 = vcombine.low %v3551, %v3567
        %v3576 = vcombine.high %v3551, %v3567
        %v3577 = vcombine.low %v3558, %v3574
        %v3578 = vcombine.high %v3558, %v3574
        %v3579 = vcombine.low %v3075, %v3082
        %v3581 = vunpack.c.l.s4 1983009808
        %v3582 = vunpack.c.0.s8 %v3581
        %v3583 = vlaneseq
        %v3584 = vshrl.u32 %v3583, 7
        %v3585 = vsub.s32 %v3582, %v3584
        %v3586 = vrot.slane %v3579, %v3585
        %v3587 = vcombine.low %v3099, %v3100
        %v3589 = vunpack.c.l.s4 1983009808
        %v3590 = vunpack.c.0.s8 %v3589
        %v3591 = vlaneseq
        %v3592 = vshrl.u32 %v3591, 7
        %v3593 = vsub.s32 %v3590, %v3592
        %v3594 = vrot.slane %v3587, %v3593
        %v3595 = vcombine.low %v3091, %v3098
        %v3597 = vunpack.c.l.s4 1983009808
        %v3598 = vunpack.c.0.s8 %v3597
        %v3599 = vlaneseq
        %v3600 = vshrl.u32 %v3599, 7
        %v3601 = vsub.s32 %v3598, %v3600
        %v3602 = vrot.slane %v3595, %v3601
        %v3603 = vcombine.low %v3101, %v3102
        %v3605 = vunpack.c.l.s4 1983009808
        %v3606 = vunpack.c.0.s8 %v3605
        %v3607 = vlaneseq
        %v3608 = vshrl.u32 %v3607, 7
        %v3609 = vsub.s32 %v3606, %v3608
        %v3610 = vrot.slane %v3603, %v3609
        %v3611 = vcombine.low %v3586, %v3594
        %v3612 = vcombine.high %v3586, %v3594
        %v3614 = vunpack.c.l.s4 1934713408
        %v3615 = vunpack.c.0.s8 %v3614
        %v3616 = vlaneseq
        %v3617 = vshrl.u32 %v3616, 7
        %v3618 = vsub.s32 %v3615, %v3617
        %v3619 = vrot.slane %v3611, %v3618
        %v3621 = vunpack.c.l.s4 1934713408
        %v3622 = vunpack.c.0.s8 %v3621
        %v3623 = vlaneseq
        %v3624 = vshrl.u32 %v3623, 7
        %v3625 = vsub.s32 %v3622, %v3624
        %v3626 = vrot.slane %v3612, %v3625
        %v3627 = vcombine.low %v3602, %v3610
        %v3628 = vcombine.high %v3602, %v3610
        %v3630 = vunpack.c.l.s4 1934713408
        %v3631 = vunpack.c.0.s8 %v3630
        %v3632 = vlaneseq
        %v3633 = vshrl.u32 %v3632, 7
        %v3634 = vsub.s32 %v3631, %v3633
        %v3635 = vrot.slane %v3627, %v3634
        %v3637 = vunpack.c.l.s4 1934713408
        %v3638 = vunpack.c.0.s8 %v3637
        %v3639 = vlaneseq
        %v3640 = vshrl.u32 %v3639, 7
        %v3641 = vsub.s32 %v3638, %v3640
        %v3642 = vrot.slane %v3628, %v3641
        %v3643 = vcombine.low %v3619, %v3635
        %v3644 = vcombine.high %v3619, %v3635
        %v3645 = vcombine.low %v3626, %v3642
        %v3646 = vcombine.high %v3626, %v3642
        %v3647 = vcombine.low %v3143, %v3150
        %v3649 = vunpack.c.l.s4 1983009808
        %v3650 = vunpack.c.0.s8 %v3649
        %v3651 = vlaneseq
        %v3652 = vshrl.u32 %v3651, 7
        %v3653 = vsub.s32 %v3650, %v3652
        %v3654 = vrot.slane %v3647, %v3653
        %v3655 = vcombine.low %v3167, %v3168
        %v3657 = vunpack.c.l.s4 1983009808
        %v3658 = vunpack.c.0.s8 %v3657
        %v3659 = vlaneseq
        %v3660 = vshrl.u32 %v3659, 7
        %v3661 = vsub.s32 %v3658, %v3660
        %v3662 = vrot.slane %v3655, %v3661
        %v3663 = vcombine.low %v3159, %v3166
        %v3665 = vunpack.c.l.s4 1983009808
        %v3666 = vunpack.c.0.s8 %v3665
        %v3667 = vlaneseq
        %v3668 = vshrl.u32 %v3667, 7
        %v3669 = vsub.s32 %v3666, %v3668
        %v3670 = vrot.slane %v3663, %v3669
        %v3671 = vcombine.low %v3169, %v3170
        %v3673 = vunpack.c.l.s4 1983009808
        %v3674 = vunpack.c.0.s8 %v3673
        %v3675 = vlaneseq
        %v3676 = vshrl.u32 %v3675, 7
        %v3677 = vsub.s32 %v3674, %v3676
        %v3678 = vrot.slane %v3671, %v3677
        %v3679 = vcombine.low %v3654, %v3662
        %v3680 = vcombine.high %v3654, %v3662
        %v3682 = vunpack.c.l.s4 1934713408
        %v3683 = vunpack.c.0.s8 %v3682
        %v3684 = vlaneseq
        %v3685 = vshrl.u32 %v3684, 7
        %v3686 = vsub.s32 %v3683, %v3685
        %v3687 = vrot.slane %v3679, %v3686
        %v3689 = vunpack.c.l.s4 1934713408
        %v3690 = vunpack.c.0.s8 %v3689
        %v3691 = vlaneseq
        %v3692 = vshrl.u32 %v3691, 7
        %v3693 = vsub.s32 %v3690, %v3692
        %v3694 = vrot.slane %v3680, %v3693
        %v3695 = vcombine.low %v3670, %v3678
        %v3696 = vcombine.high %v3670, %v3678
        %v3698 = vunpack.c.l.s4 1934713408
        %v3699 = vunpack.c.0.s8 %v3698
        %v3700 = vlaneseq
        %v3701 = vshrl.u32 %v3700, 7
        %v3702 = vsub.s32 %v3699, %v3701
        %v3703 = vrot.slane %v3695, %v3702
        %v3705 = vunpack.c.l.s4 1934713408
        %v3706 = vunpack.c.0.s8 %v3705
        %v3707 = vlaneseq
        %v3708 = vshrl.u32 %v3707, 7
        %v3709 = vsub.s32 %v3706, %v3708
        %v3710 = vrot.slane %v3696, %v3709
        %v3711 = vcombine.low %v3687, %v3703
        %v3712 = vcombine.high %v3687, %v3703
        %v3713 = vcombine.low %v3694, %v3710
        %v3714 = vcombine.high %v3694, %v3710
        %v3715 = vcombine.low %v3211, %v3218
        %v3717 = vunpack.c.l.s4 1983009808
        %v3718 = vunpack.c.0.s8 %v3717
        %v3719 = vlaneseq
        %v3720 = vshrl.u32 %v3719, 7
        %v3721 = vsub.s32 %v3718, %v3720
        %v3722 = vrot.slane %v3715, %v3721
        %v3723 = vcombine.low %v3235, %v3236
        %v3725 = vunpack.c.l.s4 1983009808
        %v3726 = vunpack.c.0.s8 %v3725
        %v3727 = vlaneseq
        %v3728 = vshrl.u32 %v3727, 7
        %v3729 = vsub.s32 %v3726, %v3728
        %v3730 = vrot.slane %v3723, %v3729
        %v3731 = vcombine.low %v3227, %v3234
        %v3733 = vunpack.c.l.s4 1983009808
        %v3734 = vunpack.c.0.s8 %v3733
        %v3735 = vlaneseq
        %v3736 = vshrl.u32 %v3735, 7
        %v3737 = vsub.s32 %v3734, %v3736
        %v3738 = vrot.slane %v3731, %v3737
        %v3739 = vcombine.low %v3237, %v3238
        %v3741 = vunpack.c.l.s4 1983009808
        %v3742 = vunpack.c.0.s8 %v3741
        %v3743 = vlaneseq
        %v3744 = vshrl.u32 %v3743, 7
        %v3745 = vsub.s32 %v3742, %v3744
        %v3746 = vrot.slane %v3739, %v3745
        %v3747 = vcombine.low %v3722, %v3730
        %v3748 = vcombine.high %v3722, %v3730
        %v3750 = vunpack.c.l.s4 1934713408
        %v3751 = vunpack.c.0.s8 %v3750
        %v3752 = vlaneseq
        %v3753 = vshrl.u32 %v3752, 7
        %v3754 = vsub.s32 %v3751, %v3753
        %v3755 = vrot.slane %v3747, %v3754
        %v3757 = vunpack.c.l.s4 1934713408
        %v3758 = vunpack.c.0.s8 %v3757
        %v3759 = vlaneseq
        %v3760 = vshrl.u32 %v3759, 7
        %v3761 = vsub.s32 %v3758, %v3760
        %v3762 = vrot.slane %v3748, %v3761
        %v3763 = vcombine.low %v3738, %v3746
        %v3764 = vcombine.high %v3738, %v3746
        %v3766 = vunpack.c.l.s4 1934713408
        %v3767 = vunpack.c.0.s8 %v3766
        %v3768 = vlaneseq
        %v3769 = vshrl.u32 %v3768, 7
        %v3770 = vsub.s32 %v3767, %v3769
        %v3771 = vrot.slane %v3763, %v3770
        %v3773 = vunpack.c.l.s4 1934713408
        %v3774 = vunpack.c.0.s8 %v3773
        %v3775 = vlaneseq
        %v3776 = vshrl.u32 %v3775, 7
        %v3777 = vsub.s32 %v3774, %v3776
        %v3778 = vrot.slane %v3764, %v3777
        %v3779 = vcombine.low %v3755, %v3771
        %v3780 = vcombine.high %v3755, %v3771
        %v3781 = vcombine.low %v3762, %v3778
        %v3782 = vcombine.high %v3762, %v3778
        %v3783 = vcombine.low %v3279, %v3286
        %v3785 = vunpack.c.l.s4 1983009808
        %v3786 = vunpack.c.0.s8 %v3785
        %v3787 = vlaneseq
        %v3788 = vshrl.u32 %v3787, 7
        %v3789 = vsub.s32 %v3786, %v3788
        %v3790 = vrot.slane %v3783, %v3789
        %v3791 = vcombine.low %v3303, %v3304
        %v3793 = vunpack.c.l.s4 1983009808
        %v3794 = vunpack.c.0.s8 %v3793
        %v3795 = vlaneseq
        %v3796 = vshrl.u32 %v3795, 7
        %v3797 = vsub.s32 %v3794, %v3796
        %v3798 = vrot.slane %v3791, %v3797
        %v3799 = vcombine.low %v3295, %v3302
        %v3801 = vunpack.c.l.s4 1983009808
        %v3802 = vunpack.c.0.s8 %v3801
        %v3803 = vlaneseq
        %v3804 = vshrl.u32 %v3803, 7
        %v3805 = vsub.s32 %v3802, %v3804
        %v3806 = vrot.slane %v3799, %v3805
        %v3807 = vcombine.low %v3305, %v3306
        %v3809 = vunpack.c.l.s4 1983009808
        %v3810 = vunpack.c.0.s8 %v3809
        %v3811 = vlaneseq
        %v3812 = vshrl.u32 %v3811, 7
        %v3813 = vsub.s32 %v3810, %v3812
        %v3814 = vrot.slane %v3807, %v3813
        %v3815 = vcombine.low %v3790, %v3798
        %v3816 = vcombine.high %v3790, %v3798
        %v3818 = vunpack.c.l.s4 1934713408
        %v3819 = vunpack.c.0.s8 %v3818
        %v3820 = vlaneseq
        %v3821 = vshrl.u32 %v3820, 7
        %v3822 = vsub.s32 %v3819, %v3821
        %v3823 = vrot.slane %v3815, %v3822
        %v3825 = vunpack.c.l.s4 1934713408
        %v3826 = vunpack.c.0.s8 %v3825
        %v3827 = vlaneseq
        %v3828 = vshrl.u32 %v3827, 7
        %v3829 = vsub.s32 %v3826, %v3828
        %v3830 = vrot.slane %v3816, %v3829
        %v3831 = vcombine.low %v3806, %v3814
        %v3832 = vcombine.high %v3806, %v3814
        %v3834 = vunpack.c.l.s4 1934713408
        %v3835 = vunpack.c.0.s8 %v3834
        %v3836 = vlaneseq
        %v3837 = vshrl.u32 %v3836, 7
        %v3838 = vsub.s32 %v3835, %v3837
        %v3839 = vrot.slane %v3831, %v3838
        %v3841 = vunpack.c.l.s4 1934713408
        %v3842 = vunpack.c.0.s8 %v3841
        %v3843 = vlaneseq
        %v3844 = vshrl.u32 %v3843, 7
        %v3845 = vsub.s32 %v3842, %v3844
        %v3846 = vrot.slane %v3832, %v3845
        %v3847 = vcombine.low %v3823, %v3839
        %v3848 = vcombine.high %v3823, %v3839
        %v3849 = vcombine.low %v3830, %v3846
        %v3850 = vcombine.high %v3830, %v3846
        %v3851 = vcombine.low %v3347, %v3354
        %v3853 = vunpack.c.l.s4 1983009808
        %v3854 = vunpack.c.0.s8 %v3853
        %v3855 = vlaneseq
        %v3856 = vshrl.u32 %v3855, 7
        %v3857 = vsub.s32 %v3854, %v3856
        %v3858 = vrot.slane %v3851, %v3857
        %v3859 = vcombine.low %v3371, %v3372
        %v3861 = vunpack.c.l.s4 1983009808
        %v3862 = vunpack.c.0.s8 %v3861
        %v3863 = vlaneseq
        %v3864 = vshrl.u32 %v3863, 7
        %v3865 = vsub.s32 %v3862, %v3864
        %v3866 = vrot.slane %v3859, %v3865
        %v3867 = vcombine.low %v3363, %v3370
        %v3869 = vunpack.c.l.s4 1983009808
        %v3870 = vunpack.c.0.s8 %v3869
        %v3871 = vlaneseq
        %v3872 = vshrl.u32 %v3871, 7
        %v3873 = vsub.s32 %v3870, %v3872
        %v3874 = vrot.slane %v3867, %v3873
        %v3875 = vcombine.low %v3373, %v3374
        %v3877 = vunpack.c.l.s4 1983009808
        %v3878 = vunpack.c.0.s8 %v3877
        %v3879 = vlaneseq
        %v3880 = vshrl.u32 %v3879, 7
        %v3881 = vsub.s32 %v3878, %v3880
        %v3882 = vrot.slane %v3875, %v3881
        %v3883 = vcombine.low %v3858, %v3866
        %v3884 = vcombine.high %v3858, %v3866
        %v3886 = vunpack.c.l.s4 1934713408
        %v3887 = vunpack.c.0.s8 %v3886
        %v3888 = vlaneseq
        %v3889 = vshrl.u32 %v3888, 7
        %v3890 = vsub.s32 %v3887, %v3889
        %v3891 = vrot.slane %v3883, %v3890
        %v3893 = vunpack.c.l.s4 1934713408
        %v3894 = vunpack.c.0.s8 %v3893
        %v3895 = vlaneseq
        %v3896 = vshrl.u32 %v3895, 7
        %v3897 = vsub.s32 %v3894, %v3896
        %v3898 = vrot.slane %v3884, %v3897
        %v3899 = vcombine.low %v3874, %v3882
        %v3900 = vcombine.high %v3874, %v3882
        %v3902 = vunpack.c.l.s4 1934713408
        %v3903 = vunpack.c.0.s8 %v3902
        %v3904 = vlaneseq
        %v3905 = vshrl.u32 %v3904, 7
        %v3906 = vsub.s32 %v3903, %v3905
        %v3907 = vrot.slane %v3899, %v3906
        %v3909 = vunpack.c.l.s4 1934713408
        %v3910 = vunpack.c.0.s8 %v3909
        %v3911 = vlaneseq
        %v3912 = vshrl.u32 %v3911, 7
        %v3913 = vsub.s32 %v3910, %v3912
        %v3914 = vrot.slane %v3900, %v3913
        %v3915 = vcombine.low %v3891, %v3907
        %v3916 = vcombine.high %v3891, %v3907
        %v3917 = vcombine.low %v3898, %v3914
        %v3918 = vcombine.high %v3898, %v3914
        %v3919 = vcombine.low %v3415, %v3422
        %v3921 = vunpack.c.l.s4 1983009808
        %v3922 = vunpack.c.0.s8 %v3921
        %v3923 = vlaneseq
        %v3924 = vshrl.u32 %v3923, 7
        %v3925 = vsub.s32 %v3922, %v3924
        %v3926 = vrot.slane %v3919, %v3925
        %v3927 = vcombine.low %v3439, %v3440
        %v3929 = vunpack.c.l.s4 1983009808
        %v3930 = vunpack.c.0.s8 %v3929
        %v3931 = vlaneseq
        %v3932 = vshrl.u32 %v3931, 7
        %v3933 = vsub.s32 %v3930, %v3932
        %v3934 = vrot.slane %v3927, %v3933
        %v3935 = vcombine.low %v3431, %v3438
        %v3937 = vunpack.c.l.s4 1983009808
        %v3938 = vunpack.c.0.s8 %v3937
        %v3939 = vlaneseq
        %v3940 = vshrl.u32 %v3939, 7
        %v3941 = vsub.s32 %v3938, %v3940
        %v3942 = vrot.slane %v3935, %v3941
        %v3943 = vcombine.low %v3441, %v3442
        %v3945 = vunpack.c.l.s4 1983009808
        %v3946 = vunpack.c.0.s8 %v3945
        %v3947 = vlaneseq
        %v3948 = vshrl.u32 %v3947, 7
        %v3949 = vsub.s32 %v3946, %v3948
        %v3950 = vrot.slane %v3943, %v3949
        %v3951 = vcombine.low %v3926, %v3934
        %v3952 = vcombine.high %v3926, %v3934
        %v3954 = vunpack.c.l.s4 1934713408
        %v3955 = vunpack.c.0.s8 %v3954
        %v3956 = vlaneseq
        %v3957 = vshrl.u32 %v3956, 7
        %v3958 = vsub.s32 %v3955, %v3957
        %v3959 = vrot.slane %v3951, %v3958
        %v3961 = vunpack.c.l.s4 1934713408
        %v3962 = vunpack.c.0.s8 %v3961
        %v3963 = vlaneseq
        %v3964 = vshrl.u32 %v3963, 7
        %v3965 = vsub.s32 %v3962, %v3964
        %v3966 = vrot.slane %v3952, %v3965
        %v3967 = vcombine.low %v3942, %v3950
        %v3968 = vcombine.high %v3942, %v3950
        %v3970 = vunpack.c.l.s4 1934713408
        %v3971 = vunpack.c.0.s8 %v3970
        %v3972 = vlaneseq
        %v3973 = vshrl.u32 %v3972, 7
        %v3974 = vsub.s32 %v3971, %v3973
        %v3975 = vrot.slane %v3967, %v3974
        %v3977 = vunpack.c.l.s4 1934713408
        %v3978 = vunpack.c.0.s8 %v3977
        %v3979 = vlaneseq
        %v3980 = vshrl.u32 %v3979, 7
        %v3981 = vsub.s32 %v3978, %v3980
        %v3982 = vrot.slane %v3968, %v3981
        %v3983 = vcombine.low %v3959, %v3975
        %v3984 = vcombine.high %v3959, %v3975
        %v3985 = vcombine.low %v3966, %v3982
        %v3986 = vcombine.high %v3966, %v3982
        %v3987 = vcombine.low %v3483, %v3490
        %v3989 = vunpack.c.l.s4 1983009808
        %v3990 = vunpack.c.0.s8 %v3989
        %v3991 = vlaneseq
        %v3992 = vshrl.u32 %v3991, 7
        %v3993 = vsub.s32 %v3990, %v3992
        %v3994 = vrot.slane %v3987, %v3993
        %v3995 = vcombine.low %v3507, %v3508
        %v3997 = vunpack.c.l.s4 1983009808
        %v3998 = vunpack.c.0.s8 %v3997
        %v3999 = vlaneseq
        %v4000 = vshrl.u32 %v3999, 7
        %v4001 = vsub.s32 %v3998, %v4000
        %v4002 = vrot.slane %v3995, %v4001
        %v4003 = vcombine.low %v3499, %v3506
        %v4005 = vunpack.c.l.s4 1983009808
        %v4006 = vunpack.c.0.s8 %v4005
        %v4007 = vlaneseq
        %v4008 = vshrl.u32 %v4007, 7
        %v4009 = vsub.s32 %v4006, %v4008
        %v4010 = vrot.slane %v4003, %v4009
        %v4011 = vcombine.low %v3509, %v3510
        %v4013 = vunpack.c.l.s4 1983009808
        %v4014 = vunpack.c.0.s8 %v4013
        %v4015 = vlaneseq
        %v4016 = vshrl.u32 %v4015, 7
        %v4017 = vsub.s32 %v4014, %v4016
        %v4018 = vrot.slane %v4011, %v4017
        %v4019 = vcombine.low %v3994, %v4002
        %v4020 = vcombine.high %v3994, %v4002
        %v4022 = vunpack.c.l.s4 1934713408
        %v4023 = vunpack.c.0.s8 %v4022
        %v4024 = vlaneseq
        %v4025 = vshrl.u32 %v4024, 7
        %v4026 = vsub.s32 %v4023, %v4025
        %v4027 = vrot.slane %v4019, %v4026
        %v4029 = vunpack.c.l.s4 1934713408
        %v4030 = vunpack.c.0.s8 %v4029
        %v4031 = vlaneseq
        %v4032 = vshrl.u32 %v4031, 7
        %v4033 = vsub.s32 %v4030, %v4032
        %v4034 = vrot.slane %v4020, %v4033
        %v4035 = vcombine.low %v4010, %v4018
        %v4036 = vcombine.high %v4010, %v4018
        %v4038 = vunpack.c.l.s4 1934713408
        %v4039 = vunpack.c.0.s8 %v4038
        %v4040 = vlaneseq
        %v4041 = vshrl.u32 %v4040, 7
        %v4042 = vsub.s32 %v4039, %v4041
        %v4043 = vrot.slane %v4035, %v4042
        %v4045 = vunpack.c.l.s4 1934713408
        %v4046 = vunpack.c.0.s8 %v4045
        %v4047 = vlaneseq
        %v4048 = vshrl.u32 %v4047, 7
        %v4049 = vsub.s32 %v4046, %v4048
        %v4050 = vrot.slane %v4036, %v4049
        %v4051 = vcombine.low %v4027, %v4043
        %v4052 = vcombine.high %v4027, %v4043
        %v4053 = vcombine.low %v4034, %v4050
        %v4054 = vcombine.high %v4034, %v4050
        %vm4055 = vcmask 261120
        %v4057 = vsel %vm4055, %v1687, 0
        %v4060 = vsel %vm4055, %v1688, 0
        %v4063 = vsel %vm4055, %v1689, 0
        %v4066 = vsel %vm4055, %v1690, 0
        %v4069 = vsel %vm4055, %v1691, 0
        %v4072 = vsel %vm4055, %v1692, 0
        %v4075 = vsel %vm4055, %v1693, 0
        %v4078 = vsel %vm4055, %v1694, 0
        %v4081 = vsel %vm4055, %v2407, 0
        %v4084 = vsel %vm4055, %v2475, 0
        %v4087 = vsel %vm4055, %v2543, 0
        %v4090 = vsel %vm4055, %v2611, 0
        %v4093 = vsel %vm4055, %v2679, 0
        %v4096 = vsel %vm4055, %v2747, 0
        %v4099 = vsel %vm4055, %v2815, 0
        %v4102 = vsel %vm4055, %v2883, 0
        %4104 = vmatprep.subr.mxu0 0.0
        %4105 = vmatpush1.xpose.msra.mxu0 0.0
        %4106 = vmatprep.subr.mxu0 0.0
        %4107 = vmatpush1.xpose.msra.mxu0 0.0
        %4108 = vmatprep.subr.mxu0 0.0
        %4109 = vmatpush1.xpose.msra.mxu0 0.0
        %4110 = vmatprep.subr.mxu0 0.0
        %4111 = vmatpush1.xpose.msra.mxu0 0.0
        %4112 = vmatprep.subr.mxu0 0.0
        %4113 = vmatpush1.xpose.msra.mxu0 0.0
        %4114 = vmatprep.subr.mxu0 0.0
        %4115 = vmatpush1.xpose.msra.mxu0 0.0
        %4116 = vmatprep.subr.mxu0 0.0
        %4117 = vmatpush1.xpose.msra.mxu0 0.0
        %4118 = vmatprep.subr.mxu0 0.0
        %4119 = vmatpush1.xpose.msra.mxu0 0.0
        %4120 = vmatprep.subr.mxu0 0.0
        %4121 = vmatpush1.xpose.msra.mxu0 %v4102
        %4122 = vmatprep.subr.mxu0 0.0
        %4123 = vmatpush1.xpose.msra.mxu0 %v4099
        %4124 = vmatprep.subr.mxu0 0.0
        %4125 = vmatpush1.xpose.msra.mxu0 %v4096
        %4126 = vmatprep.subr.mxu0 0.0
        %4127 = vmatpush1.xpose.msra.mxu0 %v4093
        %4128 = vmatprep.subr.mxu0 0.0
        %4129 = vmatpush1.xpose.msra.mxu0 %v4090
        %4130 = vmatprep.subr.mxu0 0.0
        %4131 = vmatpush1.xpose.msra.mxu0 %v4087
        %4132 = vmatprep.subr.mxu0 0.0
        %4133 = vmatpush1.xpose.msra.mxu0 %v4084
        %4134 = vmatprep.subr.mxu0 0.0
        %4135 = vmatpush1.xpose.msra.mxu0 %v4081
        %4136 = vmatprep.subr.mxu0 0.0
        %4137 = vmatpush2.xpose.msra.mxu0 0.0
        %4138 = vmatprep.subr.mxu0 0.0
        %4139 = vmatpush2.xpose.msra.mxu0 0.0
        %4140 = vmatprep.subr.mxu0 0.0
        %4141 = vmatpush2.xpose.msra.mxu0 0.0
        %4142 = vmatprep.subr.mxu0 0.0
        %4143 = vmatpush2.xpose.msra.mxu0 0.0
        %4144 = vmatprep.subr.mxu0 0.0
        %4145 = vmatpush2.xpose.msra.mxu0 0.0
        %4146 = vmatprep.subr.mxu0 0.0
        %4147 = vmatpush2.xpose.msra.mxu0 0.0
        %4148 = vmatprep.subr.mxu0 0.0
        %4149 = vmatpush2.xpose.msra.mxu0 0.0
        %4150 = vmatprep.subr.mxu0 0.0
        %4151 = vmatpush2.xpose.msra.mxu0 0.0
        %4152 = vmatprep.subr.mxu0 0.0
        %4153 = vmatpush2.xpose.msra.mxu0 0.0
        %4154 = vmatprep.subr.mxu0 0.0
        %4155 = vmatpush2.xpose.msra.mxu0 0.0
        %4156 = vmatprep.subr.mxu0 0.0
        %4157 = vmatpush2.xpose.msra.mxu0 0.0
        %4158 = vmatprep.subr.mxu0 0.0
        %4159 = vmatpush2.xpose.msra.mxu0 0.0
        %4160 = vmatprep.subr.mxu0 0.0
        %4161 = vmatpush2.xpose.msra.mxu0 0.0
        %4162 = vmatprep.subr.mxu0 0.0
        %4163 = vmatpush2.xpose.msra.mxu0 0.0
        %4164 = vmatprep.subr.mxu0 0.0
        %4165 = vmatpush2.xpose.msra.mxu0 0.0
        %4166 = vmatprep.subr.mxu0 0.0
        %4167 = vmatpush2.xpose.msra.mxu0 0.0
        %4168 = vmatprep.mubr.f32.mxu0 0.0
        %4169 = vmatmul.mubr.f32.gmra.mxu0 %v4057
        %v4170 = vpop.f32.mrf.mxu0
        %v4171 = vadd.f32 0.0, %v4170
        %v4172 = vpop.f32.mrf.mxu0
        %4173 = vmatprep.mubr.f32.mxu0 0.0
        %4174 = vmatmul.mubr.f32.gmra.mxu0 %v4060
        %v4175 = vpop.f32.mrf.mxu0
        %v4176 = vadd.f32 0.0, %v4175
        %v4177 = vpop.f32.mrf.mxu0
        %4178 = vmatprep.mubr.f32.mxu0 0.0
        %4179 = vmatmul.mubr.f32.gmra.mxu0 %v4063
        %v4180 = vpop.f32.mrf.mxu0
        %v4181 = vadd.f32 0.0, %v4180
        %v4182 = vpop.f32.mrf.mxu0
        %4183 = vmatprep.mubr.f32.mxu0 0.0
        %4184 = vmatmul.mubr.f32.gmra.mxu0 %v4066
        %v4185 = vpop.f32.mrf.mxu0
        %v4186 = vadd.f32 0.0, %v4185
        %v4187 = vpop.f32.mrf.mxu0
        %4188 = vmatprep.mubr.f32.mxu0 0.0
        %4189 = vmatmul.mubr.f32.gmra.mxu0 %v4069
        %v4190 = vpop.f32.mrf.mxu0
        %v4191 = vadd.f32 0.0, %v4190
        %v4192 = vpop.f32.mrf.mxu0
        %4193 = vmatprep.mubr.f32.mxu0 0.0
        %4194 = vmatmul.mubr.f32.gmra.mxu0 %v4072
        %v4195 = vpop.f32.mrf.mxu0
        %v4196 = vadd.f32 0.0, %v4195
        %v4197 = vpop.f32.mrf.mxu0
        %4198 = vmatprep.mubr.f32.mxu0 0.0
        %4199 = vmatmul.mubr.f32.gmra.mxu0 %v4075
        %v4200 = vpop.f32.mrf.mxu0
        %v4201 = vadd.f32 0.0, %v4200
        %v4202 = vpop.f32.mrf.mxu0
        %4203 = vmatprep.mubr.f32.mxu0 0.0
        %4204 = vmatmul.mubr.f32.gmra.mxu0 %v4078
        %v4205 = vpop.f32.mrf.mxu0
        %v4206 = vadd.f32 0.0, %v4205
        %v4207 = vpop.f32.mrf.mxu0
        %4208 = vdwg.mxu0
        %v4210 = vsel %vm4055, %v1695, 0
        %v4213 = vsel %vm4055, %v1696, 0
        %v4216 = vsel %vm4055, %v1697, 0
        %v4219 = vsel %vm4055, %v1698, 0
        %v4222 = vsel %vm4055, %v1699, 0
        %v4225 = vsel %vm4055, %v1700, 0
        %v4228 = vsel %vm4055, %v1701, 0
        %v4231 = vsel %vm4055, %v1702, 0
        %v4234 = vsel %vm4055, %v2408, 0
        %v4237 = vsel %vm4055, %v2476, 0
        %v4240 = vsel %vm4055, %v2544, 0
        %v4243 = vsel %vm4055, %v2612, 0
        %v4246 = vsel %vm4055, %v2680, 0
        %v4249 = vsel %vm4055, %v2748, 0
        %v4252 = vsel %vm4055, %v2816, 0
        %v4255 = vsel %vm4055, %v2884, 0
        %4257 = vmatprep.subr.mxu0 0.0
        %4258 = vmatpush1.xpose.msra.mxu0 0.0
        %4259 = vmatprep.subr.mxu0 0.0
        %4260 = vmatpush1.xpose.msra.mxu0 0.0
        %4261 = vmatprep.subr.mxu0 0.0
        %4262 = vmatpush1.xpose.msra.mxu0 0.0
        %4263 = vmatprep.subr.mxu0 0.0
        %4264 = vmatpush1.xpose.msra.mxu0 0.0
        %4265 = vmatprep.subr.mxu0 0.0
        %4266 = vmatpush1.xpose.msra.mxu0 0.0
        %4267 = vmatprep.subr.mxu0 0.0
        %4268 = vmatpush1.xpose.msra.mxu0 0.0
        %4269 = vmatprep.subr.mxu0 0.0
        %4270 = vmatpush1.xpose.msra.mxu0 0.0
        %4271 = vmatprep.subr.mxu0 0.0
        %4272 = vmatpush1.xpose.msra.mxu0 0.0
        %4273 = vmatprep.subr.mxu0 0.0
        %4274 = vmatpush1.xpose.msra.mxu0 %v4255
        %4275 = vmatprep.subr.mxu0 0.0
        %4276 = vmatpush1.xpose.msra.mxu0 %v4252
        %4277 = vmatprep.subr.mxu0 0.0
        %4278 = vmatpush1.xpose.msra.mxu0 %v4249
        %4279 = vmatprep.subr.mxu0 0.0
        %4280 = vmatpush1.xpose.msra.mxu0 %v4246
        %4281 = vmatprep.subr.mxu0 0.0
        %4282 = vmatpush1.xpose.msra.mxu0 %v4243
        %4283 = vmatprep.subr.mxu0 0.0
        %4284 = vmatpush1.xpose.msra.mxu0 %v4240
        %4285 = vmatprep.subr.mxu0 0.0
        %4286 = vmatpush1.xpose.msra.mxu0 %v4237
        %4287 = vmatprep.subr.mxu0 0.0
        %4288 = vmatpush1.xpose.msra.mxu0 %v4234
        %4289 = vmatprep.subr.mxu0 0.0
        %4290 = vmatpush2.xpose.msra.mxu0 0.0
        %4291 = vmatprep.subr.mxu0 0.0
        %4292 = vmatpush2.xpose.msra.mxu0 0.0
        %4293 = vmatprep.subr.mxu0 0.0
        %4294 = vmatpush2.xpose.msra.mxu0 0.0
        %4295 = vmatprep.subr.mxu0 0.0
        %4296 = vmatpush2.xpose.msra.mxu0 0.0
        %4297 = vmatprep.subr.mxu0 0.0
        %4298 = vmatpush2.xpose.msra.mxu0 0.0
        %4299 = vmatprep.subr.mxu0 0.0
        %4300 = vmatpush2.xpose.msra.mxu0 0.0
        %4301 = vmatprep.subr.mxu0 0.0
        %4302 = vmatpush2.xpose.msra.mxu0 0.0
        %4303 = vmatprep.subr.mxu0 0.0
        %4304 = vmatpush2.xpose.msra.mxu0 0.0
        %4305 = vmatprep.subr.mxu0 0.0
        %4306 = vmatpush2.xpose.msra.mxu0 0.0
        %4307 = vmatprep.subr.mxu0 0.0
        %4308 = vmatpush2.xpose.msra.mxu0 0.0
        %4309 = vmatprep.subr.mxu0 0.0
        %4310 = vmatpush2.xpose.msra.mxu0 0.0
        %4311 = vmatprep.subr.mxu0 0.0
        %4312 = vmatpush2.xpose.msra.mxu0 0.0
        %4313 = vmatprep.subr.mxu0 0.0
        %4314 = vmatpush2.xpose.msra.mxu0 0.0
        %4315 = vmatprep.subr.mxu0 0.0
        %4316 = vmatpush2.xpose.msra.mxu0 0.0
        %4317 = vmatprep.subr.mxu0 0.0
        %4318 = vmatpush2.xpose.msra.mxu0 0.0
        %4319 = vmatprep.subr.mxu0 0.0
        %4320 = vmatpush2.xpose.msra.mxu0 0.0
        %4321 = vmatprep.mubr.f32.mxu0 0.0
        %4322 = vmatmul.mubr.f32.gmra.mxu0 %v4210
        %v4323 = vpop.f32.mrf.mxu0
        %v4324 = vadd.f32 0.0, %v4323
        %v4325 = vpop.f32.mrf.mxu0
        %4326 = vmatprep.mubr.f32.mxu0 0.0
        %4327 = vmatmul.mubr.f32.gmra.mxu0 %v4213
        %v4328 = vpop.f32.mrf.mxu0
        %v4329 = vadd.f32 0.0, %v4328
        %v4330 = vpop.f32.mrf.mxu0
        %4331 = vmatprep.mubr.f32.mxu0 0.0
        %4332 = vmatmul.mubr.f32.gmra.mxu0 %v4216
        %v4333 = vpop.f32.mrf.mxu0
        %v4334 = vadd.f32 0.0, %v4333
        %v4335 = vpop.f32.mrf.mxu0
        %4336 = vmatprep.mubr.f32.mxu0 0.0
        %4337 = vmatmul.mubr.f32.gmra.mxu0 %v4219
        %v4338 = vpop.f32.mrf.mxu0
        %v4339 = vadd.f32 0.0, %v4338
        %v4340 = vpop.f32.mrf.mxu0
        %4341 = vmatprep.mubr.f32.mxu0 0.0
        %4342 = vmatmul.mubr.f32.gmra.mxu0 %v4222
        %v4343 = vpop.f32.mrf.mxu0
        %v4344 = vadd.f32 0.0, %v4343
        %v4345 = vpop.f32.mrf.mxu0
        %4346 = vmatprep.mubr.f32.mxu0 0.0
        %4347 = vmatmul.mubr.f32.gmra.mxu0 %v4225
        %v4348 = vpop.f32.mrf.mxu0
        %v4349 = vadd.f32 0.0, %v4348
        %v4350 = vpop.f32.mrf.mxu0
        %4351 = vmatprep.mubr.f32.mxu0 0.0
        %4352 = vmatmul.mubr.f32.gmra.mxu0 %v4228
        %v4353 = vpop.f32.mrf.mxu0
        %v4354 = vadd.f32 0.0, %v4353
        %v4355 = vpop.f32.mrf.mxu0
        %4356 = vmatprep.mubr.f32.mxu0 0.0
        %4357 = vmatmul.mubr.f32.gmra.mxu0 %v4231
        %v4358 = vpop.f32.mrf.mxu0
        %v4359 = vadd.f32 0.0, %v4358
        %v4360 = vpop.f32.mrf.mxu0
        %4361 = vdwg.mxu0
        %v4363 = vsel %vm4055, %v1703, 0
        %v4366 = vsel %vm4055, %v1704, 0
        %v4369 = vsel %vm4055, %v1705, 0
        %v4372 = vsel %vm4055, %v1706, 0
        %v4375 = vsel %vm4055, %v1707, 0
        %v4378 = vsel %vm4055, %v1708, 0
        %v4381 = vsel %vm4055, %v1709, 0
        %v4384 = vsel %vm4055, %v1710, 0
        %v4387 = vsel %vm4055, %v2409, 0
        %v4390 = vsel %vm4055, %v2477, 0
        %v4393 = vsel %vm4055, %v2545, 0
        %v4396 = vsel %vm4055, %v2613, 0
        %v4399 = vsel %vm4055, %v2681, 0
        %v4402 = vsel %vm4055, %v2749, 0
        %v4405 = vsel %vm4055, %v2817, 0
        %v4408 = vsel %vm4055, %v2885, 0
        %4410 = vmatprep.subr.mxu0 0.0
        %4411 = vmatpush1.xpose.msra.mxu0 0.0
        %4412 = vmatprep.subr.mxu0 0.0
        %4413 = vmatpush1.xpose.msra.mxu0 0.0
        %4414 = vmatprep.subr.mxu0 0.0
        %4415 = vmatpush1.xpose.msra.mxu0 0.0
        %4416 = vmatprep.subr.mxu0 0.0
        %4417 = vmatpush1.xpose.msra.mxu0 0.0
        %4418 = vmatprep.subr.mxu0 0.0
        %4419 = vmatpush1.xpose.msra.mxu0 0.0
        %4420 = vmatprep.subr.mxu0 0.0
        %4421 = vmatpush1.xpose.msra.mxu0 0.0
        %4422 = vmatprep.subr.mxu0 0.0
        %4423 = vmatpush1.xpose.msra.mxu0 0.0
        %4424 = vmatprep.subr.mxu0 0.0
        %4425 = vmatpush1.xpose.msra.mxu0 0.0
        %4426 = vmatprep.subr.mxu0 0.0
        %4427 = vmatpush1.xpose.msra.mxu0 %v4408
        %4428 = vmatprep.subr.mxu0 0.0
        %4429 = vmatpush1.xpose.msra.mxu0 %v4405
        %4430 = vmatprep.subr.mxu0 0.0
        %4431 = vmatpush1.xpose.msra.mxu0 %v4402
        %4432 = vmatprep.subr.mxu0 0.0
        %4433 = vmatpush1.xpose.msra.mxu0 %v4399
        %4434 = vmatprep.subr.mxu0 0.0
        %4435 = vmatpush1.xpose.msra.mxu0 %v4396
        %4436 = vmatprep.subr.mxu0 0.0
        %4437 = vmatpush1.xpose.msra.mxu0 %v4393
        %4438 = vmatprep.subr.mxu0 0.0
        %4439 = vmatpush1.xpose.msra.mxu0 %v4390
        %4440 = vmatprep.subr.mxu0 0.0
        %4441 = vmatpush1.xpose.msra.mxu0 %v4387
        %4442 = vmatprep.subr.mxu0 0.0
        %4443 = vmatpush2.xpose.msra.mxu0 0.0
        %4444 = vmatprep.subr.mxu0 0.0
        %4445 = vmatpush2.xpose.msra.mxu0 0.0
        %4446 = vmatprep.subr.mxu0 0.0
        %4447 = vmatpush2.xpose.msra.mxu0 0.0
        %4448 = vmatprep.subr.mxu0 0.0
        %4449 = vmatpush2.xpose.msra.mxu0 0.0
        %4450 = vmatprep.subr.mxu0 0.0
        %4451 = vmatpush2.xpose.msra.mxu0 0.0
        %4452 = vmatprep.subr.mxu0 0.0
        %4453 = vmatpush2.xpose.msra.mxu0 0.0
        %4454 = vmatprep.subr.mxu0 0.0
        %4455 = vmatpush2.xpose.msra.mxu0 0.0
        %4456 = vmatprep.subr.mxu0 0.0
        %4457 = vmatpush2.xpose.msra.mxu0 0.0
        %4458 = vmatprep.subr.mxu0 0.0
        %4459 = vmatpush2.xpose.msra.mxu0 0.0
        %4460 = vmatprep.subr.mxu0 0.0
        %4461 = vmatpush2.xpose.msra.mxu0 0.0
        %4462 = vmatprep.subr.mxu0 0.0
        %4463 = vmatpush2.xpose.msra.mxu0 0.0
        %4464 = vmatprep.subr.mxu0 0.0
        %4465 = vmatpush2.xpose.msra.mxu0 0.0
        %4466 = vmatprep.subr.mxu0 0.0
        %4467 = vmatpush2.xpose.msra.mxu0 0.0
        %4468 = vmatprep.subr.mxu0 0.0
        %4469 = vmatpush2.xpose.msra.mxu0 0.0
        %4470 = vmatprep.subr.mxu0 0.0
        %4471 = vmatpush2.xpose.msra.mxu0 0.0
        %4472 = vmatprep.subr.mxu0 0.0
        %4473 = vmatpush2.xpose.msra.mxu0 0.0
        %4474 = vmatprep.mubr.f32.mxu0 0.0
        %4475 = vmatmul.mubr.f32.gmra.mxu0 %v4363
        %v4476 = vpop.f32.mrf.mxu0
        %v4477 = vadd.f32 0.0, %v4476
        %v4478 = vpop.f32.mrf.mxu0
        %4479 = vmatprep.mubr.f32.mxu0 0.0
        %4480 = vmatmul.mubr.f32.gmra.mxu0 %v4366
        %v4481 = vpop.f32.mrf.mxu0
        %v4482 = vadd.f32 0.0, %v4481
        %v4483 = vpop.f32.mrf.mxu0
        %4484 = vmatprep.mubr.f32.mxu0 0.0
        %4485 = vmatmul.mubr.f32.gmra.mxu0 %v4369
        %v4486 = vpop.f32.mrf.mxu0
        %v4487 = vadd.f32 0.0, %v4486
        %v4488 = vpop.f32.mrf.mxu0
        %4489 = vmatprep.mubr.f32.mxu0 0.0
        %4490 = vmatmul.mubr.f32.gmra.mxu0 %v4372
        %v4491 = vpop.f32.mrf.mxu0
        %v4492 = vadd.f32 0.0, %v4491
        %v4493 = vpop.f32.mrf.mxu0
        %4494 = vmatprep.mubr.f32.mxu0 0.0
        %4495 = vmatmul.mubr.f32.gmra.mxu0 %v4375
        %v4496 = vpop.f32.mrf.mxu0
        %v4497 = vadd.f32 0.0, %v4496
        %v4498 = vpop.f32.mrf.mxu0
        %4499 = vmatprep.mubr.f32.mxu0 0.0
        %4500 = vmatmul.mubr.f32.gmra.mxu0 %v4378
        %v4501 = vpop.f32.mrf.mxu0
        %v4502 = vadd.f32 0.0, %v4501
        %v4503 = vpop.f32.mrf.mxu0
        %4504 = vmatprep.mubr.f32.mxu0 0.0
        %4505 = vmatmul.mubr.f32.gmra.mxu0 %v4381
        %v4506 = vpop.f32.mrf.mxu0
        %v4507 = vadd.f32 0.0, %v4506
        %v4508 = vpop.f32.mrf.mxu0
        %4509 = vmatprep.mubr.f32.mxu0 0.0
        %4510 = vmatmul.mubr.f32.gmra.mxu0 %v4384
        %v4511 = vpop.f32.mrf.mxu0
        %v4512 = vadd.f32 0.0, %v4511
        %v4513 = vpop.f32.mrf.mxu0
        %4514 = vdwg.mxu0
        %v4516 = vsel %vm4055, %v1711, 0
        %v4519 = vsel %vm4055, %v1712, 0
        %v4522 = vsel %vm4055, %v1713, 0
        %v4525 = vsel %vm4055, %v1714, 0
        %v4528 = vsel %vm4055, %v1715, 0
        %v4531 = vsel %vm4055, %v1716, 0
        %v4534 = vsel %vm4055, %v1717, 0
        %v4537 = vsel %vm4055, %v1718, 0
        %v4540 = vsel %vm4055, %v2410, 0
        %v4543 = vsel %vm4055, %v2478, 0
        %v4546 = vsel %vm4055, %v2546, 0
        %v4549 = vsel %vm4055, %v2614, 0
        %v4552 = vsel %vm4055, %v2682, 0
        %v4555 = vsel %vm4055, %v2750, 0
        %v4558 = vsel %vm4055, %v2818, 0
        %v4561 = vsel %vm4055, %v2886, 0
        %4563 = vmatprep.subr.mxu0 0.0
        %4564 = vmatpush1.xpose.msra.mxu0 0.0
        %4565 = vmatprep.subr.mxu0 0.0
        %4566 = vmatpush1.xpose.msra.mxu0 0.0
        %4567 = vmatprep.subr.mxu0 0.0
        %4568 = vmatpush1.xpose.msra.mxu0 0.0
        %4569 = vmatprep.subr.mxu0 0.0
        %4570 = vmatpush1.xpose.msra.mxu0 0.0
        %4571 = vmatprep.subr.mxu0 0.0
        %4572 = vmatpush1.xpose.msra.mxu0 0.0
        %4573 = vmatprep.subr.mxu0 0.0
        %4574 = vmatpush1.xpose.msra.mxu0 0.0
        %4575 = vmatprep.subr.mxu0 0.0
        %4576 = vmatpush1.xpose.msra.mxu0 0.0
        %4577 = vmatprep.subr.mxu0 0.0
        %4578 = vmatpush1.xpose.msra.mxu0 0.0
        %4579 = vmatprep.subr.mxu0 0.0
        %4580 = vmatpush1.xpose.msra.mxu0 %v4561
        %4581 = vmatprep.subr.mxu0 0.0
        %4582 = vmatpush1.xpose.msra.mxu0 %v4558
        %4583 = vmatprep.subr.mxu0 0.0
        %4584 = vmatpush1.xpose.msra.mxu0 %v4555
        %4585 = vmatprep.subr.mxu0 0.0
        %4586 = vmatpush1.xpose.msra.mxu0 %v4552
        %4587 = vmatprep.subr.mxu0 0.0
        %4588 = vmatpush1.xpose.msra.mxu0 %v4549
        %4589 = vmatprep.subr.mxu0 0.0
        %4590 = vmatpush1.xpose.msra.mxu0 %v4546
        %4591 = vmatprep.subr.mxu0 0.0
        %4592 = vmatpush1.xpose.msra.mxu0 %v4543
        %4593 = vmatprep.subr.mxu0 0.0
        %4594 = vmatpush1.xpose.msra.mxu0 %v4540
        %4595 = vmatprep.subr.mxu0 0.0
        %4596 = vmatpush2.xpose.msra.mxu0 0.0
        %4597 = vmatprep.subr.mxu0 0.0
        %4598 = vmatpush2.xpose.msra.mxu0 0.0
        %4599 = vmatprep.subr.mxu0 0.0
        %4600 = vmatpush2.xpose.msra.mxu0 0.0
        %4601 = vmatprep.subr.mxu0 0.0
        %4602 = vmatpush2.xpose.msra.mxu0 0.0
        %4603 = vmatprep.subr.mxu0 0.0
        %4604 = vmatpush2.xpose.msra.mxu0 0.0
        %4605 = vmatprep.subr.mxu0 0.0
        %4606 = vmatpush2.xpose.msra.mxu0 0.0
        %4607 = vmatprep.subr.mxu0 0.0
        %4608 = vmatpush2.xpose.msra.mxu0 0.0
        %4609 = vmatprep.subr.mxu0 0.0
        %4610 = vmatpush2.xpose.msra.mxu0 0.0
        %4611 = vmatprep.subr.mxu0 0.0
        %4612 = vmatpush2.xpose.msra.mxu0 0.0
        %4613 = vmatprep.subr.mxu0 0.0
        %4614 = vmatpush2.xpose.msra.mxu0 0.0
        %4615 = vmatprep.subr.mxu0 0.0
        %4616 = vmatpush2.xpose.msra.mxu0 0.0
        %4617 = vmatprep.subr.mxu0 0.0
        %4618 = vmatpush2.xpose.msra.mxu0 0.0
        %4619 = vmatprep.subr.mxu0 0.0
        %4620 = vmatpush2.xpose.msra.mxu0 0.0
        %4621 = vmatprep.subr.mxu0 0.0
        %4622 = vmatpush2.xpose.msra.mxu0 0.0
        %4623 = vmatprep.subr.mxu0 0.0
        %4624 = vmatpush2.xpose.msra.mxu0 0.0
        %4625 = vmatprep.subr.mxu0 0.0
        %4626 = vmatpush2.xpose.msra.mxu0 0.0
        %4627 = vmatprep.mubr.f32.mxu0 0.0
        %4628 = vmatmul.mubr.f32.gmra.mxu0 %v4516
        %v4629 = vpop.f32.mrf.mxu0
        %v4630 = vadd.f32 0.0, %v4629
        %v4631 = vpop.f32.mrf.mxu0
        %4632 = vmatprep.mubr.f32.mxu0 0.0
        %4633 = vmatmul.mubr.f32.gmra.mxu0 %v4519
        %v4634 = vpop.f32.mrf.mxu0
        %v4635 = vadd.f32 0.0, %v4634
        %v4636 = vpop.f32.mrf.mxu0
        %4637 = vmatprep.mubr.f32.mxu0 0.0
        %4638 = vmatmul.mubr.f32.gmra.mxu0 %v4522
        %v4639 = vpop.f32.mrf.mxu0
        %v4640 = vadd.f32 0.0, %v4639
        %v4641 = vpop.f32.mrf.mxu0
        %4642 = vmatprep.mubr.f32.mxu0 0.0
        %4643 = vmatmul.mubr.f32.gmra.mxu0 %v4525
        %v4644 = vpop.f32.mrf.mxu0
        %v4645 = vadd.f32 0.0, %v4644
        %v4646 = vpop.f32.mrf.mxu0
        %4647 = vmatprep.mubr.f32.mxu0 0.0
        %4648 = vmatmul.mubr.f32.gmra.mxu0 %v4528
        %v4649 = vpop.f32.mrf.mxu0
        %v4650 = vadd.f32 0.0, %v4649
        %v4651 = vpop.f32.mrf.mxu0
        %4652 = vmatprep.mubr.f32.mxu0 0.0
        %4653 = vmatmul.mubr.f32.gmra.mxu0 %v4531
        %v4654 = vpop.f32.mrf.mxu0
        %v4655 = vadd.f32 0.0, %v4654
        %v4656 = vpop.f32.mrf.mxu0
        %4657 = vmatprep.mubr.f32.mxu0 0.0
        %4658 = vmatmul.mubr.f32.gmra.mxu0 %v4534
        %v4659 = vpop.f32.mrf.mxu0
        %v4660 = vadd.f32 0.0, %v4659
        %v4661 = vpop.f32.mrf.mxu0
        %4662 = vmatprep.mubr.f32.mxu0 0.0
        %4663 = vmatmul.mubr.f32.gmra.mxu0 %v4537
        %v4664 = vpop.f32.mrf.mxu0
        %v4665 = vadd.f32 0.0, %v4664
        %v4666 = vpop.f32.mrf.mxu0
        %4667 = vdwg.mxu0
        %vm4668 = vcmask 523264
        %v4669 = vsel %vm4668, %v4171, -inf
        %4670 = vmax.xlane.f32.xlu0 %v4669
        %v4671 = vpop.xlane.xlu0 %4670
        %v4672 = vsel %vm4668, %v4176, -inf
        %4673 = vmax.xlane.f32.xlu0 %v4672
        %v4674 = vpop.xlane.xlu0 %4673
        %v4675 = vsel %vm4668, %v4181, -inf
        %4676 = vmax.xlane.f32.xlu0 %v4675
        %v4677 = vpop.xlane.xlu0 %4676
        %v4678 = vsel %vm4668, %v4186, -inf
        %4679 = vmax.xlane.f32.xlu0 %v4678
        %v4680 = vpop.xlane.xlu0 %4679
        %v4681 = vsel %vm4668, %v4191, -inf
        %4682 = vmax.xlane.f32.xlu0 %v4681
        %v4683 = vpop.xlane.xlu0 %4682
        %v4684 = vsel %vm4668, %v4196, -inf
        %4685 = vmax.xlane.f32.xlu0 %v4684
        %v4686 = vpop.xlane.xlu0 %4685
        %v4687 = vsel %vm4668, %v4201, -inf
        %4688 = vmax.xlane.f32.xlu0 %v4687
        %v4689 = vpop.xlane.xlu0 %4688
        %v4690 = vsel %vm4668, %v4206, -inf
        %4691 = vmax.xlane.f32.xlu0 %v4690
        %v4692 = vpop.xlane.xlu0 %4691
        %v4693 = vsel %vm4668, %v4324, -inf
        %4694 = vmax.xlane.f32.xlu0 %v4693
        %v4695 = vpop.xlane.xlu0 %4694
        %v4696 = vsel %vm4668, %v4329, -inf
        %4697 = vmax.xlane.f32.xlu0 %v4696
        %v4698 = vpop.xlane.xlu0 %4697
        %v4699 = vsel %vm4668, %v4334, -inf
        %4700 = vmax.xlane.f32.xlu0 %v4699
        %v4701 = vpop.xlane.xlu0 %4700
        %v4702 = vsel %vm4668, %v4339, -inf
        %4703 = vmax.xlane.f32.xlu0 %v4702
        %v4704 = vpop.xlane.xlu0 %4703
        %v4705 = vsel %vm4668, %v4344, -inf
        %4706 = vmax.xlane.f32.xlu0 %v4705
        %v4707 = vpop.xlane.xlu0 %4706
        %v4708 = vsel %vm4668, %v4349, -inf
        %4709 = vmax.xlane.f32.xlu0 %v4708
        %v4710 = vpop.xlane.xlu0 %4709
        %v4711 = vsel %vm4668, %v4354, -inf
        %4712 = vmax.xlane.f32.xlu0 %v4711
        %v4713 = vpop.xlane.xlu0 %4712
        %v4714 = vsel %vm4668, %v4359, -inf
        %4715 = vmax.xlane.f32.xlu0 %v4714
        %v4716 = vpop.xlane.xlu0 %4715
        %v4717 = vsel %vm4668, %v4477, -inf
        %4718 = vmax.xlane.f32.xlu0 %v4717
        %v4719 = vpop.xlane.xlu0 %4718
        %v4720 = vsel %vm4668, %v4482, -inf
        %4721 = vmax.xlane.f32.xlu0 %v4720
        %v4722 = vpop.xlane.xlu0 %4721
        %v4723 = vsel %vm4668, %v4487, -inf
        %4724 = vmax.xlane.f32.xlu0 %v4723
        %v4725 = vpop.xlane.xlu0 %4724
        %v4726 = vsel %vm4668, %v4492, -inf
        %4727 = vmax.xlane.f32.xlu0 %v4726
        %v4728 = vpop.xlane.xlu0 %4727
        %v4729 = vsel %vm4668, %v4497, -inf
        %4730 = vmax.xlane.f32.xlu0 %v4729
        %v4731 = vpop.xlane.xlu0 %4730
        %v4732 = vsel %vm4668, %v4502, -inf
        %4733 = vmax.xlane.f32.xlu0 %v4732
        %v4734 = vpop.xlane.xlu0 %4733
        %v4735 = vsel %vm4668, %v4507, -inf
        %4736 = vmax.xlane.f32.xlu0 %v4735
        %v4737 = vpop.xlane.xlu0 %4736
        %v4738 = vsel %vm4668, %v4512, -inf
        %4739 = vmax.xlane.f32.xlu0 %v4738
        %v4740 = vpop.xlane.xlu0 %4739
        %v4741 = vsel %vm4668, %v4630, -inf
        %4742 = vmax.xlane.f32.xlu0 %v4741
        %v4743 = vpop.xlane.xlu0 %4742
        %v4744 = vsel %vm4668, %v4635, -inf
        %4745 = vmax.xlane.f32.xlu0 %v4744
        %v4746 = vpop.xlane.xlu0 %4745
        %v4747 = vsel %vm4668, %v4640, -inf
        %4748 = vmax.xlane.f32.xlu0 %v4747
        %v4749 = vpop.xlane.xlu0 %4748
        %v4750 = vsel %vm4668, %v4645, -inf
        %4751 = vmax.xlane.f32.xlu0 %v4750
        %v4752 = vpop.xlane.xlu0 %4751
        %v4753 = vsel %vm4668, %v4650, -inf
        %4754 = vmax.xlane.f32.xlu0 %v4753
        %v4755 = vpop.xlane.xlu0 %4754
        %v4756 = vsel %vm4668, %v4655, -inf
        %4757 = vmax.xlane.f32.xlu0 %v4756
        %v4758 = vpop.xlane.xlu0 %4757
        %v4759 = vsel %vm4668, %v4660, -inf
        %4760 = vmax.xlane.f32.xlu0 %v4759
        %v4761 = vpop.xlane.xlu0 %4760
        %v4762 = vsel %vm4668, %v4665, -inf
        %4763 = vmax.xlane.f32.xlu0 %v4762
        %v4764 = vpop.xlane.xlu0 %4763
        %v4765 = vsub.f32 %v4171, %v4671
        %v4766 = vsub.f32 %v4176, %v4674
        %v4767 = vsub.f32 %v4181, %v4677
        %v4768 = vsub.f32 %v4186, %v4680
        %v4769 = vsub.f32 %v4191, %v4683
        %v4770 = vsub.f32 %v4196, %v4686
        %v4771 = vsub.f32 %v4201, %v4689
        %v4772 = vsub.f32 %v4206, %v4692
        %v4773 = vsub.f32 %v4324, %v4695
        %v4774 = vsub.f32 %v4329, %v4698
        %v4775 = vsub.f32 %v4334, %v4701
        %v4776 = vsub.f32 %v4339, %v4704
        %v4777 = vsub.f32 %v4344, %v4707
        %v4778 = vsub.f32 %v4349, %v4710
        %v4779 = vsub.f32 %v4354, %v4713
        %v4780 = vsub.f32 %v4359, %v4716
        %v4781 = vsub.f32 %v4477, %v4719
        %v4782 = vsub.f32 %v4482, %v4722
        %v4783 = vsub.f32 %v4487, %v4725
        %v4784 = vsub.f32 %v4492, %v4728
        %v4785 = vsub.f32 %v4497, %v4731
        %v4786 = vsub.f32 %v4502, %v4734
        %v4787 = vsub.f32 %v4507, %v4737
        %v4788 = vsub.f32 %v4512, %v4740
        %v4789 = vsub.f32 %v4630, %v4743
        %v4790 = vsub.f32 %v4635, %v4746
        %v4791 = vsub.f32 %v4640, %v4749
        %v4792 = vsub.f32 %v4645, %v4752
        %v4793 = vsub.f32 %v4650, %v4755
        %v4794 = vsub.f32 %v4655, %v4758
        %v4795 = vsub.f32 %v4660, %v4761
        %v4796 = vsub.f32 %v4665, %v4764
        %v4797 = vmul.f32 %v4765, 1.442695
        %v4798 = vpow.pop %v4797
        %v4799 = vmul.f32 %v4766, 1.442695
        %v4800 = vpow.pop %v4799
        %v4801 = vmul.f32 %v4767, 1.442695
        %v4802 = vpow.pop %v4801
        %v4803 = vmul.f32 %v4768, 1.442695
        %v4804 = vpow.pop %v4803
        %v4805 = vmul.f32 %v4769, 1.442695
        %v4806 = vpow.pop %v4805
        %v4807 = vmul.f32 %v4770, 1.442695
        %v4808 = vpow.pop %v4807
        %v4809 = vmul.f32 %v4771, 1.442695
        %v4810 = vpow.pop %v4809
        %v4811 = vmul.f32 %v4772, 1.442695
        %v4812 = vpow.pop %v4811
        %v4813 = vmul.f32 %v4773, 1.442695
        %v4814 = vpow.pop %v4813
        %v4815 = vmul.f32 %v4774, 1.442695
        %v4816 = vpow.pop %v4815
        %v4817 = vmul.f32 %v4775, 1.442695
        %v4818 = vpow.pop %v4817
        %v4819 = vmul.f32 %v4776, 1.442695
        %v4820 = vpow.pop %v4819
        %v4821 = vmul.f32 %v4777, 1.442695
        %v4822 = vpow.pop %v4821
        %v4823 = vmul.f32 %v4778, 1.442695
        %v4824 = vpow.pop %v4823
        %v4825 = vmul.f32 %v4779, 1.442695
        %v4826 = vpow.pop %v4825
        %v4827 = vmul.f32 %v4780, 1.442695
        %v4828 = vpow.pop %v4827
        %v4829 = vmul.f32 %v4781, 1.442695
        %v4830 = vpow.pop %v4829
        %v4831 = vmul.f32 %v4782, 1.442695
        %v4832 = vpow.pop %v4831
        %v4833 = vmul.f32 %v4783, 1.442695
        %v4834 = vpow.pop %v4833
        %v4835 = vmul.f32 %v4784, 1.442695
        %v4836 = vpow.pop %v4835
        %v4837 = vmul.f32 %v4785, 1.442695
        %v4838 = vpow.pop %v4837
        %v4839 = vmul.f32 %v4786, 1.442695
        %v4840 = vpow.pop %v4839
        %v4841 = vmul.f32 %v4787, 1.442695
        %v4842 = vpow.pop %v4841
        %v4843 = vmul.f32 %v4788, 1.442695
        %v4844 = vpow.pop %v4843
        %v4845 = vmul.f32 %v4789, 1.442695
        %v4846 = vpow.pop %v4845
        %v4847 = vmul.f32 %v4790, 1.442695
        %v4848 = vpow.pop %v4847
        %v4849 = vmul.f32 %v4791, 1.442695
        %v4850 = vpow.pop %v4849
        %v4851 = vmul.f32 %v4792, 1.442695
        %v4852 = vpow.pop %v4851
        %v4853 = vmul.f32 %v4793, 1.442695
        %v4854 = vpow.pop %v4853
        %v4855 = vmul.f32 %v4794, 1.442695
        %v4856 = vpow.pop %v4855
        %v4857 = vmul.f32 %v4795, 1.442695
        %v4858 = vpow.pop %v4857
        %v4859 = vmul.f32 %v4796, 1.442695
        %v4860 = vpow.pop %v4859
        %v4861 = vsel %vm4668, %v4798, 0.0
        %4862 = vadd.xlane.f32.xlu0 %v4861
        %v4863 = vpop.xlane.xlu0 %4862
        %v4864 = vsel %vm4668, %v4800, 0.0
        %4865 = vadd.xlane.f32.xlu0 %v4864
        %v4866 = vpop.xlane.xlu0 %4865
        %v4867 = vsel %vm4668, %v4802, 0.0
        %4868 = vadd.xlane.f32.xlu0 %v4867
        %v4869 = vpop.xlane.xlu0 %4868
        %v4870 = vsel %vm4668, %v4804, 0.0
        %4871 = vadd.xlane.f32.xlu0 %v4870
        %v4872 = vpop.xlane.xlu0 %4871
        %v4873 = vsel %vm4668, %v4806, 0.0
        %4874 = vadd.xlane.f32.xlu0 %v4873
        %v4875 = vpop.xlane.xlu0 %4874
        %v4876 = vsel %vm4668, %v4808, 0.0
        %4877 = vadd.xlane.f32.xlu0 %v4876
        %v4878 = vpop.xlane.xlu0 %4877
        %v4879 = vsel %vm4668, %v4810, 0.0
        %4880 = vadd.xlane.f32.xlu0 %v4879
        %v4881 = vpop.xlane.xlu0 %4880
        %v4882 = vsel %vm4668, %v4812, 0.0
        %4883 = vadd.xlane.f32.xlu0 %v4882
        %v4884 = vpop.xlane.xlu0 %4883
        %v4885 = vsel %vm4668, %v4814, 0.0
        %4886 = vadd.xlane.f32.xlu0 %v4885
        %v4887 = vpop.xlane.xlu0 %4886
        %v4888 = vsel %vm4668, %v4816, 0.0
        %4889 = vadd.xlane.f32.xlu0 %v4888
        %v4890 = vpop.xlane.xlu0 %4889
        %v4891 = vsel %vm4668, %v4818, 0.0
        %4892 = vadd.xlane.f32.xlu0 %v4891
        %v4893 = vpop.xlane.xlu0 %4892
        %v4894 = vsel %vm4668, %v4820, 0.0
        %4895 = vadd.xlane.f32.xlu0 %v4894
        %v4896 = vpop.xlane.xlu0 %4895
        %v4897 = vsel %vm4668, %v4822, 0.0
        %4898 = vadd.xlane.f32.xlu0 %v4897
        %v4899 = vpop.xlane.xlu0 %4898
        %v4900 = vsel %vm4668, %v4824, 0.0
        %4901 = vadd.xlane.f32.xlu0 %v4900
        %v4902 = vpop.xlane.xlu0 %4901
        %v4903 = vsel %vm4668, %v4826, 0.0
        %4904 = vadd.xlane.f32.xlu0 %v4903
        %v4905 = vpop.xlane.xlu0 %4904
        %v4906 = vsel %vm4668, %v4828, 0.0
        %4907 = vadd.xlane.f32.xlu0 %v4906
        %v4908 = vpop.xlane.xlu0 %4907
        %v4909 = vsel %vm4668, %v4830, 0.0
        %4910 = vadd.xlane.f32.xlu0 %v4909
        %v4911 = vpop.xlane.xlu0 %4910
        %v4912 = vsel %vm4668, %v4832, 0.0
        %4913 = vadd.xlane.f32.xlu0 %v4912
        %v4914 = vpop.xlane.xlu0 %4913
        %v4915 = vsel %vm4668, %v4834, 0.0
        %4916 = vadd.xlane.f32.xlu0 %v4915
        %v4917 = vpop.xlane.xlu0 %4916
        %v4918 = vsel %vm4668, %v4836, 0.0
        %4919 = vadd.xlane.f32.xlu0 %v4918
        %v4920 = vpop.xlane.xlu0 %4919
        %v4921 = vsel %vm4668, %v4838, 0.0
        %4922 = vadd.xlane.f32.xlu0 %v4921
        %v4923 = vpop.xlane.xlu0 %4922
        %v4924 = vsel %vm4668, %v4840, 0.0
        %4925 = vadd.xlane.f32.xlu0 %v4924
        %v4926 = vpop.xlane.xlu0 %4925
        %v4927 = vsel %vm4668, %v4842, 0.0
        %4928 = vadd.xlane.f32.xlu0 %v4927
        %v4929 = vpop.xlane.xlu0 %4928
        %v4930 = vsel %vm4668, %v4844, 0.0
        %4931 = vadd.xlane.f32.xlu0 %v4930
        %v4932 = vpop.xlane.xlu0 %4931
        %v4933 = vsel %vm4668, %v4846, 0.0
        %4934 = vadd.xlane.f32.xlu0 %v4933
        %v4935 = vpop.xlane.xlu0 %4934
        %v4936 = vsel %vm4668, %v4848, 0.0
        %4937 = vadd.xlane.f32.xlu0 %v4936
        %v4938 = vpop.xlane.xlu0 %4937
        %v4939 = vsel %vm4668, %v4850, 0.0
        %4940 = vadd.xlane.f32.xlu0 %v4939
        %v4941 = vpop.xlane.xlu0 %4940
        %v4942 = vsel %vm4668, %v4852, 0.0
        %4943 = vadd.xlane.f32.xlu0 %v4942
        %v4944 = vpop.xlane.xlu0 %4943
        %v4945 = vsel %vm4668, %v4854, 0.0
        %4946 = vadd.xlane.f32.xlu0 %v4945
        %v4947 = vpop.xlane.xlu0 %4946
        %v4948 = vsel %vm4668, %v4856, 0.0
        %4949 = vadd.xlane.f32.xlu0 %v4948
        %v4950 = vpop.xlane.xlu0 %4949
        %v4951 = vsel %vm4668, %v4858, 0.0
        %4952 = vadd.xlane.f32.xlu0 %v4951
        %v4953 = vpop.xlane.xlu0 %4952
        %v4954 = vsel %vm4668, %v4860, 0.0
        %4955 = vadd.xlane.f32.xlu0 %v4954
        %v4956 = vpop.xlane.xlu0 %4955
        %v4957 = vrcp.pop %v4863
        %v4958 = vrcp.pop %v4866
        %v4959 = vrcp.pop %v4869
        %v4960 = vrcp.pop %v4872
        %v4961 = vrcp.pop %v4875
        %v4962 = vrcp.pop %v4878
        %v4963 = vrcp.pop %v4881
        %v4964 = vrcp.pop %v4884
        %v4965 = vrcp.pop %v4887
        %v4966 = vrcp.pop %v4890
        %v4967 = vrcp.pop %v4893
        %v4968 = vrcp.pop %v4896
        %v4969 = vrcp.pop %v4899
        %v4970 = vrcp.pop %v4902
        %v4971 = vrcp.pop %v4905
        %v4972 = vrcp.pop %v4908
        %v4973 = vrcp.pop %v4911
        %v4974 = vrcp.pop %v4914
        %v4975 = vrcp.pop %v4917
        %v4976 = vrcp.pop %v4920
        %v4977 = vrcp.pop %v4923
        %v4978 = vrcp.pop %v4926
        %v4979 = vrcp.pop %v4929
        %v4980 = vrcp.pop %v4932
        %v4981 = vrcp.pop %v4935
        %v4982 = vrcp.pop %v4938
        %v4983 = vrcp.pop %v4941
        %v4984 = vrcp.pop %v4944
        %v4985 = vrcp.pop %v4947
        %v4986 = vrcp.pop %v4950
        %v4987 = vrcp.pop %v4953
        %v4988 = vrcp.pop %v4956
        %v4989 = vmul.f32 %v4798, %v4957
        %v4990 = vmul.f32 %v4800, %v4958
        %v4991 = vmul.f32 %v4802, %v4959
        %v4992 = vmul.f32 %v4804, %v4960
        %v4993 = vmul.f32 %v4806, %v4961
        %v4994 = vmul.f32 %v4808, %v4962
        %v4995 = vmul.f32 %v4810, %v4963
        %v4996 = vmul.f32 %v4812, %v4964
        %v4997 = vmul.f32 %v4814, %v4965
        %v4998 = vmul.f32 %v4816, %v4966
        %v4999 = vmul.f32 %v4818, %v4967
        %v5000 = vmul.f32 %v4820, %v4968
        %v5001 = vmul.f32 %v4822, %v4969
        %v5002 = vmul.f32 %v4824, %v4970
        %v5003 = vmul.f32 %v4826, %v4971
        %v5004 = vmul.f32 %v4828, %v4972
        %v5005 = vmul.f32 %v4830, %v4973
        %v5006 = vmul.f32 %v4832, %v4974
        %v5007 = vmul.f32 %v4834, %v4975
        %v5008 = vmul.f32 %v4836, %v4976
        %v5009 = vmul.f32 %v4838, %v4977
        %v5010 = vmul.f32 %v4840, %v4978
        %v5011 = vmul.f32 %v4842, %v4979
        %v5012 = vmul.f32 %v4844, %v4980
        %v5013 = vmul.f32 %v4846, %v4981
        %v5014 = vmul.f32 %v4848, %v4982
        %v5015 = vmul.f32 %v4850, %v4983
        %v5016 = vmul.f32 %v4852, %v4984
        %v5017 = vmul.f32 %v4854, %v4985
        %v5018 = vmul.f32 %v4856, %v4986
        %v5019 = vmul.f32 %v4858, %v4987
        %v5020 = vmul.f32 %v4860, %v4988
        %v5022 = vsel %vm4668, %v4989, 0
        %v5025 = vsel %vm4668, %v4990, 0
        %v5028 = vsel %vm4668, %v4991, 0
        %v5031 = vsel %vm4668, %v4992, 0
        %v5034 = vsel %vm4668, %v4993, 0
        %v5037 = vsel %vm4668, %v4994, 0
        %v5040 = vsel %vm4668, %v4995, 0
        %v5043 = vsel %vm4668, %v4996, 0
        %5045 = vmatprep.subr.mxu0 0.0
        %5046 = vmatpush1.msra.mxu0 0.0
        %5047 = vmatprep.subr.mxu0 0.0
        %5048 = vmatpush1.msra.mxu0 0.0
        %5049 = vmatprep.subr.mxu0 0.0
        %5050 = vmatpush1.msra.mxu0 0.0
        %5051 = vmatprep.subr.mxu0 0.0
        %5052 = vmatpush1.msra.mxu0 0.0
        %5053 = vmatprep.subr.mxu0 0.0
        %5054 = vmatpush1.msra.mxu0 0.0
        %5055 = vmatprep.subr.mxu0 0.0
        %5056 = vmatpush1.msra.mxu0 0.0
        %5057 = vmatprep.subr.mxu0 0.0
        %5058 = vmatpush1.msra.mxu0 0.0
        %5059 = vmatprep.subr.mxu0 0.0
        %5060 = vmatpush1.msra.mxu0 0.0
        %5061 = vmatprep.subr.mxu0 0.0
        %5062 = vmatpush1.msra.mxu0 %v4051
        %5063 = vmatprep.subr.mxu0 0.0
        %5064 = vmatpush1.msra.mxu0 %v3983
        %5065 = vmatprep.subr.mxu0 0.0
        %5066 = vmatpush1.msra.mxu0 %v3915
        %5067 = vmatprep.subr.mxu0 0.0
        %5068 = vmatpush1.msra.mxu0 %v3847
        %5069 = vmatprep.subr.mxu0 0.0
        %5070 = vmatpush1.msra.mxu0 %v3779
        %5071 = vmatprep.subr.mxu0 0.0
        %5072 = vmatpush1.msra.mxu0 %v3711
        %5073 = vmatprep.subr.mxu0 0.0
        %5074 = vmatpush1.msra.mxu0 %v3643
        %5075 = vmatprep.subr.mxu0 0.0
        %5076 = vmatpush1.msra.mxu0 %v3575
        %5077 = vmatprep.subr.mxu0 0.0
        %5078 = vmatpush2.msra.mxu0 0.0
        %5079 = vmatprep.subr.mxu0 0.0
        %5080 = vmatpush2.msra.mxu0 0.0
        %5081 = vmatprep.subr.mxu0 0.0
        %5082 = vmatpush2.msra.mxu0 0.0
        %5083 = vmatprep.subr.mxu0 0.0
        %5084 = vmatpush2.msra.mxu0 0.0
        %5085 = vmatprep.subr.mxu0 0.0
        %5086 = vmatpush2.msra.mxu0 0.0
        %5087 = vmatprep.subr.mxu0 0.0
        %5088 = vmatpush2.msra.mxu0 0.0
        %5089 = vmatprep.subr.mxu0 0.0
        %5090 = vmatpush2.msra.mxu0 0.0
        %5091 = vmatprep.subr.mxu0 0.0
        %5092 = vmatpush2.msra.mxu0 0.0
        %5093 = vmatprep.subr.mxu0 0.0
        %5094 = vmatpush2.msra.mxu0 0.0
        %5095 = vmatprep.subr.mxu0 0.0
        %5096 = vmatpush2.msra.mxu0 0.0
        %5097 = vmatprep.subr.mxu0 0.0
        %5098 = vmatpush2.msra.mxu0 0.0
        %5099 = vmatprep.subr.mxu0 0.0
        %5100 = vmatpush2.msra.mxu0 0.0
        %5101 = vmatprep.subr.mxu0 0.0
        %5102 = vmatpush2.msra.mxu0 0.0
        %5103 = vmatprep.subr.mxu0 0.0
        %5104 = vmatpush2.msra.mxu0 0.0
        %5105 = vmatprep.subr.mxu0 0.0
        %5106 = vmatpush2.msra.mxu0 0.0
        %5107 = vmatprep.subr.mxu0 0.0
        %5108 = vmatpush2.msra.mxu0 0.0
        %5109 = vmatprep.mubr.f32.mxu0 0.0
        %5110 = vmatmul.mubr.f32.gmra.mxu0 %v5022
        %v5111 = vpop.f32.mrf.mxu0
        %v5112 = vadd.f32 0.0, %v5111
        %v5113 = vpop.f32.mrf.mxu0
        %5114 = vmatprep.mubr.f32.mxu0 0.0
        %5115 = vmatmul.mubr.f32.gmra.mxu0 %v5025
        %v5116 = vpop.f32.mrf.mxu0
        %v5117 = vadd.f32 0.0, %v5116
        %v5118 = vpop.f32.mrf.mxu0
        %5119 = vmatprep.mubr.f32.mxu0 0.0
        %5120 = vmatmul.mubr.f32.gmra.mxu0 %v5028
        %v5121 = vpop.f32.mrf.mxu0
        %v5122 = vadd.f32 0.0, %v5121
        %v5123 = vpop.f32.mrf.mxu0
        %5124 = vmatprep.mubr.f32.mxu0 0.0
        %5125 = vmatmul.mubr.f32.gmra.mxu0 %v5031
        %v5126 = vpop.f32.mrf.mxu0
        %v5127 = vadd.f32 0.0, %v5126
        %v5128 = vpop.f32.mrf.mxu0
        %5129 = vmatprep.mubr.f32.mxu0 0.0
        %5130 = vmatmul.mubr.f32.gmra.mxu0 %v5034
        %v5131 = vpop.f32.mrf.mxu0
        %v5132 = vadd.f32 0.0, %v5131
        %v5133 = vpop.f32.mrf.mxu0
        %5134 = vmatprep.mubr.f32.mxu0 0.0
        %5135 = vmatmul.mubr.f32.gmra.mxu0 %v5037
        %v5136 = vpop.f32.mrf.mxu0
        %v5137 = vadd.f32 0.0, %v5136
        %v5138 = vpop.f32.mrf.mxu0
        %5139 = vmatprep.mubr.f32.mxu0 0.0
        %5140 = vmatmul.mubr.f32.gmra.mxu0 %v5040
        %v5141 = vpop.f32.mrf.mxu0
        %v5142 = vadd.f32 0.0, %v5141
        %v5143 = vpop.f32.mrf.mxu0
        %5144 = vmatprep.mubr.f32.mxu0 0.0
        %5145 = vmatmul.mubr.f32.gmra.mxu0 %v5043
        %v5146 = vpop.f32.mrf.mxu0
        %v5147 = vadd.f32 0.0, %v5146
        %v5148 = vpop.f32.mrf.mxu0
        %5149 = vdwg.mxu0
        %v5151 = vsel %vm4668, %v4997, 0
        %v5154 = vsel %vm4668, %v4998, 0
        %v5157 = vsel %vm4668, %v4999, 0
        %v5160 = vsel %vm4668, %v5000, 0
        %v5163 = vsel %vm4668, %v5001, 0
        %v5166 = vsel %vm4668, %v5002, 0
        %v5169 = vsel %vm4668, %v5003, 0
        %v5172 = vsel %vm4668, %v5004, 0
        %5174 = vmatprep.subr.mxu0 0.0
        %5175 = vmatpush1.msra.mxu0 0.0
        %5176 = vmatprep.subr.mxu0 0.0
        %5177 = vmatpush1.msra.mxu0 0.0
        %5178 = vmatprep.subr.mxu0 0.0
        %5179 = vmatpush1.msra.mxu0 0.0
        %5180 = vmatprep.subr.mxu0 0.0
        %5181 = vmatpush1.msra.mxu0 0.0
        %5182 = vmatprep.subr.mxu0 0.0
        %5183 = vmatpush1.msra.mxu0 0.0
        %5184 = vmatprep.subr.mxu0 0.0
        %5185 = vmatpush1.msra.mxu0 0.0
        %5186 = vmatprep.subr.mxu0 0.0
        %5187 = vmatpush1.msra.mxu0 0.0
        %5188 = vmatprep.subr.mxu0 0.0
        %5189 = vmatpush1.msra.mxu0 0.0
        %5190 = vmatprep.subr.mxu0 0.0
        %5191 = vmatpush1.msra.mxu0 %v4052
        %5192 = vmatprep.subr.mxu0 0.0
        %5193 = vmatpush1.msra.mxu0 %v3984
        %5194 = vmatprep.subr.mxu0 0.0
        %5195 = vmatpush1.msra.mxu0 %v3916
        %5196 = vmatprep.subr.mxu0 0.0
        %5197 = vmatpush1.msra.mxu0 %v3848
        %5198 = vmatprep.subr.mxu0 0.0
        %5199 = vmatpush1.msra.mxu0 %v3780
        %5200 = vmatprep.subr.mxu0 0.0
        %5201 = vmatpush1.msra.mxu0 %v3712
        %5202 = vmatprep.subr.mxu0 0.0
        %5203 = vmatpush1.msra.mxu0 %v3644
        %5204 = vmatprep.subr.mxu0 0.0
        %5205 = vmatpush1.msra.mxu0 %v3576
        %5206 = vmatprep.subr.mxu0 0.0
        %5207 = vmatpush2.msra.mxu0 0.0
        %5208 = vmatprep.subr.mxu0 0.0
        %5209 = vmatpush2.msra.mxu0 0.0
        %5210 = vmatprep.subr.mxu0 0.0
        %5211 = vmatpush2.msra.mxu0 0.0
        %5212 = vmatprep.subr.mxu0 0.0
        %5213 = vmatpush2.msra.mxu0 0.0
        %5214 = vmatprep.subr.mxu0 0.0
        %5215 = vmatpush2.msra.mxu0 0.0
        %5216 = vmatprep.subr.mxu0 0.0
        %5217 = vmatpush2.msra.mxu0 0.0
        %5218 = vmatprep.subr.mxu0 0.0
        %5219 = vmatpush2.msra.mxu0 0.0
        %5220 = vmatprep.subr.mxu0 0.0
        %5221 = vmatpush2.msra.mxu0 0.0
        %5222 = vmatprep.subr.mxu0 0.0
        %5223 = vmatpush2.msra.mxu0 0.0
        %5224 = vmatprep.subr.mxu0 0.0
        %5225 = vmatpush2.msra.mxu0 0.0
        %5226 = vmatprep.subr.mxu0 0.0
        %5227 = vmatpush2.msra.mxu0 0.0
        %5228 = vmatprep.subr.mxu0 0.0
        %5229 = vmatpush2.msra.mxu0 0.0
        %5230 = vmatprep.subr.mxu0 0.0
        %5231 = vmatpush2.msra.mxu0 0.0
        %5232 = vmatprep.subr.mxu0 0.0
        %5233 = vmatpush2.msra.mxu0 0.0
        %5234 = vmatprep.subr.mxu0 0.0
        %5235 = vmatpush2.msra.mxu0 0.0
        %5236 = vmatprep.subr.mxu0 0.0
        %5237 = vmatpush2.msra.mxu0 0.0
        %5238 = vmatprep.mubr.f32.mxu0 0.0
        %5239 = vmatmul.mubr.f32.gmra.mxu0 %v5151
        %v5240 = vpop.f32.mrf.mxu0
        %v5241 = vadd.f32 0.0, %v5240
        %v5242 = vpop.f32.mrf.mxu0
        %5243 = vmatprep.mubr.f32.mxu0 0.0
        %5244 = vmatmul.mubr.f32.gmra.mxu0 %v5154
        %v5245 = vpop.f32.mrf.mxu0
        %v5246 = vadd.f32 0.0, %v5245
        %v5247 = vpop.f32.mrf.mxu0
        %5248 = vmatprep.mubr.f32.mxu0 0.0
        %5249 = vmatmul.mubr.f32.gmra.mxu0 %v5157
        %v5250 = vpop.f32.mrf.mxu0
        %v5251 = vadd.f32 0.0, %v5250
        %v5252 = vpop.f32.mrf.mxu0
        %5253 = vmatprep.mubr.f32.mxu0 0.0
        %5254 = vmatmul.mubr.f32.gmra.mxu0 %v5160
        %v5255 = vpop.f32.mrf.mxu0
        %v5256 = vadd.f32 0.0, %v5255
        %v5257 = vpop.f32.mrf.mxu0
        %5258 = vmatprep.mubr.f32.mxu0 0.0
        %5259 = vmatmul.mubr.f32.gmra.mxu0 %v5163
        %v5260 = vpop.f32.mrf.mxu0
        %v5261 = vadd.f32 0.0, %v5260
        %v5262 = vpop.f32.mrf.mxu0
        %5263 = vmatprep.mubr.f32.mxu0 0.0
        %5264 = vmatmul.mubr.f32.gmra.mxu0 %v5166
        %v5265 = vpop.f32.mrf.mxu0
        %v5266 = vadd.f32 0.0, %v5265
        %v5267 = vpop.f32.mrf.mxu0
        %5268 = vmatprep.mubr.f32.mxu0 0.0
        %5269 = vmatmul.mubr.f32.gmra.mxu0 %v5169
        %v5270 = vpop.f32.mrf.mxu0
        %v5271 = vadd.f32 0.0, %v5270
        %v5272 = vpop.f32.mrf.mxu0
        %5273 = vmatprep.mubr.f32.mxu0 0.0
        %5274 = vmatmul.mubr.f32.gmra.mxu0 %v5172
        %v5275 = vpop.f32.mrf.mxu0
        %v5276 = vadd.f32 0.0, %v5275
        %v5277 = vpop.f32.mrf.mxu0
        %5278 = vdwg.mxu0
        %v5280 = vsel %vm4668, %v5005, 0
        %v5283 = vsel %vm4668, %v5006, 0
        %v5286 = vsel %vm4668, %v5007, 0
        %v5289 = vsel %vm4668, %v5008, 0
        %v5292 = vsel %vm4668, %v5009, 0
        %v5295 = vsel %vm4668, %v5010, 0
        %v5298 = vsel %vm4668, %v5011, 0
        %v5301 = vsel %vm4668, %v5012, 0
        %5303 = vmatprep.subr.mxu0 0.0
        %5304 = vmatpush1.msra.mxu0 0.0
        %5305 = vmatprep.subr.mxu0 0.0
        %5306 = vmatpush1.msra.mxu0 0.0
        %5307 = vmatprep.subr.mxu0 0.0
        %5308 = vmatpush1.msra.mxu0 0.0
        %5309 = vmatprep.subr.mxu0 0.0
        %5310 = vmatpush1.msra.mxu0 0.0
        %5311 = vmatprep.subr.mxu0 0.0
        %5312 = vmatpush1.msra.mxu0 0.0
        %5313 = vmatprep.subr.mxu0 0.0
        %5314 = vmatpush1.msra.mxu0 0.0
        %5315 = vmatprep.subr.mxu0 0.0
        %5316 = vmatpush1.msra.mxu0 0.0
        %5317 = vmatprep.subr.mxu0 0.0
        %5318 = vmatpush1.msra.mxu0 0.0
        %5319 = vmatprep.subr.mxu0 0.0
        %5320 = vmatpush1.msra.mxu0 %v4053
        %5321 = vmatprep.subr.mxu0 0.0
        %5322 = vmatpush1.msra.mxu0 %v3985
        %5323 = vmatprep.subr.mxu0 0.0
        %5324 = vmatpush1.msra.mxu0 %v3917
        %5325 = vmatprep.subr.mxu0 0.0
        %5326 = vmatpush1.msra.mxu0 %v3849
        %5327 = vmatprep.subr.mxu0 0.0
        %5328 = vmatpush1.msra.mxu0 %v3781
        %5329 = vmatprep.subr.mxu0 0.0
        %5330 = vmatpush1.msra.mxu0 %v3713
        %5331 = vmatprep.subr.mxu0 0.0
        %5332 = vmatpush1.msra.mxu0 %v3645
        %5333 = vmatprep.subr.mxu0 0.0
        %5334 = vmatpush1.msra.mxu0 %v3577
        %5335 = vmatprep.subr.mxu0 0.0
        %5336 = vmatpush2.msra.mxu0 0.0
        %5337 = vmatprep.subr.mxu0 0.0
        %5338 = vmatpush2.msra.mxu0 0.0
        %5339 = vmatprep.subr.mxu0 0.0
        %5340 = vmatpush2.msra.mxu0 0.0
        %5341 = vmatprep.subr.mxu0 0.0
        %5342 = vmatpush2.msra.mxu0 0.0
        %5343 = vmatprep.subr.mxu0 0.0
        %5344 = vmatpush2.msra.mxu0 0.0
        %5345 = vmatprep.subr.mxu0 0.0
        %5346 = vmatpush2.msra.mxu0 0.0
        %5347 = vmatprep.subr.mxu0 0.0
        %5348 = vmatpush2.msra.mxu0 0.0
        %5349 = vmatprep.subr.mxu0 0.0
        %5350 = vmatpush2.msra.mxu0 0.0
        %5351 = vmatprep.subr.mxu0 0.0
        %5352 = vmatpush2.msra.mxu0 0.0
        %5353 = vmatprep.subr.mxu0 0.0
        %5354 = vmatpush2.msra.mxu0 0.0
        %5355 = vmatprep.subr.mxu0 0.0
        %5356 = vmatpush2.msra.mxu0 0.0
        %5357 = vmatprep.subr.mxu0 0.0
        %5358 = vmatpush2.msra.mxu0 0.0
        %5359 = vmatprep.subr.mxu0 0.0
        %5360 = vmatpush2.msra.mxu0 0.0
        %5361 = vmatprep.subr.mxu0 0.0
        %5362 = vmatpush2.msra.mxu0 0.0
        %5363 = vmatprep.subr.mxu0 0.0
        %5364 = vmatpush2.msra.mxu0 0.0
        %5365 = vmatprep.subr.mxu0 0.0
        %5366 = vmatpush2.msra.mxu0 0.0
        %5367 = vmatprep.mubr.f32.mxu0 0.0
        %5368 = vmatmul.mubr.f32.gmra.mxu0 %v5280
        %v5369 = vpop.f32.mrf.mxu0
        %v5370 = vadd.f32 0.0, %v5369
        %v5371 = vpop.f32.mrf.mxu0
        %5372 = vmatprep.mubr.f32.mxu0 0.0
        %5373 = vmatmul.mubr.f32.gmra.mxu0 %v5283
        %v5374 = vpop.f32.mrf.mxu0
        %v5375 = vadd.f32 0.0, %v5374
        %v5376 = vpop.f32.mrf.mxu0
        %5377 = vmatprep.mubr.f32.mxu0 0.0
        %5378 = vmatmul.mubr.f32.gmra.mxu0 %v5286
        %v5379 = vpop.f32.mrf.mxu0
        %v5380 = vadd.f32 0.0, %v5379
        %v5381 = vpop.f32.mrf.mxu0
        %5382 = vmatprep.mubr.f32.mxu0 0.0
        %5383 = vmatmul.mubr.f32.gmra.mxu0 %v5289
        %v5384 = vpop.f32.mrf.mxu0
        %v5385 = vadd.f32 0.0, %v5384
        %v5386 = vpop.f32.mrf.mxu0
        %5387 = vmatprep.mubr.f32.mxu0 0.0
        %5388 = vmatmul.mubr.f32.gmra.mxu0 %v5292
        %v5389 = vpop.f32.mrf.mxu0
        %v5390 = vadd.f32 0.0, %v5389
        %v5391 = vpop.f32.mrf.mxu0
        %5392 = vmatprep.mubr.f32.mxu0 0.0
        %5393 = vmatmul.mubr.f32.gmra.mxu0 %v5295
        %v5394 = vpop.f32.mrf.mxu0
        %v5395 = vadd.f32 0.0, %v5394
        %v5396 = vpop.f32.mrf.mxu0
        %5397 = vmatprep.mubr.f32.mxu0 0.0
        %5398 = vmatmul.mubr.f32.gmra.mxu0 %v5298
        %v5399 = vpop.f32.mrf.mxu0
        %v5400 = vadd.f32 0.0, %v5399
        %v5401 = vpop.f32.mrf.mxu0
        %5402 = vmatprep.mubr.f32.mxu0 0.0
        %5403 = vmatmul.mubr.f32.gmra.mxu0 %v5301
        %v5404 = vpop.f32.mrf.mxu0
        %v5405 = vadd.f32 0.0, %v5404
        %v5406 = vpop.f32.mrf.mxu0
        %5407 = vdwg.mxu0
        %v5409 = vsel %vm4668, %v5013, 0
        %v5412 = vsel %vm4668, %v5014, 0
        %v5415 = vsel %vm4668, %v5015, 0
        %v5418 = vsel %vm4668, %v5016, 0
        %v5421 = vsel %vm4668, %v5017, 0
        %v5424 = vsel %vm4668, %v5018, 0
        %v5427 = vsel %vm4668, %v5019, 0
        %v5430 = vsel %vm4668, %v5020, 0
        %5432 = vmatprep.subr.mxu0 0.0
        %5433 = vmatpush1.msra.mxu0 0.0
        %5434 = vmatprep.subr.mxu0 0.0
        %5435 = vmatpush1.msra.mxu0 0.0
        %5436 = vmatprep.subr.mxu0 0.0
        %5437 = vmatpush1.msra.mxu0 0.0
        %5438 = vmatprep.subr.mxu0 0.0
        %5439 = vmatpush1.msra.mxu0 0.0
        %5440 = vmatprep.subr.mxu0 0.0
        %5441 = vmatpush1.msra.mxu0 0.0
        %5442 = vmatprep.subr.mxu0 0.0
        %5443 = vmatpush1.msra.mxu0 0.0
        %5444 = vmatprep.subr.mxu0 0.0
        %5445 = vmatpush1.msra.mxu0 0.0
        %5446 = vmatprep.subr.mxu0 0.0
        %5447 = vmatpush1.msra.mxu0 0.0
        %5448 = vmatprep.subr.mxu0 0.0
        %5449 = vmatpush1.msra.mxu0 %v4054
        %5450 = vmatprep.subr.mxu0 0.0
        %5451 = vmatpush1.msra.mxu0 %v3986
        %5452 = vmatprep.subr.mxu0 0.0
        %5453 = vmatpush1.msra.mxu0 %v3918
        %5454 = vmatprep.subr.mxu0 0.0
        %5455 = vmatpush1.msra.mxu0 %v3850
        %5456 = vmatprep.subr.mxu0 0.0
        %5457 = vmatpush1.msra.mxu0 %v3782
        %5458 = vmatprep.subr.mxu0 0.0
        %5459 = vmatpush1.msra.mxu0 %v3714
        %5460 = vmatprep.subr.mxu0 0.0
        %5461 = vmatpush1.msra.mxu0 %v3646
        %5462 = vmatprep.subr.mxu0 0.0
        %5463 = vmatpush1.msra.mxu0 %v3578
        %5464 = vmatprep.subr.mxu0 0.0
        %5465 = vmatpush2.msra.mxu0 0.0
        %5466 = vmatprep.subr.mxu0 0.0
        %5467 = vmatpush2.msra.mxu0 0.0
        %5468 = vmatprep.subr.mxu0 0.0
        %5469 = vmatpush2.msra.mxu0 0.0
        %5470 = vmatprep.subr.mxu0 0.0
        %5471 = vmatpush2.msra.mxu0 0.0
        %5472 = vmatprep.subr.mxu0 0.0
        %5473 = vmatpush2.msra.mxu0 0.0
        %5474 = vmatprep.subr.mxu0 0.0
        %5475 = vmatpush2.msra.mxu0 0.0
        %5476 = vmatprep.subr.mxu0 0.0
        %5477 = vmatpush2.msra.mxu0 0.0
        %5478 = vmatprep.subr.mxu0 0.0
        %5479 = vmatpush2.msra.mxu0 0.0
        %5480 = vmatprep.subr.mxu0 0.0
        %5481 = vmatpush2.msra.mxu0 0.0
        %5482 = vmatprep.subr.mxu0 0.0
        %5483 = vmatpush2.msra.mxu0 0.0
        %5484 = vmatprep.subr.mxu0 0.0
        %5485 = vmatpush2.msra.mxu0 0.0
        %5486 = vmatprep.subr.mxu0 0.0
        %5487 = vmatpush2.msra.mxu0 0.0
        %5488 = vmatprep.subr.mxu0 0.0
        %5489 = vmatpush2.msra.mxu0 0.0
        %5490 = vmatprep.subr.mxu0 0.0
        %5491 = vmatpush2.msra.mxu0 0.0
        %5492 = vmatprep.subr.mxu0 0.0
        %5493 = vmatpush2.msra.mxu0 0.0
        %5494 = vmatprep.subr.mxu0 0.0
        %5495 = vmatpush2.msra.mxu0 0.0
        %5496 = vmatprep.mubr.f32.mxu0 0.0
        %5497 = vmatmul.mubr.f32.gmra.mxu0 %v5409
        %v5498 = vpop.f32.mrf.mxu0
        %v5499 = vadd.f32 0.0, %v5498
        %v5500 = vpop.f32.mrf.mxu0
        %5501 = vmatprep.mubr.f32.mxu0 0.0
        %5502 = vmatmul.mubr.f32.gmra.mxu0 %v5412
        %v5503 = vpop.f32.mrf.mxu0
        %v5504 = vadd.f32 0.0, %v5503
        %v5505 = vpop.f32.mrf.mxu0
        %5506 = vmatprep.mubr.f32.mxu0 0.0
        %5507 = vmatmul.mubr.f32.gmra.mxu0 %v5415
        %v5508 = vpop.f32.mrf.mxu0
        %v5509 = vadd.f32 0.0, %v5508
        %v5510 = vpop.f32.mrf.mxu0
        %5511 = vmatprep.mubr.f32.mxu0 0.0
        %5512 = vmatmul.mubr.f32.gmra.mxu0 %v5418
        %v5513 = vpop.f32.mrf.mxu0
        %v5514 = vadd.f32 0.0, %v5513
        %v5515 = vpop.f32.mrf.mxu0
        %5516 = vmatprep.mubr.f32.mxu0 0.0
        %5517 = vmatmul.mubr.f32.gmra.mxu0 %v5421
        %v5518 = vpop.f32.mrf.mxu0
        %v5519 = vadd.f32 0.0, %v5518
        %v5520 = vpop.f32.mrf.mxu0
        %5521 = vmatprep.mubr.f32.mxu0 0.0
        %5522 = vmatmul.mubr.f32.gmra.mxu0 %v5424
        %v5523 = vpop.f32.mrf.mxu0
        %v5524 = vadd.f32 0.0, %v5523
        %v5525 = vpop.f32.mrf.mxu0
        %5526 = vmatprep.mubr.f32.mxu0 0.0
        %5527 = vmatmul.mubr.f32.gmra.mxu0 %v5427
        %v5528 = vpop.f32.mrf.mxu0
        %v5529 = vadd.f32 0.0, %v5528
        %v5530 = vpop.f32.mrf.mxu0
        %5531 = vmatprep.mubr.f32.mxu0 0.0
        %5532 = vmatmul.mubr.f32.gmra.mxu0 %v5430
        %v5533 = vpop.f32.mrf.mxu0
        %v5534 = vadd.f32 0.0, %v5533
        %v5535 = vpop.f32.mrf.mxu0
        %5536 = vdwg.mxu0
        %v5537 = vcombine.low %v5112, %v5370
        %v5538 = vcombine.high %v5112, %v5370
        %v5540 = vunpack.c.l.s4 1983009808
        %v5541 = vunpack.c.0.s8 %v5540
        %v5542 = vlaneseq
        %v5543 = vshrl.u32 %v5542, 7
        %v5544 = vsub.s32 %v5541, %v5543
        %v5545 = vrot.slane %v5537, %v5544
        %v5547 = vunpack.c.l.s4 1983009808
        %v5548 = vunpack.c.0.s8 %v5547
        %v5549 = vlaneseq
        %v5550 = vshrl.u32 %v5549, 7
        %v5551 = vsub.s32 %v5548, %v5550
        %v5552 = vrot.slane %v5538, %v5551
        %v5553 = vcombine.low %v5241, %v5499
        %v5554 = vcombine.high %v5241, %v5499
        %v5556 = vunpack.c.l.s4 1983009808
        %v5557 = vunpack.c.0.s8 %v5556
        %v5558 = vlaneseq
        %v5559 = vshrl.u32 %v5558, 7
        %v5560 = vsub.s32 %v5557, %v5559
        %v5561 = vrot.slane %v5553, %v5560
        %v5563 = vunpack.c.l.s4 1983009808
        %v5564 = vunpack.c.0.s8 %v5563
        %v5565 = vlaneseq
        %v5566 = vshrl.u32 %v5565, 7
        %v5567 = vsub.s32 %v5564, %v5566
        %v5568 = vrot.slane %v5554, %v5567
        %v5569 = vcombine.low %v5545, %v5561
        %v5570 = vcombine.high %v5545, %v5561
        %v5572 = vunpack.c.l.s4 1934713408
        %v5573 = vunpack.c.0.s8 %v5572
        %v5574 = vlaneseq
        %v5575 = vshrl.u32 %v5574, 7
        %v5576 = vsub.s32 %v5573, %v5575
        %v5577 = vrot.slane %v5569, %v5576
        %v5579 = vunpack.c.l.s4 1934713408
        %v5580 = vunpack.c.0.s8 %v5579
        %v5581 = vlaneseq
        %v5582 = vshrl.u32 %v5581, 7
        %v5583 = vsub.s32 %v5580, %v5582
        %v5584 = vrot.slane %v5570, %v5583
        %v5585 = vcombine.low %v5552, %v5568
        %v5586 = vcombine.high %v5552, %v5568
        %v5588 = vunpack.c.l.s4 1934713408
        %v5589 = vunpack.c.0.s8 %v5588
        %v5590 = vlaneseq
        %v5591 = vshrl.u32 %v5590, 7
        %v5592 = vsub.s32 %v5589, %v5591
        %v5593 = vrot.slane %v5585, %v5592
        %v5595 = vunpack.c.l.s4 1934713408
        %v5596 = vunpack.c.0.s8 %v5595
        %v5597 = vlaneseq
        %v5598 = vshrl.u32 %v5597, 7
        %v5599 = vsub.s32 %v5596, %v5598
        %v5600 = vrot.slane %v5586, %v5599
        %v5601 = vcombine.high %v5577, 0.0
        %v5602 = vcombine.high %v5584, 0.0
        %v5603 = vcombine.high %v5593, 0.0
        %v5604 = vcombine.high %v5600, 0.0
        %v5605 = vcombine.low %v5117, %v5375
        %v5606 = vcombine.high %v5117, %v5375
        %v5608 = vunpack.c.l.s4 1983009808
        %v5609 = vunpack.c.0.s8 %v5608
        %v5610 = vlaneseq
        %v5611 = vshrl.u32 %v5610, 7
        %v5612 = vsub.s32 %v5609, %v5611
        %v5613 = vrot.slane %v5605, %v5612
        %v5615 = vunpack.c.l.s4 1983009808
        %v5616 = vunpack.c.0.s8 %v5615
        %v5617 = vlaneseq
        %v5618 = vshrl.u32 %v5617, 7
        %v5619 = vsub.s32 %v5616, %v5618
        %v5620 = vrot.slane %v5606, %v5619
        %v5621 = vcombine.low %v5246, %v5504
        %v5622 = vcombine.high %v5246, %v5504
        %v5624 = vunpack.c.l.s4 1983009808
        %v5625 = vunpack.c.0.s8 %v5624
        %v5626 = vlaneseq
        %v5627 = vshrl.u32 %v5626, 7
        %v5628 = vsub.s32 %v5625, %v5627
        %v5629 = vrot.slane %v5621, %v5628
        %v5631 = vunpack.c.l.s4 1983009808
        %v5632 = vunpack.c.0.s8 %v5631
        %v5633 = vlaneseq
        %v5634 = vshrl.u32 %v5633, 7
        %v5635 = vsub.s32 %v5632, %v5634
        %v5636 = vrot.slane %v5622, %v5635
        %v5637 = vcombine.low %v5613, %v5629
        %v5638 = vcombine.high %v5613, %v5629
        %v5640 = vunpack.c.l.s4 1934713408
        %v5641 = vunpack.c.0.s8 %v5640
        %v5642 = vlaneseq
        %v5643 = vshrl.u32 %v5642, 7
        %v5644 = vsub.s32 %v5641, %v5643
        %v5645 = vrot.slane %v5637, %v5644
        %v5647 = vunpack.c.l.s4 1934713408
        %v5648 = vunpack.c.0.s8 %v5647
        %v5649 = vlaneseq
        %v5650 = vshrl.u32 %v5649, 7
        %v5651 = vsub.s32 %v5648, %v5650
        %v5652 = vrot.slane %v5638, %v5651
        %v5653 = vcombine.low %v5620, %v5636
        %v5654 = vcombine.high %v5620, %v5636
        %v5656 = vunpack.c.l.s4 1934713408
        %v5657 = vunpack.c.0.s8 %v5656
        %v5658 = vlaneseq
        %v5659 = vshrl.u32 %v5658, 7
        %v5660 = vsub.s32 %v5657, %v5659
        %v5661 = vrot.slane %v5653, %v5660
        %v5663 = vunpack.c.l.s4 1934713408
        %v5664 = vunpack.c.0.s8 %v5663
        %v5665 = vlaneseq
        %v5666 = vshrl.u32 %v5665, 7
        %v5667 = vsub.s32 %v5664, %v5666
        %v5668 = vrot.slane %v5654, %v5667
        %v5669 = vcombine.high %v5645, 0.0
        %v5670 = vcombine.high %v5652, 0.0
        %v5671 = vcombine.high %v5661, 0.0
        %v5672 = vcombine.high %v5668, 0.0
        %v5673 = vcombine.low %v5122, %v5380
        %v5674 = vcombine.high %v5122, %v5380
        %v5676 = vunpack.c.l.s4 1983009808
        %v5677 = vunpack.c.0.s8 %v5676
        %v5678 = vlaneseq
        %v5679 = vshrl.u32 %v5678, 7
        %v5680 = vsub.s32 %v5677, %v5679
        %v5681 = vrot.slane %v5673, %v5680
        %v5683 = vunpack.c.l.s4 1983009808
        %v5684 = vunpack.c.0.s8 %v5683
        %v5685 = vlaneseq
        %v5686 = vshrl.u32 %v5685, 7
        %v5687 = vsub.s32 %v5684, %v5686
        %v5688 = vrot.slane %v5674, %v5687
        %v5689 = vcombine.low %v5251, %v5509
        %v5690 = vcombine.high %v5251, %v5509
        %v5692 = vunpack.c.l.s4 1983009808
        %v5693 = vunpack.c.0.s8 %v5692
        %v5694 = vlaneseq
        %v5695 = vshrl.u32 %v5694, 7
        %v5696 = vsub.s32 %v5693, %v5695
        %v5697 = vrot.slane %v5689, %v5696
        %v5699 = vunpack.c.l.s4 1983009808
        %v5700 = vunpack.c.0.s8 %v5699
        %v5701 = vlaneseq
        %v5702 = vshrl.u32 %v5701, 7
        %v5703 = vsub.s32 %v5700, %v5702
        %v5704 = vrot.slane %v5690, %v5703
        %v5705 = vcombine.low %v5681, %v5697
        %v5706 = vcombine.high %v5681, %v5697
        %v5708 = vunpack.c.l.s4 1934713408
        %v5709 = vunpack.c.0.s8 %v5708
        %v5710 = vlaneseq
        %v5711 = vshrl.u32 %v5710, 7
        %v5712 = vsub.s32 %v5709, %v5711
        %v5713 = vrot.slane %v5705, %v5712
        %v5715 = vunpack.c.l.s4 1934713408
        %v5716 = vunpack.c.0.s8 %v5715
        %v5717 = vlaneseq
        %v5718 = vshrl.u32 %v5717, 7
        %v5719 = vsub.s32 %v5716, %v5718
        %v5720 = vrot.slane %v5706, %v5719
        %v5721 = vcombine.low %v5688, %v5704
        %v5722 = vcombine.high %v5688, %v5704
        %v5724 = vunpack.c.l.s4 1934713408
        %v5725 = vunpack.c.0.s8 %v5724
        %v5726 = vlaneseq
        %v5727 = vshrl.u32 %v5726, 7
        %v5728 = vsub.s32 %v5725, %v5727
        %v5729 = vrot.slane %v5721, %v5728
        %v5731 = vunpack.c.l.s4 1934713408
        %v5732 = vunpack.c.0.s8 %v5731
        %v5733 = vlaneseq
        %v5734 = vshrl.u32 %v5733, 7
        %v5735 = vsub.s32 %v5732, %v5734
        %v5736 = vrot.slane %v5722, %v5735
        %v5737 = vcombine.high %v5713, 0.0
        %v5738 = vcombine.high %v5720, 0.0
        %v5739 = vcombine.high %v5729, 0.0
        %v5740 = vcombine.high %v5736, 0.0
        %v5741 = vcombine.low %v5127, %v5385
        %v5742 = vcombine.high %v5127, %v5385
        %v5744 = vunpack.c.l.s4 1983009808
        %v5745 = vunpack.c.0.s8 %v5744
        %v5746 = vlaneseq
        %v5747 = vshrl.u32 %v5746, 7
        %v5748 = vsub.s32 %v5745, %v5747
        %v5749 = vrot.slane %v5741, %v5748
        %v5751 = vunpack.c.l.s4 1983009808
        %v5752 = vunpack.c.0.s8 %v5751
        %v5753 = vlaneseq
        %v5754 = vshrl.u32 %v5753, 7
        %v5755 = vsub.s32 %v5752, %v5754
        %v5756 = vrot.slane %v5742, %v5755
        %v5757 = vcombine.low %v5256, %v5514
        %v5758 = vcombine.high %v5256, %v5514
        %v5760 = vunpack.c.l.s4 1983009808
        %v5761 = vunpack.c.0.s8 %v5760
        %v5762 = vlaneseq
        %v5763 = vshrl.u32 %v5762, 7
        %v5764 = vsub.s32 %v5761, %v5763
        %v5765 = vrot.slane %v5757, %v5764
        %v5767 = vunpack.c.l.s4 1983009808
        %v5768 = vunpack.c.0.s8 %v5767
        %v5769 = vlaneseq
        %v5770 = vshrl.u32 %v5769, 7
        %v5771 = vsub.s32 %v5768, %v5770
        %v5772 = vrot.slane %v5758, %v5771
        %v5773 = vcombine.low %v5749, %v5765
        %v5774 = vcombine.high %v5749, %v5765
        %v5776 = vunpack.c.l.s4 1934713408
        %v5777 = vunpack.c.0.s8 %v5776
        %v5778 = vlaneseq
        %v5779 = vshrl.u32 %v5778, 7
        %v5780 = vsub.s32 %v5777, %v5779
        %v5781 = vrot.slane %v5773, %v5780
        %v5783 = vunpack.c.l.s4 1934713408
        %v5784 = vunpack.c.0.s8 %v5783
        %v5785 = vlaneseq
        %v5786 = vshrl.u32 %v5785, 7
        %v5787 = vsub.s32 %v5784, %v5786
        %v5788 = vrot.slane %v5774, %v5787
        %v5789 = vcombine.low %v5756, %v5772
        %v5790 = vcombine.high %v5756, %v5772
        %v5792 = vunpack.c.l.s4 1934713408
        %v5793 = vunpack.c.0.s8 %v5792
        %v5794 = vlaneseq
        %v5795 = vshrl.u32 %v5794, 7
        %v5796 = vsub.s32 %v5793, %v5795
        %v5797 = vrot.slane %v5789, %v5796
        %v5799 = vunpack.c.l.s4 1934713408
        %v5800 = vunpack.c.0.s8 %v5799
        %v5801 = vlaneseq
        %v5802 = vshrl.u32 %v5801, 7
        %v5803 = vsub.s32 %v5800, %v5802
        %v5804 = vrot.slane %v5790, %v5803
        %v5805 = vcombine.high %v5781, 0.0
        %v5806 = vcombine.high %v5788, 0.0
        %v5807 = vcombine.high %v5797, 0.0
        %v5808 = vcombine.high %v5804, 0.0
        %v5809 = vcombine.low %v5132, %v5390
        %v5810 = vcombine.high %v5132, %v5390
        %v5812 = vunpack.c.l.s4 1983009808
        %v5813 = vunpack.c.0.s8 %v5812
        %v5814 = vlaneseq
        %v5815 = vshrl.u32 %v5814, 7
        %v5816 = vsub.s32 %v5813, %v5815
        %v5817 = vrot.slane %v5809, %v5816
        %v5819 = vunpack.c.l.s4 1983009808
        %v5820 = vunpack.c.0.s8 %v5819
        %v5821 = vlaneseq
        %v5822 = vshrl.u32 %v5821, 7
        %v5823 = vsub.s32 %v5820, %v5822
        %v5824 = vrot.slane %v5810, %v5823
        %v5825 = vcombine.low %v5261, %v5519
        %v5826 = vcombine.high %v5261, %v5519
        %v5828 = vunpack.c.l.s4 1983009808
        %v5829 = vunpack.c.0.s8 %v5828
        %v5830 = vlaneseq
        %v5831 = vshrl.u32 %v5830, 7
        %v5832 = vsub.s32 %v5829, %v5831
        %v5833 = vrot.slane %v5825, %v5832
        %v5835 = vunpack.c.l.s4 1983009808
        %v5836 = vunpack.c.0.s8 %v5835
        %v5837 = vlaneseq
        %v5838 = vshrl.u32 %v5837, 7
        %v5839 = vsub.s32 %v5836, %v5838
        %v5840 = vrot.slane %v5826, %v5839
        %v5841 = vcombine.low %v5817, %v5833
        %v5842 = vcombine.high %v5817, %v5833
        %v5844 = vunpack.c.l.s4 1934713408
        %v5845 = vunpack.c.0.s8 %v5844
        %v5846 = vlaneseq
        %v5847 = vshrl.u32 %v5846, 7
        %v5848 = vsub.s32 %v5845, %v5847
        %v5849 = vrot.slane %v5841, %v5848
        %v5851 = vunpack.c.l.s4 1934713408
        %v5852 = vunpack.c.0.s8 %v5851
        %v5853 = vlaneseq
        %v5854 = vshrl.u32 %v5853, 7
        %v5855 = vsub.s32 %v5852, %v5854
        %v5856 = vrot.slane %v5842, %v5855
        %v5857 = vcombine.low %v5824, %v5840
        %v5858 = vcombine.high %v5824, %v5840
        %v5860 = vunpack.c.l.s4 1934713408
        %v5861 = vunpack.c.0.s8 %v5860
        %v5862 = vlaneseq
        %v5863 = vshrl.u32 %v5862, 7
        %v5864 = vsub.s32 %v5861, %v5863
        %v5865 = vrot.slane %v5857, %v5864
        %v5867 = vunpack.c.l.s4 1934713408
        %v5868 = vunpack.c.0.s8 %v5867
        %v5869 = vlaneseq
        %v5870 = vshrl.u32 %v5869, 7
        %v5871 = vsub.s32 %v5868, %v5870
        %v5872 = vrot.slane %v5858, %v5871
        %v5873 = vcombine.high %v5849, 0.0
        %v5874 = vcombine.high %v5856, 0.0
        %v5875 = vcombine.high %v5865, 0.0
        %v5876 = vcombine.high %v5872, 0.0
        %v5877 = vcombine.low %v5137, %v5395
        %v5878 = vcombine.high %v5137, %v5395
        %v5880 = vunpack.c.l.s4 1983009808
        %v5881 = vunpack.c.0.s8 %v5880
        %v5882 = vlaneseq
        %v5883 = vshrl.u32 %v5882, 7
        %v5884 = vsub.s32 %v5881, %v5883
        %v5885 = vrot.slane %v5877, %v5884
        %v5887 = vunpack.c.l.s4 1983009808
        %v5888 = vunpack.c.0.s8 %v5887
        %v5889 = vlaneseq
        %v5890 = vshrl.u32 %v5889, 7
        %v5891 = vsub.s32 %v5888, %v5890
        %v5892 = vrot.slane %v5878, %v5891
        %v5893 = vcombine.low %v5266, %v5524
        %v5894 = vcombine.high %v5266, %v5524
        %v5896 = vunpack.c.l.s4 1983009808
        %v5897 = vunpack.c.0.s8 %v5896
        %v5898 = vlaneseq
        %v5899 = vshrl.u32 %v5898, 7
        %v5900 = vsub.s32 %v5897, %v5899
        %v5901 = vrot.slane %v5893, %v5900
        %v5903 = vunpack.c.l.s4 1983009808
        %v5904 = vunpack.c.0.s8 %v5903
        %v5905 = vlaneseq
        %v5906 = vshrl.u32 %v5905, 7
        %v5907 = vsub.s32 %v5904, %v5906
        %v5908 = vrot.slane %v5894, %v5907
        %v5909 = vcombine.low %v5885, %v5901
        %v5910 = vcombine.high %v5885, %v5901
        %v5912 = vunpack.c.l.s4 1934713408
        %v5913 = vunpack.c.0.s8 %v5912
        %v5914 = vlaneseq
        %v5915 = vshrl.u32 %v5914, 7
        %v5916 = vsub.s32 %v5913, %v5915
        %v5917 = vrot.slane %v5909, %v5916
        %v5919 = vunpack.c.l.s4 1934713408
        %v5920 = vunpack.c.0.s8 %v5919
        %v5921 = vlaneseq
        %v5922 = vshrl.u32 %v5921, 7
        %v5923 = vsub.s32 %v5920, %v5922
        %v5924 = vrot.slane %v5910, %v5923
        %v5925 = vcombine.low %v5892, %v5908
        %v5926 = vcombine.high %v5892, %v5908
        %v5928 = vunpack.c.l.s4 1934713408
        %v5929 = vunpack.c.0.s8 %v5928
        %v5930 = vlaneseq
        %v5931 = vshrl.u32 %v5930, 7
        %v5932 = vsub.s32 %v5929, %v5931
        %v5933 = vrot.slane %v5925, %v5932
        %v5935 = vunpack.c.l.s4 1934713408
        %v5936 = vunpack.c.0.s8 %v5935
        %v5937 = vlaneseq
        %v5938 = vshrl.u32 %v5937, 7
        %v5939 = vsub.s32 %v5936, %v5938
        %v5940 = vrot.slane %v5926, %v5939
        %v5941 = vcombine.high %v5917, 0.0
        %v5942 = vcombine.high %v5924, 0.0
        %v5943 = vcombine.high %v5933, 0.0
        %v5944 = vcombine.high %v5940, 0.0
        %v5945 = vcombine.low %v5142, %v5400
        %v5946 = vcombine.high %v5142, %v5400
        %v5948 = vunpack.c.l.s4 1983009808
        %v5949 = vunpack.c.0.s8 %v5948
        %v5950 = vlaneseq
        %v5951 = vshrl.u32 %v5950, 7
        %v5952 = vsub.s32 %v5949, %v5951
        %v5953 = vrot.slane %v5945, %v5952
        %v5955 = vunpack.c.l.s4 1983009808
        %v5956 = vunpack.c.0.s8 %v5955
        %v5957 = vlaneseq
        %v5958 = vshrl.u32 %v5957, 7
        %v5959 = vsub.s32 %v5956, %v5958
        %v5960 = vrot.slane %v5946, %v5959
        %v5961 = vcombine.low %v5271, %v5529
        %v5962 = vcombine.high %v5271, %v5529
        %v5964 = vunpack.c.l.s4 1983009808
        %v5965 = vunpack.c.0.s8 %v5964
        %v5966 = vlaneseq
        %v5967 = vshrl.u32 %v5966, 7
        %v5968 = vsub.s32 %v5965, %v5967
        %v5969 = vrot.slane %v5961, %v5968
        %v5971 = vunpack.c.l.s4 1983009808
        %v5972 = vunpack.c.0.s8 %v5971
        %v5973 = vlaneseq
        %v5974 = vshrl.u32 %v5973, 7
        %v5975 = vsub.s32 %v5972, %v5974
        %v5976 = vrot.slane %v5962, %v5975
        %v5977 = vcombine.low %v5953, %v5969
        %v5978 = vcombine.high %v5953, %v5969
        %v5980 = vunpack.c.l.s4 1934713408
        %v5981 = vunpack.c.0.s8 %v5980
        %v5982 = vlaneseq
        %v5983 = vshrl.u32 %v5982, 7
        %v5984 = vsub.s32 %v5981, %v5983
        %v5985 = vrot.slane %v5977, %v5984
        %v5987 = vunpack.c.l.s4 1934713408
        %v5988 = vunpack.c.0.s8 %v5987
        %v5989 = vlaneseq
        %v5990 = vshrl.u32 %v5989, 7
        %v5991 = vsub.s32 %v5988, %v5990
        %v5992 = vrot.slane %v5978, %v5991
        %v5993 = vcombine.low %v5960, %v5976
        %v5994 = vcombine.high %v5960, %v5976
        %v5996 = vunpack.c.l.s4 1934713408
        %v5997 = vunpack.c.0.s8 %v5996
        %v5998 = vlaneseq
        %v5999 = vshrl.u32 %v5998, 7
        %v6000 = vsub.s32 %v5997, %v5999
        %v6001 = vrot.slane %v5993, %v6000
        %v6003 = vunpack.c.l.s4 1934713408
        %v6004 = vunpack.c.0.s8 %v6003
        %v6005 = vlaneseq
        %v6006 = vshrl.u32 %v6005, 7
        %v6007 = vsub.s32 %v6004, %v6006
        %v6008 = vrot.slane %v5994, %v6007
        %v6009 = vcombine.high %v5985, 0.0
        %v6010 = vcombine.high %v5992, 0.0
        %v6011 = vcombine.high %v6001, 0.0
        %v6012 = vcombine.high %v6008, 0.0
        %v6013 = vcombine.low %v5147, %v5405
        %v6014 = vcombine.high %v5147, %v5405
        %v6016 = vunpack.c.l.s4 1983009808
        %v6017 = vunpack.c.0.s8 %v6016
        %v6018 = vlaneseq
        %v6019 = vshrl.u32 %v6018, 7
        %v6020 = vsub.s32 %v6017, %v6019
        %v6021 = vrot.slane %v6013, %v6020
        %v6023 = vunpack.c.l.s4 1983009808
        %v6024 = vunpack.c.0.s8 %v6023
        %v6025 = vlaneseq
        %v6026 = vshrl.u32 %v6025, 7
        %v6027 = vsub.s32 %v6024, %v6026
        %v6028 = vrot.slane %v6014, %v6027
        %v6029 = vcombine.low %v5276, %v5534
        %v6030 = vcombine.high %v5276, %v5534
        %v6032 = vunpack.c.l.s4 1983009808
        %v6033 = vunpack.c.0.s8 %v6032
        %v6034 = vlaneseq
        %v6035 = vshrl.u32 %v6034, 7
        %v6036 = vsub.s32 %v6033, %v6035
        %v6037 = vrot.slane %v6029, %v6036
        %v6039 = vunpack.c.l.s4 1983009808
        %v6040 = vunpack.c.0.s8 %v6039
        %v6041 = vlaneseq
        %v6042 = vshrl.u32 %v6041, 7
        %v6043 = vsub.s32 %v6040, %v6042
        %v6044 = vrot.slane %v6030, %v6043
        %v6045 = vcombine.low %v6021, %v6037
        %v6046 = vcombine.high %v6021, %v6037
        %v6048 = vunpack.c.l.s4 1934713408
        %v6049 = vunpack.c.0.s8 %v6048
        %v6050 = vlaneseq
        %v6051 = vshrl.u32 %v6050, 7
        %v6052 = vsub.s32 %v6049, %v6051
        %v6053 = vrot.slane %v6045, %v6052
        %v6055 = vunpack.c.l.s4 1934713408
        %v6056 = vunpack.c.0.s8 %v6055
        %v6057 = vlaneseq
        %v6058 = vshrl.u32 %v6057, 7
        %v6059 = vsub.s32 %v6056, %v6058
        %v6060 = vrot.slane %v6046, %v6059
        %v6061 = vcombine.low %v6028, %v6044
        %v6062 = vcombine.high %v6028, %v6044
        %v6064 = vunpack.c.l.s4 1934713408
        %v6065 = vunpack.c.0.s8 %v6064
        %v6066 = vlaneseq
        %v6067 = vshrl.u32 %v6066, 7
        %v6068 = vsub.s32 %v6065, %v6067
        %v6069 = vrot.slane %v6061, %v6068
        %v6071 = vunpack.c.l.s4 1934713408
        %v6072 = vunpack.c.0.s8 %v6071
        %v6073 = vlaneseq
        %v6074 = vshrl.u32 %v6073, 7
        %v6075 = vsub.s32 %v6072, %v6074
        %v6076 = vrot.slane %v6062, %v6075
        %v6077 = vcombine.high %v6053, 0.0
        %v6078 = vcombine.high %v6060, 0.0
        %v6079 = vcombine.high %v6069, 0.0
        %v6080 = vcombine.high %v6076, 0.0
        %v6081 = vcombine.low %v5577, %v5584
        %v6083 = vunpack.c.l.s4 1983009808
        %v6084 = vunpack.c.0.s8 %v6083
        %v6085 = vlaneseq
        %v6086 = vshrl.u32 %v6085, 7
        %v6087 = vsub.s32 %v6084, %v6086
        %v6088 = vrot.slane %v6081, %v6087
        %v6089 = vcombine.low %v5601, %v5602
        %v6091 = vunpack.c.l.s4 1983009808
        %v6092 = vunpack.c.0.s8 %v6091
        %v6093 = vlaneseq
        %v6094 = vshrl.u32 %v6093, 7
        %v6095 = vsub.s32 %v6092, %v6094
        %v6096 = vrot.slane %v6089, %v6095
        %v6097 = vcombine.low %v5593, %v5600
        %v6099 = vunpack.c.l.s4 1983009808
        %v6100 = vunpack.c.0.s8 %v6099
        %v6101 = vlaneseq
        %v6102 = vshrl.u32 %v6101, 7
        %v6103 = vsub.s32 %v6100, %v6102
        %v6104 = vrot.slane %v6097, %v6103
        %v6105 = vcombine.low %v5603, %v5604
        %v6107 = vunpack.c.l.s4 1983009808
        %v6108 = vunpack.c.0.s8 %v6107
        %v6109 = vlaneseq
        %v6110 = vshrl.u32 %v6109, 7
        %v6111 = vsub.s32 %v6108, %v6110
        %v6112 = vrot.slane %v6105, %v6111
        %v6113 = vcombine.low %v6088, %v6096
        %v6114 = vcombine.high %v6088, %v6096
        %v6116 = vunpack.c.l.s4 1934713408
        %v6117 = vunpack.c.0.s8 %v6116
        %v6118 = vlaneseq
        %v6119 = vshrl.u32 %v6118, 7
        %v6120 = vsub.s32 %v6117, %v6119
        %v6121 = vrot.slane %v6113, %v6120
        %v6123 = vunpack.c.l.s4 1934713408
        %v6124 = vunpack.c.0.s8 %v6123
        %v6125 = vlaneseq
        %v6126 = vshrl.u32 %v6125, 7
        %v6127 = vsub.s32 %v6124, %v6126
        %v6128 = vrot.slane %v6114, %v6127
        %v6129 = vcombine.low %v6104, %v6112
        %v6130 = vcombine.high %v6104, %v6112
        %v6132 = vunpack.c.l.s4 1934713408
        %v6133 = vunpack.c.0.s8 %v6132
        %v6134 = vlaneseq
        %v6135 = vshrl.u32 %v6134, 7
        %v6136 = vsub.s32 %v6133, %v6135
        %v6137 = vrot.slane %v6129, %v6136
        %v6139 = vunpack.c.l.s4 1934713408
        %v6140 = vunpack.c.0.s8 %v6139
        %v6141 = vlaneseq
        %v6142 = vshrl.u32 %v6141, 7
        %v6143 = vsub.s32 %v6140, %v6142
        %v6144 = vrot.slane %v6130, %v6143
        %v6145 = vcombine.low %v6121, %v6137
        %v6146 = vcombine.high %v6121, %v6137
        %v6147 = vcombine.low %v6128, %v6144
        %v6148 = vcombine.high %v6128, %v6144
        %v6149 = vcombine.low %v5645, %v5652
        %v6151 = vunpack.c.l.s4 1983009808
        %v6152 = vunpack.c.0.s8 %v6151
        %v6153 = vlaneseq
        %v6154 = vshrl.u32 %v6153, 7
        %v6155 = vsub.s32 %v6152, %v6154
        %v6156 = vrot.slane %v6149, %v6155
        %v6157 = vcombine.low %v5669, %v5670
        %v6159 = vunpack.c.l.s4 1983009808
        %v6160 = vunpack.c.0.s8 %v6159
        %v6161 = vlaneseq
        %v6162 = vshrl.u32 %v6161, 7
        %v6163 = vsub.s32 %v6160, %v6162
        %v6164 = vrot.slane %v6157, %v6163
        %v6165 = vcombine.low %v5661, %v5668
        %v6167 = vunpack.c.l.s4 1983009808
        %v6168 = vunpack.c.0.s8 %v6167
        %v6169 = vlaneseq
        %v6170 = vshrl.u32 %v6169, 7
        %v6171 = vsub.s32 %v6168, %v6170
        %v6172 = vrot.slane %v6165, %v6171
        %v6173 = vcombine.low %v5671, %v5672
        %v6175 = vunpack.c.l.s4 1983009808
        %v6176 = vunpack.c.0.s8 %v6175
        %v6177 = vlaneseq
        %v6178 = vshrl.u32 %v6177, 7
        %v6179 = vsub.s32 %v6176, %v6178
        %v6180 = vrot.slane %v6173, %v6179
        %v6181 = vcombine.low %v6156, %v6164
        %v6182 = vcombine.high %v6156, %v6164
        %v6184 = vunpack.c.l.s4 1934713408
        %v6185 = vunpack.c.0.s8 %v6184
        %v6186 = vlaneseq
        %v6187 = vshrl.u32 %v6186, 7
        %v6188 = vsub.s32 %v6185, %v6187
        %v6189 = vrot.slane %v6181, %v6188
        %v6191 = vunpack.c.l.s4 1934713408
        %v6192 = vunpack.c.0.s8 %v6191
        %v6193 = vlaneseq
        %v6194 = vshrl.u32 %v6193, 7
        %v6195 = vsub.s32 %v6192, %v6194
        %v6196 = vrot.slane %v6182, %v6195
        %v6197 = vcombine.low %v6172, %v6180
        %v6198 = vcombine.high %v6172, %v6180
        %v6200 = vunpack.c.l.s4 1934713408
        %v6201 = vunpack.c.0.s8 %v6200
        %v6202 = vlaneseq
        %v6203 = vshrl.u32 %v6202, 7
        %v6204 = vsub.s32 %v6201, %v6203
        %v6205 = vrot.slane %v6197, %v6204
        %v6207 = vunpack.c.l.s4 1934713408
        %v6208 = vunpack.c.0.s8 %v6207
        %v6209 = vlaneseq
        %v6210 = vshrl.u32 %v6209, 7
        %v6211 = vsub.s32 %v6208, %v6210
        %v6212 = vrot.slane %v6198, %v6211
        %v6213 = vcombine.low %v6189, %v6205
        %v6214 = vcombine.high %v6189, %v6205
        %v6215 = vcombine.low %v6196, %v6212
        %v6216 = vcombine.high %v6196, %v6212
        %v6217 = vcombine.low %v5713, %v5720
        %v6219 = vunpack.c.l.s4 1983009808
        %v6220 = vunpack.c.0.s8 %v6219
        %v6221 = vlaneseq
        %v6222 = vshrl.u32 %v6221, 7
        %v6223 = vsub.s32 %v6220, %v6222
        %v6224 = vrot.slane %v6217, %v6223
        %v6225 = vcombine.low %v5737, %v5738
        %v6227 = vunpack.c.l.s4 1983009808
        %v6228 = vunpack.c.0.s8 %v6227
        %v6229 = vlaneseq
        %v6230 = vshrl.u32 %v6229, 7
        %v6231 = vsub.s32 %v6228, %v6230
        %v6232 = vrot.slane %v6225, %v6231
        %v6233 = vcombine.low %v5729, %v5736
        %v6235 = vunpack.c.l.s4 1983009808
        %v6236 = vunpack.c.0.s8 %v6235
        %v6237 = vlaneseq
        %v6238 = vshrl.u32 %v6237, 7
        %v6239 = vsub.s32 %v6236, %v6238
        %v6240 = vrot.slane %v6233, %v6239
        %v6241 = vcombine.low %v5739, %v5740
        %v6243 = vunpack.c.l.s4 1983009808
        %v6244 = vunpack.c.0.s8 %v6243
        %v6245 = vlaneseq
        %v6246 = vshrl.u32 %v6245, 7
        %v6247 = vsub.s32 %v6244, %v6246
        %v6248 = vrot.slane %v6241, %v6247
        %v6249 = vcombine.low %v6224, %v6232
        %v6250 = vcombine.high %v6224, %v6232
        %v6252 = vunpack.c.l.s4 1934713408
        %v6253 = vunpack.c.0.s8 %v6252
        %v6254 = vlaneseq
        %v6255 = vshrl.u32 %v6254, 7
        %v6256 = vsub.s32 %v6253, %v6255
        %v6257 = vrot.slane %v6249, %v6256
        %v6259 = vunpack.c.l.s4 1934713408
        %v6260 = vunpack.c.0.s8 %v6259
        %v6261 = vlaneseq
        %v6262 = vshrl.u32 %v6261, 7
        %v6263 = vsub.s32 %v6260, %v6262
        %v6264 = vrot.slane %v6250, %v6263
        %v6265 = vcombine.low %v6240, %v6248
        %v6266 = vcombine.high %v6240, %v6248
        %v6268 = vunpack.c.l.s4 1934713408
        %v6269 = vunpack.c.0.s8 %v6268
        %v6270 = vlaneseq
        %v6271 = vshrl.u32 %v6270, 7
        %v6272 = vsub.s32 %v6269, %v6271
        %v6273 = vrot.slane %v6265, %v6272
        %v6275 = vunpack.c.l.s4 1934713408
        %v6276 = vunpack.c.0.s8 %v6275
        %v6277 = vlaneseq
        %v6278 = vshrl.u32 %v6277, 7
        %v6279 = vsub.s32 %v6276, %v6278
        %v6280 = vrot.slane %v6266, %v6279
        %v6281 = vcombine.low %v6257, %v6273
        %v6282 = vcombine.high %v6257, %v6273
        %v6283 = vcombine.low %v6264, %v6280
        %v6284 = vcombine.high %v6264, %v6280
        %v6285 = vcombine.low %v5781, %v5788
        %v6287 = vunpack.c.l.s4 1983009808
        %v6288 = vunpack.c.0.s8 %v6287
        %v6289 = vlaneseq
        %v6290 = vshrl.u32 %v6289, 7
        %v6291 = vsub.s32 %v6288, %v6290
        %v6292 = vrot.slane %v6285, %v6291
        %v6293 = vcombine.low %v5805, %v5806
        %v6295 = vunpack.c.l.s4 1983009808
        %v6296 = vunpack.c.0.s8 %v6295
        %v6297 = vlaneseq
        %v6298 = vshrl.u32 %v6297, 7
        %v6299 = vsub.s32 %v6296, %v6298
        %v6300 = vrot.slane %v6293, %v6299
        %v6301 = vcombine.low %v5797, %v5804
        %v6303 = vunpack.c.l.s4 1983009808
        %v6304 = vunpack.c.0.s8 %v6303
        %v6305 = vlaneseq
        %v6306 = vshrl.u32 %v6305, 7
        %v6307 = vsub.s32 %v6304, %v6306
        %v6308 = vrot.slane %v6301, %v6307
        %v6309 = vcombine.low %v5807, %v5808
        %v6311 = vunpack.c.l.s4 1983009808
        %v6312 = vunpack.c.0.s8 %v6311
        %v6313 = vlaneseq
        %v6314 = vshrl.u32 %v6313, 7
        %v6315 = vsub.s32 %v6312, %v6314
        %v6316 = vrot.slane %v6309, %v6315
        %v6317 = vcombine.low %v6292, %v6300
        %v6318 = vcombine.high %v6292, %v6300
        %v6320 = vunpack.c.l.s4 1934713408
        %v6321 = vunpack.c.0.s8 %v6320
        %v6322 = vlaneseq
        %v6323 = vshrl.u32 %v6322, 7
        %v6324 = vsub.s32 %v6321, %v6323
        %v6325 = vrot.slane %v6317, %v6324
        %v6327 = vunpack.c.l.s4 1934713408
        %v6328 = vunpack.c.0.s8 %v6327
        %v6329 = vlaneseq
        %v6330 = vshrl.u32 %v6329, 7
        %v6331 = vsub.s32 %v6328, %v6330
        %v6332 = vrot.slane %v6318, %v6331
        %v6333 = vcombine.low %v6308, %v6316
        %v6334 = vcombine.high %v6308, %v6316
        %v6336 = vunpack.c.l.s4 1934713408
        %v6337 = vunpack.c.0.s8 %v6336
        %v6338 = vlaneseq
        %v6339 = vshrl.u32 %v6338, 7
        %v6340 = vsub.s32 %v6337, %v6339
        %v6341 = vrot.slane %v6333, %v6340
        %v6343 = vunpack.c.l.s4 1934713408
        %v6344 = vunpack.c.0.s8 %v6343
        %v6345 = vlaneseq
        %v6346 = vshrl.u32 %v6345, 7
        %v6347 = vsub.s32 %v6344, %v6346
        %v6348 = vrot.slane %v6334, %v6347
        %v6349 = vcombine.low %v6325, %v6341
        %v6350 = vcombine.high %v6325, %v6341
        %v6351 = vcombine.low %v6332, %v6348
        %v6352 = vcombine.high %v6332, %v6348
        %v6353 = vcombine.low %v5849, %v5856
        %v6355 = vunpack.c.l.s4 1983009808
        %v6356 = vunpack.c.0.s8 %v6355
        %v6357 = vlaneseq
        %v6358 = vshrl.u32 %v6357, 7
        %v6359 = vsub.s32 %v6356, %v6358
        %v6360 = vrot.slane %v6353, %v6359
        %v6361 = vcombine.low %v5873, %v5874
        %v6363 = vunpack.c.l.s4 1983009808
        %v6364 = vunpack.c.0.s8 %v6363
        %v6365 = vlaneseq
        %v6366 = vshrl.u32 %v6365, 7
        %v6367 = vsub.s32 %v6364, %v6366
        %v6368 = vrot.slane %v6361, %v6367
        %v6369 = vcombine.low %v5865, %v5872
        %v6371 = vunpack.c.l.s4 1983009808
        %v6372 = vunpack.c.0.s8 %v6371
        %v6373 = vlaneseq
        %v6374 = vshrl.u32 %v6373, 7
        %v6375 = vsub.s32 %v6372, %v6374
        %v6376 = vrot.slane %v6369, %v6375
        %v6377 = vcombine.low %v5875, %v5876
        %v6379 = vunpack.c.l.s4 1983009808
        %v6380 = vunpack.c.0.s8 %v6379
        %v6381 = vlaneseq
        %v6382 = vshrl.u32 %v6381, 7
        %v6383 = vsub.s32 %v6380, %v6382
        %v6384 = vrot.slane %v6377, %v6383
        %v6385 = vcombine.low %v6360, %v6368
        %v6386 = vcombine.high %v6360, %v6368
        %v6388 = vunpack.c.l.s4 1934713408
        %v6389 = vunpack.c.0.s8 %v6388
        %v6390 = vlaneseq
        %v6391 = vshrl.u32 %v6390, 7
        %v6392 = vsub.s32 %v6389, %v6391
        %v6393 = vrot.slane %v6385, %v6392
        %v6395 = vunpack.c.l.s4 1934713408
        %v6396 = vunpack.c.0.s8 %v6395
        %v6397 = vlaneseq
        %v6398 = vshrl.u32 %v6397, 7
        %v6399 = vsub.s32 %v6396, %v6398
        %v6400 = vrot.slane %v6386, %v6399
        %v6401 = vcombine.low %v6376, %v6384
        %v6402 = vcombine.high %v6376, %v6384
        %v6404 = vunpack.c.l.s4 1934713408
        %v6405 = vunpack.c.0.s8 %v6404
        %v6406 = vlaneseq
        %v6407 = vshrl.u32 %v6406, 7
        %v6408 = vsub.s32 %v6405, %v6407
        %v6409 = vrot.slane %v6401, %v6408
        %v6411 = vunpack.c.l.s4 1934713408
        %v6412 = vunpack.c.0.s8 %v6411
        %v6413 = vlaneseq
        %v6414 = vshrl.u32 %v6413, 7
        %v6415 = vsub.s32 %v6412, %v6414
        %v6416 = vrot.slane %v6402, %v6415
        %v6417 = vcombine.low %v6393, %v6409
        %v6418 = vcombine.high %v6393, %v6409
        %v6419 = vcombine.low %v6400, %v6416
        %v6420 = vcombine.high %v6400, %v6416
        %v6421 = vcombine.low %v5917, %v5924
        %v6423 = vunpack.c.l.s4 1983009808
        %v6424 = vunpack.c.0.s8 %v6423
        %v6425 = vlaneseq
        %v6426 = vshrl.u32 %v6425, 7
        %v6427 = vsub.s32 %v6424, %v6426
        %v6428 = vrot.slane %v6421, %v6427
        %v6429 = vcombine.low %v5941, %v5942
        %v6431 = vunpack.c.l.s4 1983009808
        %v6432 = vunpack.c.0.s8 %v6431
        %v6433 = vlaneseq
        %v6434 = vshrl.u32 %v6433, 7
        %v6435 = vsub.s32 %v6432, %v6434
        %v6436 = vrot.slane %v6429, %v6435
        %v6437 = vcombine.low %v5933, %v5940
        %v6439 = vunpack.c.l.s4 1983009808
        %v6440 = vunpack.c.0.s8 %v6439
        %v6441 = vlaneseq
        %v6442 = vshrl.u32 %v6441, 7
        %v6443 = vsub.s32 %v6440, %v6442
        %v6444 = vrot.slane %v6437, %v6443
        %v6445 = vcombine.low %v5943, %v5944
        %v6447 = vunpack.c.l.s4 1983009808
        %v6448 = vunpack.c.0.s8 %v6447
        %v6449 = vlaneseq
        %v6450 = vshrl.u32 %v6449, 7
        %v6451 = vsub.s32 %v6448, %v6450
        %v6452 = vrot.slane %v6445, %v6451
        %v6453 = vcombine.low %v6428, %v6436
        %v6454 = vcombine.high %v6428, %v6436
        %v6456 = vunpack.c.l.s4 1934713408
        %v6457 = vunpack.c.0.s8 %v6456
        %v6458 = vlaneseq
        %v6459 = vshrl.u32 %v6458, 7
        %v6460 = vsub.s32 %v6457, %v6459
        %v6461 = vrot.slane %v6453, %v6460
        %v6463 = vunpack.c.l.s4 1934713408
        %v6464 = vunpack.c.0.s8 %v6463
        %v6465 = vlaneseq
        %v6466 = vshrl.u32 %v6465, 7
        %v6467 = vsub.s32 %v6464, %v6466
        %v6468 = vrot.slane %v6454, %v6467
        %v6469 = vcombine.low %v6444, %v6452
        %v6470 = vcombine.high %v6444, %v6452
        %v6472 = vunpack.c.l.s4 1934713408
        %v6473 = vunpack.c.0.s8 %v6472
        %v6474 = vlaneseq
        %v6475 = vshrl.u32 %v6474, 7
        %v6476 = vsub.s32 %v6473, %v6475
        %v6477 = vrot.slane %v6469, %v6476
        %v6479 = vunpack.c.l.s4 1934713408
        %v6480 = vunpack.c.0.s8 %v6479
        %v6481 = vlaneseq
        %v6482 = vshrl.u32 %v6481, 7
        %v6483 = vsub.s32 %v6480, %v6482
        %v6484 = vrot.slane %v6470, %v6483
        %v6485 = vcombine.low %v6461, %v6477
        %v6486 = vcombine.high %v6461, %v6477
        %v6487 = vcombine.low %v6468, %v6484
        %v6488 = vcombine.high %v6468, %v6484
        %v6489 = vcombine.low %v5985, %v5992
        %v6491 = vunpack.c.l.s4 1983009808
        %v6492 = vunpack.c.0.s8 %v6491
        %v6493 = vlaneseq
        %v6494 = vshrl.u32 %v6493, 7
        %v6495 = vsub.s32 %v6492, %v6494
        %v6496 = vrot.slane %v6489, %v6495
        %v6497 = vcombine.low %v6009, %v6010
        %v6499 = vunpack.c.l.s4 1983009808
        %v6500 = vunpack.c.0.s8 %v6499
        %v6501 = vlaneseq
        %v6502 = vshrl.u32 %v6501, 7
        %v6503 = vsub.s32 %v6500, %v6502
        %v6504 = vrot.slane %v6497, %v6503
        %v6505 = vcombine.low %v6001, %v6008
        %v6507 = vunpack.c.l.s4 1983009808
        %v6508 = vunpack.c.0.s8 %v6507
        %v6509 = vlaneseq
        %v6510 = vshrl.u32 %v6509, 7
        %v6511 = vsub.s32 %v6508, %v6510
        %v6512 = vrot.slane %v6505, %v6511
        %v6513 = vcombine.low %v6011, %v6012
        %v6515 = vunpack.c.l.s4 1983009808
        %v6516 = vunpack.c.0.s8 %v6515
        %v6517 = vlaneseq
        %v6518 = vshrl.u32 %v6517, 7
        %v6519 = vsub.s32 %v6516, %v6518
        %v6520 = vrot.slane %v6513, %v6519
        %v6521 = vcombine.low %v6496, %v6504
        %v6522 = vcombine.high %v6496, %v6504
        %v6524 = vunpack.c.l.s4 1934713408
        %v6525 = vunpack.c.0.s8 %v6524
        %v6526 = vlaneseq
        %v6527 = vshrl.u32 %v6526, 7
        %v6528 = vsub.s32 %v6525, %v6527
        %v6529 = vrot.slane %v6521, %v6528
        %v6531 = vunpack.c.l.s4 1934713408
        %v6532 = vunpack.c.0.s8 %v6531
        %v6533 = vlaneseq
        %v6534 = vshrl.u32 %v6533, 7
        %v6535 = vsub.s32 %v6532, %v6534
        %v6536 = vrot.slane %v6522, %v6535
        %v6537 = vcombine.low %v6512, %v6520
        %v6538 = vcombine.high %v6512, %v6520
        %v6540 = vunpack.c.l.s4 1934713408
        %v6541 = vunpack.c.0.s8 %v6540
        %v6542 = vlaneseq
        %v6543 = vshrl.u32 %v6542, 7
        %v6544 = vsub.s32 %v6541, %v6543
        %v6545 = vrot.slane %v6537, %v6544
        %v6547 = vunpack.c.l.s4 1934713408
        %v6548 = vunpack.c.0.s8 %v6547
        %v6549 = vlaneseq
        %v6550 = vshrl.u32 %v6549, 7
        %v6551 = vsub.s32 %v6548, %v6550
        %v6552 = vrot.slane %v6538, %v6551
        %v6553 = vcombine.low %v6529, %v6545
        %v6554 = vcombine.high %v6529, %v6545
        %v6555 = vcombine.low %v6536, %v6552
        %v6556 = vcombine.high %v6536, %v6552
        %v6557 = vcombine.low %v6053, %v6060
        %v6559 = vunpack.c.l.s4 1983009808
        %v6560 = vunpack.c.0.s8 %v6559
        %v6561 = vlaneseq
        %v6562 = vshrl.u32 %v6561, 7
        %v6563 = vsub.s32 %v6560, %v6562
        %v6564 = vrot.slane %v6557, %v6563
        %v6565 = vcombine.low %v6077, %v6078
        %v6567 = vunpack.c.l.s4 1983009808
        %v6568 = vunpack.c.0.s8 %v6567
        %v6569 = vlaneseq
        %v6570 = vshrl.u32 %v6569, 7
        %v6571 = vsub.s32 %v6568, %v6570
        %v6572 = vrot.slane %v6565, %v6571
        %v6573 = vcombine.low %v6069, %v6076
        %v6575 = vunpack.c.l.s4 1983009808
        %v6576 = vunpack.c.0.s8 %v6575
        %v6577 = vlaneseq
        %v6578 = vshrl.u32 %v6577, 7
        %v6579 = vsub.s32 %v6576, %v6578
        %v6580 = vrot.slane %v6573, %v6579
        %v6581 = vcombine.low %v6079, %v6080
        %v6583 = vunpack.c.l.s4 1983009808
        %v6584 = vunpack.c.0.s8 %v6583
        %v6585 = vlaneseq
        %v6586 = vshrl.u32 %v6585, 7
        %v6587 = vsub.s32 %v6584, %v6586
        %v6588 = vrot.slane %v6581, %v6587
        %v6589 = vcombine.low %v6564, %v6572
        %v6590 = vcombine.high %v6564, %v6572
        %v6592 = vunpack.c.l.s4 1934713408
        %v6593 = vunpack.c.0.s8 %v6592
        %v6594 = vlaneseq
        %v6595 = vshrl.u32 %v6594, 7
        %v6596 = vsub.s32 %v6593, %v6595
        %v6597 = vrot.slane %v6589, %v6596
        %v6599 = vunpack.c.l.s4 1934713408
        %v6600 = vunpack.c.0.s8 %v6599
        %v6601 = vlaneseq
        %v6602 = vshrl.u32 %v6601, 7
        %v6603 = vsub.s32 %v6600, %v6602
        %v6604 = vrot.slane %v6590, %v6603
        %v6605 = vcombine.low %v6580, %v6588
        %v6606 = vcombine.high %v6580, %v6588
        %v6608 = vunpack.c.l.s4 1934713408
        %v6609 = vunpack.c.0.s8 %v6608
        %v6610 = vlaneseq
        %v6611 = vshrl.u32 %v6610, 7
        %v6612 = vsub.s32 %v6609, %v6611
        %v6613 = vrot.slane %v6605, %v6612
        %v6615 = vunpack.c.l.s4 1934713408
        %v6616 = vunpack.c.0.s8 %v6615
        %v6617 = vlaneseq
        %v6618 = vshrl.u32 %v6617, 7
        %v6619 = vsub.s32 %v6616, %v6618
        %v6620 = vrot.slane %v6606, %v6619
        %v6621 = vcombine.low %v6597, %v6613
        %v6622 = vcombine.high %v6597, %v6613
        %v6623 = vcombine.low %v6604, %v6620
        %v6624 = vcombine.high %v6604, %v6620
        %6633 = vrot.lane.b32.xlu0 %v6146, 32
        %v6634 = vpop.permute.xlu0 %6633
        %6635 = vrot.lane.b32.xlu0 %v6214, 32
        %v6636 = vpop.permute.xlu0 %6635
        %6637 = vrot.lane.b32.xlu0 %v6282, 32
        %v6638 = vpop.permute.xlu0 %6637
        %6639 = vrot.lane.b32.xlu0 %v6350, 32
        %v6640 = vpop.permute.xlu0 %6639
        %6641 = vrot.lane.b32.xlu0 %v6418, 32
        %v6642 = vpop.permute.xlu0 %6641
        %6643 = vrot.lane.b32.xlu0 %v6486, 32
        %v6644 = vpop.permute.xlu0 %6643
        %6645 = vrot.lane.b32.xlu0 %v6554, 32
        %v6646 = vpop.permute.xlu0 %6645
        %6647 = vrot.lane.b32.xlu0 %v6622, 32
        %v6648 = vpop.permute.xlu0 %6647
        %6665 = vrot.lane.b32.xlu0 %v6147, 64
        %v6666 = vpop.permute.xlu0 %6665
        %6667 = vrot.lane.b32.xlu0 %v6215, 64
        %v6668 = vpop.permute.xlu0 %6667
        %6669 = vrot.lane.b32.xlu0 %v6283, 64
        %v6670 = vpop.permute.xlu0 %6669
        %6671 = vrot.lane.b32.xlu0 %v6351, 64
        %v6672 = vpop.permute.xlu0 %6671
        %6673 = vrot.lane.b32.xlu0 %v6419, 64
        %v6674 = vpop.permute.xlu0 %6673
        %6675 = vrot.lane.b32.xlu0 %v6487, 64
        %v6676 = vpop.permute.xlu0 %6675
        %6677 = vrot.lane.b32.xlu0 %v6555, 64
        %v6678 = vpop.permute.xlu0 %6677
        %6679 = vrot.lane.b32.xlu0 %v6623, 64
        %v6680 = vpop.permute.xlu0 %6679
        %6697 = vrot.lane.b32.xlu0 %v6148, 96
        %v6698 = vpop.permute.xlu0 %6697
        %6699 = vrot.lane.b32.xlu0 %v6216, 96
        %v6700 = vpop.permute.xlu0 %6699
        %6701 = vrot.lane.b32.xlu0 %v6284, 96
        %v6702 = vpop.permute.xlu0 %6701
        %6703 = vrot.lane.b32.xlu0 %v6352, 96
        %v6704 = vpop.permute.xlu0 %6703
        %6705 = vrot.lane.b32.xlu0 %v6420, 96
        %v6706 = vpop.permute.xlu0 %6705
        %6707 = vrot.lane.b32.xlu0 %v6488, 96
        %v6708 = vpop.permute.xlu0 %6707
        %6709 = vrot.lane.b32.xlu0 %v6556, 96
        %v6710 = vpop.permute.xlu0 %6709
        %6711 = vrot.lane.b32.xlu0 %v6624, 96
        %v6712 = vpop.permute.xlu0 %6711
        %v6721 = vsel %vm4055, %v6145, %v6634
        %v6722 = vsel %vm4055, %v6213, %v6636
        %v6723 = vsel %vm4055, %v6281, %v6638
        %v6724 = vsel %vm4055, %v6349, %v6640
        %v6725 = vsel %vm4055, %v6417, %v6642
        %v6726 = vsel %vm4055, %v6485, %v6644
        %v6727 = vsel %vm4055, %v6553, %v6646
        %v6728 = vsel %vm4055, %v6621, %v6648
        %v6729 = vsel %vm4668, %v6721, %v6666
        %v6730 = vsel %vm4668, %v6722, %v6668
        %v6731 = vsel %vm4668, %v6723, %v6670
        %v6732 = vsel %vm4668, %v6724, %v6672
        %v6733 = vsel %vm4668, %v6725, %v6674
        %v6734 = vsel %vm4668, %v6726, %v6676
        %v6735 = vsel %vm4668, %v6727, %v6678
        %v6736 = vsel %vm4668, %v6728, %v6680
        %vm6737 = vcmask 785408
        %v6738 = vsel %vm6737, %v6729, %v6698
        %v6739 = vsel %vm6737, %v6730, %v6700
        %v6740 = vsel %vm6737, %v6731, %v6702
        %v6741 = vsel %vm6737, %v6732, %v6704
        %v6742 = vsel %vm6737, %v6733, %v6706
        %v6743 = vsel %vm6737, %v6734, %v6708
        %v6744 = vsel %vm6737, %v6735, %v6710
        %v6745 = vsel %vm6737, %v6736, %v6712
        %v6746 = vld [vmem:[#allocation7] sm:$0xff]
        %v6747 = vld [vmem:[#allocation7 + $0x8] sm:$0xff]
        %v6748 = vld [vmem:[#allocation7 + $0x10] sm:$0xff]
        %v6749 = vld [vmem:[#allocation7 + $0x18] sm:$0xff]
        %v6750 = vld [vmem:[#allocation7 + $0x20] sm:$0xff]
        %v6751 = vld [vmem:[#allocation7 + $0x28] sm:$0xff]
        %v6752 = vld [vmem:[#allocation7 + $0x30] sm:$0xff]
        %v6753 = vld [vmem:[#allocation7 + $0x38] sm:$0xff]
        %v6754 = vld [vmem:[#allocation7 + $0x40] sm:$0xff]
        %v6755 = vld [vmem:[#allocation7 + $0x48] sm:$0xff]
        %v6756 = vld [vmem:[#allocation7 + $0x50] sm:$0xff]
        %v6757 = vld [vmem:[#allocation7 + $0x58] sm:$0xff]
        %v6758 = vld [vmem:[#allocation7 + $0x60] sm:$0xff]
        %v6759 = vld [vmem:[#allocation7 + $0x68] sm:$0xff]
        %v6760 = vld [vmem:[#allocation7 + $0x70] sm:$0xff]
        %v6761 = vld [vmem:[#allocation7 + $0x78] sm:$0xff]
        %v6762 = vld [vmem:[%s3] sm:$0x1]
        %v6764 = vlaneseq
        %v6765 = vshrl.u32 %v6764, 7
        %v6766 = vsub.s32 0, %v6765
        %v6767 = vrot.slane %v6762, %v6766
        %6769 = vmatprep.subr.mxu0 0.0
        %6770 = vmatpush1.msra.mxu0 %v6761
        %6771 = vmatprep.subr.mxu0 0.0
        %6772 = vmatpush1.msra.mxu0 %v6760
        %6773 = vmatprep.subr.mxu0 0.0
        %6774 = vmatpush1.msra.mxu0 %v6759
        %6775 = vmatprep.subr.mxu0 0.0
        %6776 = vmatpush1.msra.mxu0 %v6758
        %6777 = vmatprep.subr.mxu0 0.0
        %6778 = vmatpush1.msra.mxu0 %v6757
        %6779 = vmatprep.subr.mxu0 0.0
        %6780 = vmatpush1.msra.mxu0 %v6756
        %6781 = vmatprep.subr.mxu0 0.0
        %6782 = vmatpush1.msra.mxu0 %v6755
        %6783 = vmatprep.subr.mxu0 0.0
        %6784 = vmatpush1.msra.mxu0 %v6754
        %6785 = vmatprep.subr.mxu0 0.0
        %6786 = vmatpush1.msra.mxu0 %v6753
        %6787 = vmatprep.subr.mxu0 0.0
        %6788 = vmatpush1.msra.mxu0 %v6752
        %6789 = vmatprep.subr.mxu0 0.0
        %6790 = vmatpush1.msra.mxu0 %v6751
        %6791 = vmatprep.subr.mxu0 0.0
        %6792 = vmatpush1.msra.mxu0 %v6750
        %6793 = vmatprep.subr.mxu0 0.0
        %6794 = vmatpush1.msra.mxu0 %v6749
        %6795 = vmatprep.subr.mxu0 0.0
        %6796 = vmatpush1.msra.mxu0 %v6748
        %6797 = vmatprep.subr.mxu0 0.0
        %6798 = vmatpush1.msra.mxu0 %v6747
        %6799 = vmatprep.subr.mxu0 0.0
        %6800 = vmatpush1.msra.mxu0 %v6746
        %6801 = vmatprep.subr.mxu0 0.0
        %6802 = vmatpush2.msra.mxu0 0.0
        %6803 = vmatprep.subr.mxu0 0.0
        %6804 = vmatpush2.msra.mxu0 0.0
        %6805 = vmatprep.subr.mxu0 0.0
        %6806 = vmatpush2.msra.mxu0 0.0
        %6807 = vmatprep.subr.mxu0 0.0
        %6808 = vmatpush2.msra.mxu0 0.0
        %6809 = vmatprep.subr.mxu0 0.0
        %6810 = vmatpush2.msra.mxu0 0.0
        %6811 = vmatprep.subr.mxu0 0.0
        %6812 = vmatpush2.msra.mxu0 0.0
        %6813 = vmatprep.subr.mxu0 0.0
        %6814 = vmatpush2.msra.mxu0 0.0
        %6815 = vmatprep.subr.mxu0 0.0
        %6816 = vmatpush2.msra.mxu0 0.0
        %6817 = vmatprep.subr.mxu0 0.0
        %6818 = vmatpush2.msra.mxu0 0.0
        %6819 = vmatprep.subr.mxu0 0.0
        %6820 = vmatpush2.msra.mxu0 0.0
        %6821 = vmatprep.subr.mxu0 0.0
        %6822 = vmatpush2.msra.mxu0 0.0
        %6823 = vmatprep.subr.mxu0 0.0
        %6824 = vmatpush2.msra.mxu0 0.0
        %6825 = vmatprep.subr.mxu0 0.0
        %6826 = vmatpush2.msra.mxu0 0.0
        %6827 = vmatprep.subr.mxu0 0.0
        %6828 = vmatpush2.msra.mxu0 0.0
        %6829 = vmatprep.subr.mxu0 0.0
        %6830 = vmatpush2.msra.mxu0 0.0
        %6831 = vmatprep.subr.mxu0 0.0
        %6832 = vmatpush2.msra.mxu0 0.0
        %6833 = vmatprep.mubr.f32.mxu0 0.0
        %6834 = vmatmul.mubr.f32.gmra.mxu0 %v6738
        %v6835 = vpop.f32.mrf.mxu0
        %v6836 = vadd.f32 %v6767, %v6835
        %v6837 = vpop.f32.mrf.mxu0
        %6838 = vmatprep.mubr.f32.mxu0 0.0
        %6839 = vmatmul.mubr.f32.gmra.mxu0 %v6739
        %v6840 = vpop.f32.mrf.mxu0
        %v6841 = vadd.f32 %v6767, %v6840
        %v6842 = vpop.f32.mrf.mxu0
        %6843 = vmatprep.mubr.f32.mxu0 0.0
        %6844 = vmatmul.mubr.f32.gmra.mxu0 %v6740
        %v6845 = vpop.f32.mrf.mxu0
        %v6846 = vadd.f32 %v6767, %v6845
        %v6847 = vpop.f32.mrf.mxu0
        %6848 = vmatprep.mubr.f32.mxu0 0.0
        %6849 = vmatmul.mubr.f32.gmra.mxu0 %v6741
        %v6850 = vpop.f32.mrf.mxu0
        %v6851 = vadd.f32 %v6767, %v6850
        %v6852 = vpop.f32.mrf.mxu0
        %6853 = vmatprep.mubr.f32.mxu0 0.0
        %6854 = vmatmul.mubr.f32.gmra.mxu0 %v6742
        %v6855 = vpop.f32.mrf.mxu0
        %v6856 = vadd.f32 %v6767, %v6855
        %v6857 = vpop.f32.mrf.mxu0
        %6858 = vmatprep.mubr.f32.mxu0 0.0
        %6859 = vmatmul.mubr.f32.gmra.mxu0 %v6743
        %v6860 = vpop.f32.mrf.mxu0
        %v6861 = vadd.f32 %v6767, %v6860
        %v6862 = vpop.f32.mrf.mxu0
        %6863 = vmatprep.mubr.f32.mxu0 0.0
        %6864 = vmatmul.mubr.f32.gmra.mxu0 %v6744
        %v6865 = vpop.f32.mrf.mxu0
        %v6866 = vadd.f32 %v6767, %v6865
        %v6867 = vpop.f32.mrf.mxu0
        %6868 = vmatprep.mubr.f32.mxu0 0.0
        %6869 = vmatmul.mubr.f32.gmra.mxu0 %v6745
        %v6870 = vpop.f32.mrf.mxu0
        %v6871 = vadd.f32 %v6767, %v6870
        %v6872 = vpop.f32.mrf.mxu0
        %6873 = vdwg.mxu0
        %6874 = vst [vmem:[%s244] sm:$0xff] %v6836
        %6875 = vst [vmem:[%s244 + $0x8] sm:$0xff] %v6841
        %6876 = vst [vmem:[%s244 + $0x10] sm:$0xff] %v6846
        %6877 = vst [vmem:[%s244 + $0x18] sm:$0xff] %v6851
        %6878 = vst [vmem:[%s244 + $0x20] sm:$0xff] %v6856
        %6879 = vst [vmem:[%s244 + $0x28] sm:$0xff] %v6861
        %6880 = vst [vmem:[%s244 + $0x30] sm:$0xff] %v6866
        %6881 = vst [vmem:[%s244 + $0x38] sm:$0xff] %v6871
        %s6882 = sand.u32 %s119, 1
        %s6883 = scalar_lea.sflag [#allocation4], %s6882
        %s6884 = sand.u32 %s119, 1
        %s6885 = smul.addr %s6884, 64
        %s6886 = scalar_lea.vmem [#allocation8], %s6885
        // Predicated region
        $region49: #{attention_forward.1} parent=35 // pred_check
          %p6887 = pneg %p129
        $region50: #{attention_forward.1} parent=35 // pred_check_branch
          %6889 = sbr.rel (%p6887) target = $region52
        $region51: #{attention_forward.1} parent=35 // pred_region
          %s6891 = ssub.s32 1024, 1024
          %6892 = vsyncadd %s6883, %s6891
          %s6893 = smul.addr %s22, 8
          %s6894 = smul.addr %s6893, 128
          %s6895 = scalar_lea.hbm %s4, %s6894
          %s6896 = sshll.u32 %s6886, 4
          %s6897 = int_to_ptr.vmem [resolvable:$true] %s6896
          %6902 = dma.vmem_to_hbm [thread:$0]  %s6897, 1024, %s6895, %s6883, 128, 128, 8
        $region52: #{attention_forward.1} parent=35 // pred_fallthru
          _
      $region36: #{attention_forward.1} parent=5 // pred_fallthru
        _
      %p6903 = scmp.le.s32.totalorder 2, %s17
      // Predicated region
      $region53: #{attention_forward.1} parent=5 // pred_check
        %p6904 = pneg %p6903
      $region54: #{attention_forward.1} parent=5 // pred_check_branch
        %6906 = sbr.rel (%p6904) target = $region56
      $region55: #{attention_forward.1} parent=5 // pred_region
        %s6907 = ssub.s32 %s17, 2
        // Predicated region
        $region57: #{attention_forward.1} parent=55 // pred_check
          %p6908 = pneg %p135
        $region58: #{attention_forward.1} parent=55 // pred_check_branch
          %6910 = sbr.rel (%p6908) target = $region60
        $region59: #{attention_forward.1} parent=55 // pred_region
          %s6911 = sand.u32 %s120, 1
          %s6912 = scalar_lea.sflag [#allocation4], %s6911
          %s6913 = sand.u32 %s120, 1
          %s6914 = smul.addr %s6913, 64
          %s6915 = scalar_lea.vmem [#allocation8], %s6914
          %6916 = dma.done %s6912, 1024
        $region60: #{attention_forward.1} parent=55 // pred_fallthru
          _
      $region56: #{attention_forward.1} parent=5 // pred_fallthru
        _
    $region6: #{attention_forward.1} parent=1 // loop_footer
      %s21 = sadd.s32 1, %s17
    $region7: #{attention_forward.1} parent=1 // loop_footer_branch
      %16 = sbr.rel target = $region3
    $region8: #{attention_forward.1} parent=1 // loop_exit
      _
    %6917 = vsyncpa [#allocation3], 1
    %s6918 = scalar_lea.sflag [#allocation3], 1
    %6919 = vsyncpa %s6918, 1
    %6920 = vsyncpa [#allocation6], 1
    %6921 = vsyncpa [#allocation4], 1
    %s6922 = scalar_lea.sflag [#allocation4], 1
    %6923 = vsyncpa %s6922, 1

</llo_original>
